<compile_context>
chip_gen: v7x
topology: tpu7x:2x2x1
jax: 0.10.0
libtpu: 0.0.40
codegen_flags: <defaults>
</compile_context>

<pallas_src>
import functools

import jax
import jax.numpy as jnp
from jax.experimental import pallas as pl
from jax.experimental.pallas import tpu as pltpu


# ----------------------------------------------------------------------------- #
# Fused kernel: encoder GCN-GRU rollout + time-attention Transform (+ residual)
#               + autoregressive GCN-GRU decoder + output projection.
# One grid step == one batch element.
# ----------------------------------------------------------------------------- #
def stnscn_kernel(adj_ref, x_ref, xt_ref, tt_ref,
                  ewx_ref, ewt_ref, ewhzr_ref, ewhc_ref, eb_ref,
                  wq_ref, wk_ref, wv_ref, wo_ref,
                  dwx_ref, dwt_ref, dwhzr_ref, dwhc_ref, db_ref,
                  wout_ref, bout_ref,
                  out_ref, *, num_heads, use_transform):
    f32 = jnp.float32
    adj = adj_ref[...]                       # [N, N]  (already A^gcn_depth)
    x2d = x_ref[0]                           # [N, T*D_in]  (wrapper-flattened)
    xt = xt_ref[0]                           # [T, D_t]
    tt = tt_ref[0]                           # [Ttar, D_t]
    N = adj.shape[0]
    T = xt.shape[0]
    Ttar = tt.shape[0]
    H = ewhc_ref.shape[0]
    d_in = ewx_ref.shape[0]
    d_out = wout_ref.shape[1]

    # Propagated value of a node-constant (broadcast) feature under A^k.
    rs = jnp.sum(adj, axis=1, keepdims=True)                          # [N, 1]

    def gru_step(h, gates_x, tproj, whzr, whc, b):
        # gates_x: graph-propagated & projected x input [N, 3H]
        # tproj:   time projection [1, 3H] (node-constant -> rs broadcast)
        gates_in = gates_x + rs * tproj + b                           # [N, 3H]
        hzr = jnp.dot(h, whzr, preferred_element_type=f32)            # [N, 2H]
        z = jax.nn.sigmoid(gates_in[:, 0:H] + hzr[:, 0:H])
        r = jax.nn.sigmoid(gates_in[:, H:2 * H] + hzr[:, H:2 * H])
        c = jnp.tanh(gates_in[:, 2 * H:3 * H]
                     + jnp.dot(r * h, whc, preferred_element_type=f32))
        return z * h + (1.0 - z) * c

    # ---- attention weights over encoder time steps (node-independent) -------
    if use_transform:
        dh = H // num_heads
        scale = 1.0 / jnp.sqrt(jnp.float32(dh))
        q_in = jnp.mean(tt, axis=0, keepdims=True)                    # [1, D_t]
        q = jnp.dot(q_in, wq_ref[...], preferred_element_type=f32)    # [1, H]
        k = jnp.dot(xt, wk_ref[...], preferred_element_type=f32)      # [T, H]
        qk = k * q                                                    # [T, H]
        cols = []
        for hd in range(num_heads):
            lo = hd * dh
            s = jnp.sum(qk[:, lo:lo + dh], axis=-1, keepdims=True) * scale  # [T,1]
            m = jnp.max(s, axis=0, keepdims=True)
            e = jnp.exp(s - m)
            a = e / jnp.sum(e, axis=0, keepdims=True)                 # softmax over T
            cols.append(jnp.broadcast_to(a, (T, dh)))
        w_attn = jnp.concatenate(cols, axis=-1)                       # [T, H]
        wv = wv_ref[...]

    # ---- encoder: GCN-GRU rollout, attention sum accumulated on the fly -----
    ewx = ewx_ref[...]
    ewhzr = ewhzr_ref[...]
    ewhc = ewhc_ref[...]
    eb = eb_ref[...]
    xt_proj = jnp.dot(xt, ewt_ref[...], preferred_element_type=f32)   # [T, 3H]
    # One adjacency matmul for ALL encoder steps (hoisted out of the loop).
    ax_all = jnp.dot(adj, x2d, preferred_element_type=f32)            # [N, T*D_in]

    h = jnp.zeros((N, H), f32)
    trans_acc = jnp.zeros((N, H), f32)
    for t in range(T):
        gates_x = jnp.dot(ax_all[:, t * d_in:(t + 1) * d_in], ewx,
                          preferred_element_type=f32)                 # [N, 3H]
        h = gru_step(h, gates_x, xt_proj[t:t + 1, :], ewhzr, ewhc, eb)
        if use_transform:
            # v_t is off the h->h critical path; scheduler overlaps it.
            v_t = jnp.dot(h, wv, preferred_element_type=f32)          # [N, H]
            trans_acc = trans_acc + w_attn[t:t + 1, :] * v_t

    # ---- Transform output (Wo) + residual with last encoder hidden ----------
    if use_transform:
        h_dec = jnp.dot(trans_acc, wo_ref[...],
                        preferred_element_type=f32) + h
    else:
        h_dec = h

    # ---- decoder: autoregressive GCN-GRU + projection, fed back in-register --
    dwx = dwx_ref[...]
    dwhzr = dwhzr_ref[...]
    dwhc = dwhc_ref[...]
    db = db_ref[...]
    tt_proj = jnp.dot(tt, dwt_ref[...], preferred_element_type=f32)   # [Ttar, 3H]
    w_out = wout_ref[...]
    b_out = bout_ref[...]

    inp = jnp.zeros((N, d_in), f32)                                   # GO input
    outs = []
    for t in range(Ttar):
        ax = jnp.dot(adj, inp, preferred_element_type=f32)            # [N, D_in]
        gates_x = jnp.dot(ax, dwx, preferred_element_type=f32)        # [N, 3H]
        h_dec = gru_step(h_dec, gates_x, tt_proj[t:t + 1, :], dwhzr, dwhc, db)
        o = jnp.dot(h_dec, w_out, preferred_element_type=f32) + b_out  # [N, Dout]
        outs.append(o)
        inp = o
    # Single lane-dense store for the full target horizon (no per-step
    # masked partial stores into the output block).
    out_ref[0] = jnp.concatenate(outs, axis=-1)                       # [N, Ttar*Dout]


# ----------------------------------------------------------------------------- #
# Parameters & wrapper
# ----------------------------------------------------------------------------- #
def make_adjacency(n):
    eye = jnp.eye(n, dtype=jnp.float32)
    a = eye + jnp.roll(eye, 1, axis=1) + jnp.roll(eye, -1, axis=1)
    return a / jnp.sum(a, axis=1, keepdims=True)          # row-normalized ('D-1')


def init_params(key, d_in, d_t, hidden, d_out):
    ks = iter(jax.random.split(key, 24))
    w = lambda shape, s=0.1: (jax.random.normal(next(ks), shape) * s).astype(jnp.float32)

    def gru_weights():
        return dict(
            wx=w((d_in, 3 * hidden)),        # x-input   -> [z | r | c]
            wt=w((d_t, 3 * hidden)),         # time-input-> [z | r | c]
            whzr=w((hidden, 2 * hidden)),    # hidden    -> [z | r]
            whc=w((hidden, hidden)),         # hidden    ->  c  (gated by r)
            b=jnp.zeros((1, 3 * hidden), jnp.float32))

    return {
        "enc": gru_weights(),
        "dec": gru_weights(),
        "trans": dict(wq=w((d_t, hidden)), wk=w((d_t, hidden)),
                      wv=w((hidden, hidden)), wo=w((hidden, hidden))),
        "w_out": w((hidden, d_out)),
        "b_out": jnp.zeros((1, d_out), jnp.float32),
    }


def stnscn_forward(params, adj, x, x_time, target_time, *,
                   gcn_depth, num_heads, num_for_target, use_transform=True):
    B, N, T, d_in = x.shape
    H = params["enc"]["whc"].shape[0]
    d_out = params["w_out"].shape[1]

    # The reference only produces 4-D time features by broadcasting the 3-D
    # ones over nodes; keep the compact 3-D per-batch form.
    # TODO(synk): genuinely node-dependent 4-D time features are not supported
    #             by this fused kernel.
    if x_time.ndim == 4:
        x_time = x_time[:, 0]
    if target_time.ndim == 4:
        target_time = target_time[:, 0]
    x_time = x_time[:, :T]
    target_time = target_time[:, :num_for_target]
    Ttar = num_for_target
    d_t = x_time.shape[-1]

    # Collapse the gcn hops: A^depth (no nonlinearity between hops).
    adj_k = jnp.eye(N, dtype=jnp.float32)
    for _ in range(gcn_depth):
        adj_k = jnp.dot(adj_k, adj)

    # Flatten the encoder input time axis into lanes: layout plumbing only,
    # lets the kernel do ONE adj matmul over all encoder steps.
    x2d = x.reshape(B, N, T * d_in)

    def full(shape):
        nd = len(shape)
        return pl.BlockSpec(shape, lambda b, _nd=nd: (0,) * _nd)

    def batched(shape):
        nd = len(shape)
        return pl.BlockSpec(shape, lambda b, _nd=nd: (b,) + (0,) * (_nd - 1))

    enc, dec, tr = params["enc"], params["dec"], params["trans"]

    kernel = functools.partial(stnscn_kernel, num_heads=num_heads,
                               use_transform=use_transform)

    out_flat = pl.pallas_call(
        kernel,
        out_shape=jax.ShapeDtypeStruct((B, N, Ttar * d_out), jnp.float32),
        grid=(B,),
        in_specs=[
            full((N, N)),
            batched((1, N, T * d_in)),
            batched((1, T, d_t)),
            batched((1, Ttar, d_t)),
            # encoder GRU (fused gate weights)
            full((d_in, 3 * H)), full((d_t, 3 * H)), full((H, 2 * H)),
            full((H, H)), full((1, 3 * H)),
            # transform
            full((d_t, H)), full((d_t, H)), full((H, H)), full((H, H)),
            # decoder GRU (fused gate weights)
            full((d_in, 3 * H)), full((d_t, 3 * H)), full((H, 2 * H)),
            full((H, H)), full((1, 3 * H)),
            # output projection
            full((H, d_out)), full((1, d_out)),
        ],
        out_specs=batched((1, N, Ttar * d_out)),
        compiler_params=pltpu.CompilerParams(dimension_semantics=("parallel",)),
    )(adj_k, x2d, x_time, target_time,
      enc["wx"], enc["wt"], enc["whzr"], enc["whc"], enc["b"],
      tr["wq"], tr["wk"], tr["wv"], tr["wo"],
      dec["wx"], dec["wt"], dec["whzr"], dec["whc"], dec["b"],
      params["w_out"], params["b_out"])

    # Layout plumbing back to the module's [B, N, Ttar, Dout] output.
    return out_flat.reshape(B, N, Ttar, d_out)


# ----------------------------------------------------------------------------- #
if __name__ == "__main__":
    # small config implied by the module's constructor
    B, N = 2, 8                      # batch, node_num
    T, T_TAR = 4, 4                  # num_for_predict, num_for_target
    D_IN, D_T, H, D_OUT = 2, 4, 16, 2
    GCN_DEPTH, HEADS = 2, 2

    key = jax.random.PRNGKey(0)
    k_x, k_xt, k_tt, k_p = jax.random.split(key, 4)

    x = jax.random.normal(k_x, (B, N, T, D_IN), dtype=jnp.float32)
    x_time = jax.random.normal(k_xt, (B, T, D_T), dtype=jnp.float32)          # 3-D
    target_time = jax.random.normal(k_tt, (B, T_TAR, D_T), dtype=jnp.float32)

    params = init_params(k_p, D_IN, D_T, H, D_OUT)
    adj = make_adjacency(N)          # static_norm_adjs[0]

    fwd = jax.jit(functools.partial(
        stnscn_forward, gcn_depth=GCN_DEPTH, num_heads=HEADS,
        num_for_target=T_TAR, use_transform=True))

    out = fwd(params, adj, x, x_time, target_time)
    out = jax.block_until_ready(out)
    assert out.shape == (B, N, T_TAR, D_OUT)
    assert bool(jnp.all(jnp.isfinite(out)))
    print("KERNEL_OK")
</pallas_src>

<mosaic_0001>
module attributes {stable_mosaic.version = 11 : i64} {
  func.func @stnscn_kernel(%arg0: i32, %arg1: memref<8x8xf32, #tpu.memory_space<vmem>>, %arg2: memref<1x8x8xf32, #tpu.memory_space<vmem>>, %arg3: memref<1x4x4xf32, #tpu.memory_space<vmem>>, %arg4: memref<1x4x4xf32, #tpu.memory_space<vmem>>, %arg5: memref<2x48xf32, #tpu.memory_space<vmem>>, %arg6: memref<4x48xf32, #tpu.memory_space<vmem>>, %arg7: memref<16x32xf32, #tpu.memory_space<vmem>>, %arg8: memref<16x16xf32, #tpu.memory_space<vmem>>, %arg9: memref<1x48xf32, #tpu.memory_space<vmem>>, %arg10: memref<4x16xf32, #tpu.memory_space<vmem>>, %arg11: memref<4x16xf32, #tpu.memory_space<vmem>>, %arg12: memref<16x16xf32, #tpu.memory_space<vmem>>, %arg13: memref<16x16xf32, #tpu.memory_space<vmem>>, %arg14: memref<2x48xf32, #tpu.memory_space<vmem>>, %arg15: memref<4x48xf32, #tpu.memory_space<vmem>>, %arg16: memref<16x32xf32, #tpu.memory_space<vmem>>, %arg17: memref<16x16xf32, #tpu.memory_space<vmem>>, %arg18: memref<1x48xf32, #tpu.memory_space<vmem>>, %arg19: memref<16x2xf32, #tpu.memory_space<vmem>>, %arg20: memref<1x2xf32, #tpu.memory_space<vmem>>, %arg21: memref<1x8x8xf32, #tpu.memory_space<vmem>>) attributes {dimension_semantics = [#tpu.dimension_semantics<parallel>], iteration_bounds = array<i64: 2>, scalar_prefetch = 0 : i64, scratch_operands = 0 : i64, tpu.core_type = #tpu.core_type<tc>, window_params = [{pipeline_mode = #tpu.pipeline_mode<synchronous>, transform_indices = @transform_0, window_bounds = array<i64: 8, 8>}, {transform_indices = @transform_1, window_bounds = array<i64: 1, 8, 8>}, {transform_indices = @transform_2, window_bounds = array<i64: 1, 4, 4>}, {transform_indices = @transform_3, window_bounds = array<i64: 1, 4, 4>}, {pipeline_mode = #tpu.pipeline_mode<synchronous>, transform_indices = @transform_4, window_bounds = array<i64: 2, 48>}, {pipeline_mode = #tpu.pipeline_mode<synchronous>, transform_indices = @transform_5, window_bounds = array<i64: 4, 48>}, {pipeline_mode = #tpu.pipeline_mode<synchronous>, transform_indices = @transform_6, window_bounds = array<i64: 16, 32>}, {pipeline_mode = #tpu.pipeline_mode<synchronous>, transform_indices = @transform_7, window_bounds = array<i64: 16, 16>}, {pipeline_mode = #tpu.pipeline_mode<synchronous>, transform_indices = @transform_8, window_bounds = array<i64: 1, 48>}, {pipeline_mode = #tpu.pipeline_mode<synchronous>, transform_indices = @transform_9, window_bounds = array<i64: 4, 16>}, {pipeline_mode = #tpu.pipeline_mode<synchronous>, transform_indices = @transform_10, window_bounds = array<i64: 4, 16>}, {pipeline_mode = #tpu.pipeline_mode<synchronous>, transform_indices = @transform_11, window_bounds = array<i64: 16, 16>}, {pipeline_mode = #tpu.pipeline_mode<synchronous>, transform_indices = @transform_12, window_bounds = array<i64: 16, 16>}, {pipeline_mode = #tpu.pipeline_mode<synchronous>, transform_indices = @transform_13, window_bounds = array<i64: 2, 48>}, {pipeline_mode = #tpu.pipeline_mode<synchronous>, transform_indices = @transform_14, window_bounds = array<i64: 4, 48>}, {pipeline_mode = #tpu.pipeline_mode<synchronous>, transform_indices = @transform_15, window_bounds = array<i64: 16, 32>}, {pipeline_mode = #tpu.pipeline_mode<synchronous>, transform_indices = @transform_16, window_bounds = array<i64: 16, 16>}, {pipeline_mode = #tpu.pipeline_mode<synchronous>, transform_indices = @transform_17, window_bounds = array<i64: 1, 48>}, {pipeline_mode = #tpu.pipeline_mode<synchronous>, transform_indices = @transform_18, window_bounds = array<i64: 16, 2>}, {pipeline_mode = #tpu.pipeline_mode<synchronous>, transform_indices = @transform_19, window_bounds = array<i64: 1, 2>}, {transform_indices = @transform_20, window_bounds = array<i64: 1, 8, 8>}]} {
    %c0 = arith.constant 0 : index
    %c0_0 = arith.constant 0 : index
    %0 = vector.load %arg1[%c0, %c0_0] : memref<8x8xf32, #tpu.memory_space<vmem>>, vector<8x8xf32>
    %c0_1 = arith.constant 0 : index
    %c0_2 = arith.constant 0 : index
    %c0_3 = arith.constant 0 : index
    %1 = vector.load %arg2[%c0_1, %c0_2, %c0_3] : memref<1x8x8xf32, #tpu.memory_space<vmem>>, vector<1x8x8xf32>
    %2 = vector.shape_cast %1 : vector<1x8x8xf32> to vector<8x8xf32>
    %c0_4 = arith.constant 0 : index
    %c0_5 = arith.constant 0 : index
    %c0_6 = arith.constant 0 : index
    %3 = vector.load %arg3[%c0_4, %c0_5, %c0_6] : memref<1x4x4xf32, #tpu.memory_space<vmem>>, vector<1x4x4xf32>
    %4 = vector.shape_cast %3 : vector<1x4x4xf32> to vector<4x4xf32>
    %c0_7 = arith.constant 0 : index
    %c0_8 = arith.constant 0 : index
    %c0_9 = arith.constant 0 : index
    %5 = vector.load %arg4[%c0_7, %c0_8, %c0_9] : memref<1x4x4xf32, #tpu.memory_space<vmem>>, vector<1x4x4xf32>
    %6 = vector.shape_cast %5 : vector<1x4x4xf32> to vector<4x4xf32>
    %cst = arith.constant dense<0.000000e+00> : vector<8xf32>
    %7 = vector.multi_reduction <add>, %0, %cst [1] : vector<8x8xf32> to vector<8xf32>
    %8 = vector.shape_cast %7 : vector<8xf32> to vector<8x1xf32>
    %cst_10 = arith.constant 8.000000e+00 : f32
    %9 = math.sqrt %cst_10 : f32
    %cst_11 = arith.constant 1.000000e+00 : f32
    %10 = arith.divf %cst_11, %9 : f32
    %cst_12 = arith.constant dense<0.000000e+00> : vector<4xf32>
    %11 = vector.multi_reduction <add>, %6, %cst_12 [0] : vector<4x4xf32> to vector<4xf32>
    %12 = vector.shape_cast %11 : vector<4xf32> to vector<1x4xf32>
    %cst_13 = arith.constant 4.000000e+00 : f32
    %13 = vector.broadcast %cst_13 : f32 to vector<1x4xf32>
    %14 = arith.divf %12, %13 : vector<1x4xf32>
    %c0_14 = arith.constant 0 : index
    %c0_15 = arith.constant 0 : index
    %15 = vector.load %arg10[%c0_14, %c0_15] : memref<4x16xf32, #tpu.memory_space<vmem>>, vector<4x16xf32>
    %cst_16 = arith.constant dense<0.000000e+00> : vector<1x16xf32>
    %16 = tpu.matmul %14, %15, %cst_16 {dimension_numbers = #tpu.dot_dimension_numbers<[1], [0], [0], [1], [0, 0, 1, 1], [], []>} : vector<1x4xf32>, vector<4x16xf32>, vector<1x16xf32> -> vector<1x16xf32>
    %c0_17 = arith.constant 0 : index
    %c0_18 = arith.constant 0 : index
    %17 = vector.load %arg11[%c0_17, %c0_18] : memref<4x16xf32, #tpu.memory_space<vmem>>, vector<4x16xf32>
    %cst_19 = arith.constant dense<0.000000e+00> : vector<4x16xf32>
    %18 = tpu.matmul %4, %17, %cst_19 {dimension_numbers = #tpu.dot_dimension_numbers<[1], [0], [0], [1], [0, 0, 1, 1], [], []>} : vector<4x4xf32>, vector<4x16xf32>, vector<4x16xf32> -> vector<4x16xf32>
    %19 = vector.broadcast %16 : vector<1x16xf32> to vector<4x16xf32>
    %20 = arith.mulf %18, %19 : vector<4x16xf32>
    %21 = vector.extract_strided_slice %20 {offsets = [0, 0], sizes = [4, 8], strides = [1, 1]} : vector<4x16xf32> to vector<4x8xf32>
    %cst_20 = arith.constant dense<0.000000e+00> : vector<4xf32>
    %22 = vector.multi_reduction <add>, %21, %cst_20 [1] : vector<4x8xf32> to vector<4xf32>
    %23 = vector.shape_cast %22 : vector<4xf32> to vector<4x1xf32>
    %24 = vector.broadcast %10 : f32 to vector<4x1xf32>
    %25 = arith.mulf %23, %24 : vector<4x1xf32>
    %cst_21 = arith.constant dense<0xFF800000> : vector<1xf32>
    %26 = vector.multi_reduction <maximumf>, %25, %cst_21 [0] : vector<4x1xf32> to vector<1xf32>
    %27 = vector.shape_cast %26 : vector<1xf32> to vector<1x1xf32>
    %28 = vector.broadcast %27 : vector<1x1xf32> to vector<4x1xf32>
    %29 = arith.subf %25, %28 : vector<4x1xf32>
    %30 = math.exp %29 : vector<4x1xf32>
    %cst_22 = arith.constant dense<0.000000e+00> : vector<1xf32>
    %31 = vector.multi_reduction <add>, %30, %cst_22 [0] : vector<4x1xf32> to vector<1xf32>
    %32 = vector.shape_cast %31 : vector<1xf32> to vector<1x1xf32>
    %33 = vector.broadcast %32 : vector<1x1xf32> to vector<4x1xf32>
    %34 = arith.divf %30, %33 : vector<4x1xf32>
    %35 = vector.shape_cast %34 : vector<4x1xf32> to vector<4x1xf32>
    %36 = vector.broadcast %35 : vector<4x1xf32> to vector<4x8xf32>
    %37 = vector.extract_strided_slice %20 {offsets = [0, 8], sizes = [4, 8], strides = [1, 1]} : vector<4x16xf32> to vector<4x8xf32>
    %cst_23 = arith.constant dense<0.000000e+00> : vector<4xf32>
    %38 = vector.multi_reduction <add>, %37, %cst_23 [1] : vector<4x8xf32> to vector<4xf32>
    %39 = vector.shape_cast %38 : vector<4xf32> to vector<4x1xf32>
    %40 = vector.broadcast %10 : f32 to vector<4x1xf32>
    %41 = arith.mulf %39, %40 : vector<4x1xf32>
    %cst_24 = arith.constant dense<0xFF800000> : vector<1xf32>
    %42 = vector.multi_reduction <maximumf>, %41, %cst_24 [0] : vector<4x1xf32> to vector<1xf32>
    %43 = vector.shape_cast %42 : vector<1xf32> to vector<1x1xf32>
    %44 = vector.broadcast %43 : vector<1x1xf32> to vector<4x1xf32>
    %45 = arith.subf %41, %44 : vector<4x1xf32>
    %46 = math.exp %45 : vector<4x1xf32>
    %cst_25 = arith.constant dense<0.000000e+00> : vector<1xf32>
    %47 = vector.multi_reduction <add>, %46, %cst_25 [0] : vector<4x1xf32> to vector<1xf32>
    %48 = vector.shape_cast %47 : vector<1xf32> to vector<1x1xf32>
    %49 = vector.broadcast %48 : vector<1x1xf32> to vector<4x1xf32>
    %50 = arith.divf %46, %49 : vector<4x1xf32>
    %51 = vector.shape_cast %50 : vector<4x1xf32> to vector<4x1xf32>
    %52 = vector.broadcast %51 : vector<4x1xf32> to vector<4x8xf32>
    %53 = tpu.concatenate %36, %52 in 1 : vector<4x8xf32>, vector<4x8xf32> -> vector<4x16xf32>
    %c0_26 = arith.constant 0 : index
    %c0_27 = arith.constant 0 : index
    %54 = vector.load %arg12[%c0_26, %c0_27] : memref<16x16xf32, #tpu.memory_space<vmem>>, vector<16x16xf32>
    %c0_28 = arith.constant 0 : index
    %c0_29 = arith.constant 0 : index
    %55 = vector.load %arg5[%c0_28, %c0_29] : memref<2x48xf32, #tpu.memory_space<vmem>>, vector<2x48xf32>
    %c0_30 = arith.constant 0 : index
    %c0_31 = arith.constant 0 : index
    %56 = vector.load %arg7[%c0_30, %c0_31] : memref<16x32xf32, #tpu.memory_space<vmem>>, vector<16x32xf32>
    %c0_32 = arith.constant 0 : index
    %c0_33 = arith.constant 0 : index
    %57 = vector.load %arg8[%c0_32, %c0_33] : memref<16x16xf32, #tpu.memory_space<vmem>>, vector<16x16xf32>
    %c0_34 = arith.constant 0 : index
    %c0_35 = arith.constant 0 : index
    %58 = vector.load %arg9[%c0_34, %c0_35] : memref<1x48xf32, #tpu.memory_space<vmem>>, vector<1x48xf32>
    %c0_36 = arith.constant 0 : index
    %c0_37 = arith.constant 0 : index
    %59 = vector.load %arg6[%c0_36, %c0_37] : memref<4x48xf32, #tpu.memory_space<vmem>>, vector<4x48xf32>
    %cst_38 = arith.constant dense<0.000000e+00> : vector<4x48xf32>
    %60 = tpu.matmul %4, %59, %cst_38 {dimension_numbers = #tpu.dot_dimension_numbers<[1], [0], [0], [1], [0, 0, 1, 1], [], []>} : vector<4x4xf32>, vector<4x48xf32>, vector<4x48xf32> -> vector<4x48xf32>
    %cst_39 = arith.constant dense<0.000000e+00> : vector<8x8xf32>
    %61 = tpu.matmul %0, %2, %cst_39 {dimension_numbers = #tpu.dot_dimension_numbers<[1], [0], [0], [1], [0, 0, 1, 1], [], []>} : vector<8x8xf32>, vector<8x8xf32>, vector<8x8xf32> -> vector<8x8xf32>
    %cst_40 = arith.constant 0.000000e+00 : f32
    %62 = vector.broadcast %cst_40 : f32 to vector<8x16xf32>
    %cst_41 = arith.constant 0.000000e+00 : f32
    %63 = vector.broadcast %cst_41 : f32 to vector<8x16xf32>
    %64 = vector.extract_strided_slice %61 {offsets = [0, 0], sizes = [8, 2], strides = [1, 1]} : vector<8x8xf32> to vector<8x2xf32>
    %cst_42 = arith.constant dense<0.000000e+00> : vector<8x48xf32>
    %65 = tpu.matmul %64, %55, %cst_42 {dimension_numbers = #tpu.dot_dimension_numbers<[1], [0], [0], [1], [0, 0, 1, 1], [], []>} : vector<8x2xf32>, vector<2x48xf32>, vector<8x48xf32> -> vector<8x48xf32>
    %66 = vector.extract_strided_slice %60 {offsets = [0, 0], sizes = [1, 48], strides = [1, 1]} : vector<4x48xf32> to vector<1x48xf32>
    %67 = vector.broadcast %8 : vector<8x1xf32> to vector<8x48xf32>
    %68 = vector.broadcast %66 : vector<1x48xf32> to vector<8x48xf32>
    %69 = arith.mulf %67, %68 : vector<8x48xf32>
    %70 = arith.addf %65, %69 : vector<8x48xf32>
    %71 = vector.broadcast %58 : vector<1x48xf32> to vector<8x48xf32>
    %72 = arith.addf %70, %71 : vector<8x48xf32>
    %cst_43 = arith.constant dense<0.000000e+00> : vector<8x32xf32>
    %73 = tpu.matmul %62, %56, %cst_43 {dimension_numbers = #tpu.dot_dimension_numbers<[1], [0], [0], [1], [0, 0, 1, 1], [], []>} : vector<8x16xf32>, vector<16x32xf32>, vector<8x32xf32> -> vector<8x32xf32>
    %74 = vector.extract_strided_slice %72 {offsets = [0, 0], sizes = [8, 16], strides = [1, 1]} : vector<8x48xf32> to vector<8x16xf32>
    %75 = vector.extract_strided_slice %73 {offsets = [0, 0], sizes = [8, 16], strides = [1, 1]} : vector<8x32xf32> to vector<8x16xf32>
    %76 = arith.addf %74, %75 : vector<8x16xf32>
    %77 = arith.negf %76 : vector<8x16xf32>
    %78 = math.exp %77 : vector<8x16xf32>
    %cst_44 = arith.constant 1.000000e+00 : f32
    %79 = vector.broadcast %cst_44 : f32 to vector<8x16xf32>
    %80 = arith.addf %79, %78 : vector<8x16xf32>
    %81 = arith.divf %79, %80 : vector<8x16xf32>
    %82 = vector.extract_strided_slice %72 {offsets = [0, 16], sizes = [8, 16], strides = [1, 1]} : vector<8x48xf32> to vector<8x16xf32>
    %83 = vector.extract_strided_slice %73 {offsets = [0, 16], sizes = [8, 16], strides = [1, 1]} : vector<8x32xf32> to vector<8x16xf32>
    %84 = arith.addf %82, %83 : vector<8x16xf32>
    %85 = arith.negf %84 : vector<8x16xf32>
    %86 = math.exp %85 : vector<8x16xf32>
    %cst_45 = arith.constant 1.000000e+00 : f32
    %87 = vector.broadcast %cst_45 : f32 to vector<8x16xf32>
    %88 = arith.addf %87, %86 : vector<8x16xf32>
    %89 = arith.divf %87, %88 : vector<8x16xf32>
    %90 = vector.extract_strided_slice %72 {offsets = [0, 32], sizes = [8, 16], strides = [1, 1]} : vector<8x48xf32> to vector<8x16xf32>
    %91 = arith.mulf %89, %62 : vector<8x16xf32>
    %cst_46 = arith.constant dense<0.000000e+00> : vector<8x16xf32>
    %92 = tpu.matmul %91, %57, %cst_46 {dimension_numbers = #tpu.dot_dimension_numbers<[1], [0], [0], [1], [0, 0, 1, 1], [], []>} : vector<8x16xf32>, vector<16x16xf32>, vector<8x16xf32> -> vector<8x16xf32>
    %93 = arith.addf %90, %92 : vector<8x16xf32>
    %94 = math.tanh %93 : vector<8x16xf32>
    %95 = arith.mulf %81, %62 : vector<8x16xf32>
    %cst_47 = arith.constant 1.000000e+00 : f32
    %96 = vector.broadcast %cst_47 : f32 to vector<8x16xf32>
    %97 = arith.subf %96, %81 : vector<8x16xf32>
    %98 = arith.mulf %97, %94 : vector<8x16xf32>
    %99 = arith.addf %95, %98 : vector<8x16xf32>
    %cst_48 = arith.constant dense<0.000000e+00> : vector<8x16xf32>
    %100 = tpu.matmul %99, %54, %cst_48 {dimension_numbers = #tpu.dot_dimension_numbers<[1], [0], [0], [1], [0, 0, 1, 1], [], []>} : vector<8x16xf32>, vector<16x16xf32>, vector<8x16xf32> -> vector<8x16xf32>
    %101 = vector.extract_strided_slice %53 {offsets = [0, 0], sizes = [1, 16], strides = [1, 1]} : vector<4x16xf32> to vector<1x16xf32>
    %102 = vector.broadcast %101 : vector<1x16xf32> to vector<8x16xf32>
    %103 = arith.mulf %102, %100 : vector<8x16xf32>
    %104 = arith.addf %63, %103 : vector<8x16xf32>
    %105 = vector.extract_strided_slice %61 {offsets = [0, 2], sizes = [8, 2], strides = [1, 1]} : vector<8x8xf32> to vector<8x2xf32>
    %cst_49 = arith.constant dense<0.000000e+00> : vector<8x48xf32>
    %106 = tpu.matmul %105, %55, %cst_49 {dimension_numbers = #tpu.dot_dimension_numbers<[1], [0], [0], [1], [0, 0, 1, 1], [], []>} : vector<8x2xf32>, vector<2x48xf32>, vector<8x48xf32> -> vector<8x48xf32>
    %107 = vector.extract_strided_slice %60 {offsets = [1, 0], sizes = [1, 48], strides = [1, 1]} : vector<4x48xf32> to vector<1x48xf32>
    %108 = vector.broadcast %8 : vector<8x1xf32> to vector<8x48xf32>
    %109 = vector.broadcast %107 : vector<1x48xf32> to vector<8x48xf32>
    %110 = arith.mulf %108, %109 : vector<8x48xf32>
    %111 = arith.addf %106, %110 : vector<8x48xf32>
    %112 = vector.broadcast %58 : vector<1x48xf32> to vector<8x48xf32>
    %113 = arith.addf %111, %112 : vector<8x48xf32>
    %cst_50 = arith.constant dense<0.000000e+00> : vector<8x32xf32>
    %114 = tpu.matmul %99, %56, %cst_50 {dimension_numbers = #tpu.dot_dimension_numbers<[1], [0], [0], [1], [0, 0, 1, 1], [], []>} : vector<8x16xf32>, vector<16x32xf32>, vector<8x32xf32> -> vector<8x32xf32>
    %115 = vector.extract_strided_slice %113 {offsets = [0, 0], sizes = [8, 16], strides = [1, 1]} : vector<8x48xf32> to vector<8x16xf32>
    %116 = vector.extract_strided_slice %114 {offsets = [0, 0], sizes = [8, 16], strides = [1, 1]} : vector<8x32xf32> to vector<8x16xf32>
    %117 = arith.addf %115, %116 : vector<8x16xf32>
    %118 = arith.negf %117 : vector<8x16xf32>
    %119 = math.exp %118 : vector<8x16xf32>
    %cst_51 = arith.constant 1.000000e+00 : f32
    %120 = vector.broadcast %cst_51 : f32 to vector<8x16xf32>
    %121 = arith.addf %120, %119 : vector<8x16xf32>
    %122 = arith.divf %120, %121 : vector<8x16xf32>
    %123 = vector.extract_strided_slice %113 {offsets = [0, 16], sizes = [8, 16], strides = [1, 1]} : vector<8x48xf32> to vector<8x16xf32>
    %124 = vector.extract_strided_slice %114 {offsets = [0, 16], sizes = [8, 16], strides = [1, 1]} : vector<8x32xf32> to vector<8x16xf32>
    %125 = arith.addf %123, %124 : vector<8x16xf32>
    %126 = arith.negf %125 : vector<8x16xf32>
    %127 = math.exp %126 : vector<8x16xf32>
    %cst_52 = arith.constant 1.000000e+00 : f32
    %128 = vector.broadcast %cst_52 : f32 to vector<8x16xf32>
    %129 = arith.addf %128, %127 : vector<8x16xf32>
    %130 = arith.divf %128, %129 : vector<8x16xf32>
    %131 = vector.extract_strided_slice %113 {offsets = [0, 32], sizes = [8, 16], strides = [1, 1]} : vector<8x48xf32> to vector<8x16xf32>
    %132 = arith.mulf %130, %99 : vector<8x16xf32>
    %cst_53 = arith.constant dense<0.000000e+00> : vector<8x16xf32>
    %133 = tpu.matmul %132, %57, %cst_53 {dimension_numbers = #tpu.dot_dimension_numbers<[1], [0], [0], [1], [0, 0, 1, 1], [], []>} : vector<8x16xf32>, vector<16x16xf32>, vector<8x16xf32> -> vector<8x16xf32>
    %134 = arith.addf %131, %133 : vector<8x16xf32>
    %135 = math.tanh %134 : vector<8x16xf32>
    %136 = arith.mulf %122, %99 : vector<8x16xf32>
    %cst_54 = arith.constant 1.000000e+00 : f32
    %137 = vector.broadcast %cst_54 : f32 to vector<8x16xf32>
    %138 = arith.subf %137, %122 : vector<8x16xf32>
    %139 = arith.mulf %138, %135 : vector<8x16xf32>
    %140 = arith.addf %136, %139 : vector<8x16xf32>
    %cst_55 = arith.constant dense<0.000000e+00> : vector<8x16xf32>
    %141 = tpu.matmul %140, %54, %cst_55 {dimension_numbers = #tpu.dot_dimension_numbers<[1], [0], [0], [1], [0, 0, 1, 1], [], []>} : vector<8x16xf32>, vector<16x16xf32>, vector<8x16xf32> -> vector<8x16xf32>
    %142 = vector.extract_strided_slice %53 {offsets = [1, 0], sizes = [1, 16], strides = [1, 1]} : vector<4x16xf32> to vector<1x16xf32>
    %143 = vector.broadcast %142 : vector<1x16xf32> to vector<8x16xf32>
    %144 = arith.mulf %143, %141 : vector<8x16xf32>
    %145 = arith.addf %104, %144 : vector<8x16xf32>
    %146 = vector.extract_strided_slice %61 {offsets = [0, 4], sizes = [8, 2], strides = [1, 1]} : vector<8x8xf32> to vector<8x2xf32>
    %cst_56 = arith.constant dense<0.000000e+00> : vector<8x48xf32>
    %147 = tpu.matmul %146, %55, %cst_56 {dimension_numbers = #tpu.dot_dimension_numbers<[1], [0], [0], [1], [0, 0, 1, 1], [], []>} : vector<8x2xf32>, vector<2x48xf32>, vector<8x48xf32> -> vector<8x48xf32>
    %148 = vector.extract_strided_slice %60 {offsets = [2, 0], sizes = [1, 48], strides = [1, 1]} : vector<4x48xf32> to vector<1x48xf32>
    %149 = vector.broadcast %8 : vector<8x1xf32> to vector<8x48xf32>
    %150 = vector.broadcast %148 : vector<1x48xf32> to vector<8x48xf32>
    %151 = arith.mulf %149, %150 : vector<8x48xf32>
    %152 = arith.addf %147, %151 : vector<8x48xf32>
    %153 = vector.broadcast %58 : vector<1x48xf32> to vector<8x48xf32>
    %154 = arith.addf %152, %153 : vector<8x48xf32>
    %cst_57 = arith.constant dense<0.000000e+00> : vector<8x32xf32>
    %155 = tpu.matmul %140, %56, %cst_57 {dimension_numbers = #tpu.dot_dimension_numbers<[1], [0], [0], [1], [0, 0, 1, 1], [], []>} : vector<8x16xf32>, vector<16x32xf32>, vector<8x32xf32> -> vector<8x32xf32>
    %156 = vector.extract_strided_slice %154 {offsets = [0, 0], sizes = [8, 16], strides = [1, 1]} : vector<8x48xf32> to vector<8x16xf32>
    %157 = vector.extract_strided_slice %155 {offsets = [0, 0], sizes = [8, 16], strides = [1, 1]} : vector<8x32xf32> to vector<8x16xf32>
    %158 = arith.addf %156, %157 : vector<8x16xf32>
    %159 = arith.negf %158 : vector<8x16xf32>
    %160 = math.exp %159 : vector<8x16xf32>
    %cst_58 = arith.constant 1.000000e+00 : f32
    %161 = vector.broadcast %cst_58 : f32 to vector<8x16xf32>
    %162 = arith.addf %161, %160 : vector<8x16xf32>
    %163 = arith.divf %161, %162 : vector<8x16xf32>
    %164 = vector.extract_strided_slice %154 {offsets = [0, 16], sizes = [8, 16], strides = [1, 1]} : vector<8x48xf32> to vector<8x16xf32>
    %165 = vector.extract_strided_slice %155 {offsets = [0, 16], sizes = [8, 16], strides = [1, 1]} : vector<8x32xf32> to vector<8x16xf32>
    %166 = arith.addf %164, %165 : vector<8x16xf32>
    %167 = arith.negf %166 : vector<8x16xf32>
    %168 = math.exp %167 : vector<8x16xf32>
    %cst_59 = arith.constant 1.000000e+00 : f32
    %169 = vector.broadcast %cst_59 : f32 to vector<8x16xf32>
    %170 = arith.addf %169, %168 : vector<8x16xf32>
    %171 = arith.divf %169, %170 : vector<8x16xf32>
    %172 = vector.extract_strided_slice %154 {offsets = [0, 32], sizes = [8, 16], strides = [1, 1]} : vector<8x48xf32> to vector<8x16xf32>
    %173 = arith.mulf %171, %140 : vector<8x16xf32>
    %cst_60 = arith.constant dense<0.000000e+00> : vector<8x16xf32>
    %174 = tpu.matmul %173, %57, %cst_60 {dimension_numbers = #tpu.dot_dimension_numbers<[1], [0], [0], [1], [0, 0, 1, 1], [], []>} : vector<8x16xf32>, vector<16x16xf32>, vector<8x16xf32> -> vector<8x16xf32>
    %175 = arith.addf %172, %174 : vector<8x16xf32>
    %176 = math.tanh %175 : vector<8x16xf32>
    %177 = arith.mulf %163, %140 : vector<8x16xf32>
    %cst_61 = arith.constant 1.000000e+00 : f32
    %178 = vector.broadcast %cst_61 : f32 to vector<8x16xf32>
    %179 = arith.subf %178, %163 : vector<8x16xf32>
    %180 = arith.mulf %179, %176 : vector<8x16xf32>
    %181 = arith.addf %177, %180 : vector<8x16xf32>
    %cst_62 = arith.constant dense<0.000000e+00> : vector<8x16xf32>
    %182 = tpu.matmul %181, %54, %cst_62 {dimension_numbers = #tpu.dot_dimension_numbers<[1], [0], [0], [1], [0, 0, 1, 1], [], []>} : vector<8x16xf32>, vector<16x16xf32>, vector<8x16xf32> -> vector<8x16xf32>
    %183 = vector.extract_strided_slice %53 {offsets = [2, 0], sizes = [1, 16], strides = [1, 1]} : vector<4x16xf32> to vector<1x16xf32>
    %184 = vector.broadcast %183 : vector<1x16xf32> to vector<8x16xf32>
    %185 = arith.mulf %184, %182 : vector<8x16xf32>
    %186 = arith.addf %145, %185 : vector<8x16xf32>
    %187 = vector.extract_strided_slice %61 {offsets = [0, 6], sizes = [8, 2], strides = [1, 1]} : vector<8x8xf32> to vector<8x2xf32>
    %cst_63 = arith.constant dense<0.000000e+00> : vector<8x48xf32>
    %188 = tpu.matmul %187, %55, %cst_63 {dimension_numbers = #tpu.dot_dimension_numbers<[1], [0], [0], [1], [0, 0, 1, 1], [], []>} : vector<8x2xf32>, vector<2x48xf32>, vector<8x48xf32> -> vector<8x48xf32>
    %189 = vector.extract_strided_slice %60 {offsets = [3, 0], sizes = [1, 48], strides = [1, 1]} : vector<4x48xf32> to vector<1x48xf32>
    %190 = vector.broadcast %8 : vector<8x1xf32> to vector<8x48xf32>
    %191 = vector.broadcast %189 : vector<1x48xf32> to vector<8x48xf32>
    %192 = arith.mulf %190, %191 : vector<8x48xf32>
    %193 = arith.addf %188, %192 : vector<8x48xf32>
    %194 = vector.broadcast %58 : vector<1x48xf32> to vector<8x48xf32>
    %195 = arith.addf %193, %194 : vector<8x48xf32>
    %cst_64 = arith.constant dense<0.000000e+00> : vector<8x32xf32>
    %196 = tpu.matmul %181, %56, %cst_64 {dimension_numbers = #tpu.dot_dimension_numbers<[1], [0], [0], [1], [0, 0, 1, 1], [], []>} : vector<8x16xf32>, vector<16x32xf32>, vector<8x32xf32> -> vector<8x32xf32>
    %197 = vector.extract_strided_slice %195 {offsets = [0, 0], sizes = [8, 16], strides = [1, 1]} : vector<8x48xf32> to vector<8x16xf32>
    %198 = vector.extract_strided_slice %196 {offsets = [0, 0], sizes = [8, 16], strides = [1, 1]} : vector<8x32xf32> to vector<8x16xf32>
    %199 = arith.addf %197, %198 : vector<8x16xf32>
    %200 = arith.negf %199 : vector<8x16xf32>
    %201 = math.exp %200 : vector<8x16xf32>
    %cst_65 = arith.constant 1.000000e+00 : f32
    %202 = vector.broadcast %cst_65 : f32 to vector<8x16xf32>
    %203 = arith.addf %202, %201 : vector<8x16xf32>
    %204 = arith.divf %202, %203 : vector<8x16xf32>
    %205 = vector.extract_strided_slice %195 {offsets = [0, 16], sizes = [8, 16], strides = [1, 1]} : vector<8x48xf32> to vector<8x16xf32>
    %206 = vector.extract_strided_slice %196 {offsets = [0, 16], sizes = [8, 16], strides = [1, 1]} : vector<8x32xf32> to vector<8x16xf32>
    %207 = arith.addf %205, %206 : vector<8x16xf32>
    %208 = arith.negf %207 : vector<8x16xf32>
    %209 = math.exp %208 : vector<8x16xf32>
    %cst_66 = arith.constant 1.000000e+00 : f32
    %210 = vector.broadcast %cst_66 : f32 to vector<8x16xf32>
    %211 = arith.addf %210, %209 : vector<8x16xf32>
    %212 = arith.divf %210, %211 : vector<8x16xf32>
    %213 = vector.extract_strided_slice %195 {offsets = [0, 32], sizes = [8, 16], strides = [1, 1]} : vector<8x48xf32> to vector<8x16xf32>
    %214 = arith.mulf %212, %181 : vector<8x16xf32>
    %cst_67 = arith.constant dense<0.000000e+00> : vector<8x16xf32>
    %215 = tpu.matmul %214, %57, %cst_67 {dimension_numbers = #tpu.dot_dimension_numbers<[1], [0], [0], [1], [0, 0, 1, 1], [], []>} : vector<8x16xf32>, vector<16x16xf32>, vector<8x16xf32> -> vector<8x16xf32>
    %216 = arith.addf %213, %215 : vector<8x16xf32>
    %217 = math.tanh %216 : vector<8x16xf32>
    %218 = arith.mulf %204, %181 : vector<8x16xf32>
    %cst_68 = arith.constant 1.000000e+00 : f32
    %219 = vector.broadcast %cst_68 : f32 to vector<8x16xf32>
    %220 = arith.subf %219, %204 : vector<8x16xf32>
    %221 = arith.mulf %220, %217 : vector<8x16xf32>
    %222 = arith.addf %218, %221 : vector<8x16xf32>
    %cst_69 = arith.constant dense<0.000000e+00> : vector<8x16xf32>
    %223 = tpu.matmul %222, %54, %cst_69 {dimension_numbers = #tpu.dot_dimension_numbers<[1], [0], [0], [1], [0, 0, 1, 1], [], []>} : vector<8x16xf32>, vector<16x16xf32>, vector<8x16xf32> -> vector<8x16xf32>
    %224 = vector.extract_strided_slice %53 {offsets = [3, 0], sizes = [1, 16], strides = [1, 1]} : vector<4x16xf32> to vector<1x16xf32>
    %225 = vector.broadcast %224 : vector<1x16xf32> to vector<8x16xf32>
    %226 = arith.mulf %225, %223 : vector<8x16xf32>
    %227 = arith.addf %186, %226 : vector<8x16xf32>
    %c0_70 = arith.constant 0 : index
    %c0_71 = arith.constant 0 : index
    %228 = vector.load %arg13[%c0_70, %c0_71] : memref<16x16xf32, #tpu.memory_space<vmem>>, vector<16x16xf32>
    %cst_72 = arith.constant dense<0.000000e+00> : vector<8x16xf32>
    %229 = tpu.matmul %227, %228, %cst_72 {dimension_numbers = #tpu.dot_dimension_numbers<[1], [0], [0], [1], [0, 0, 1, 1], [], []>} : vector<8x16xf32>, vector<16x16xf32>, vector<8x16xf32> -> vector<8x16xf32>
    %230 = arith.addf %229, %222 : vector<8x16xf32>
    %c0_73 = arith.constant 0 : index
    %c0_74 = arith.constant 0 : index
    %231 = vector.load %arg14[%c0_73, %c0_74] : memref<2x48xf32, #tpu.memory_space<vmem>>, vector<2x48xf32>
    %c0_75 = arith.constant 0 : index
    %c0_76 = arith.constant 0 : index
    %232 = vector.load %arg16[%c0_75, %c0_76] : memref<16x32xf32, #tpu.memory_space<vmem>>, vector<16x32xf32>
    %c0_77 = arith.constant 0 : index
    %c0_78 = arith.constant 0 : index
    %233 = vector.load %arg17[%c0_77, %c0_78] : memref<16x16xf32, #tpu.memory_space<vmem>>, vector<16x16xf32>
    %c0_79 = arith.constant 0 : index
    %c0_80 = arith.constant 0 : index
    %234 = vector.load %arg18[%c0_79, %c0_80] : memref<1x48xf32, #tpu.memory_space<vmem>>, vector<1x48xf32>
    %c0_81 = arith.constant 0 : index
    %c0_82 = arith.constant 0 : index
    %235 = vector.load %arg15[%c0_81, %c0_82] : memref<4x48xf32, #tpu.memory_space<vmem>>, vector<4x48xf32>
    %cst_83 = arith.constant dense<0.000000e+00> : vector<4x48xf32>
    %236 = tpu.matmul %6, %235, %cst_83 {dimension_numbers = #tpu.dot_dimension_numbers<[1], [0], [0], [1], [0, 0, 1, 1], [], []>} : vector<4x4xf32>, vector<4x48xf32>, vector<4x48xf32> -> vector<4x48xf32>
    %c0_84 = arith.constant 0 : index
    %c0_85 = arith.constant 0 : index
    %237 = vector.load %arg19[%c0_84, %c0_85] : memref<16x2xf32, #tpu.memory_space<vmem>>, vector<16x2xf32>
    %c0_86 = arith.constant 0 : index
    %c0_87 = arith.constant 0 : index
    %238 = vector.load %arg20[%c0_86, %c0_87] : memref<1x2xf32, #tpu.memory_space<vmem>>, vector<1x2xf32>
    %cst_88 = arith.constant 0.000000e+00 : f32
    %239 = vector.broadcast %cst_88 : f32 to vector<8x2xf32>
    %cst_89 = arith.constant dense<0.000000e+00> : vector<8x2xf32>
    %240 = tpu.matmul %0, %239, %cst_89 {dimension_numbers = #tpu.dot_dimension_numbers<[1], [0], [0], [1], [0, 0, 1, 1], [], []>} : vector<8x8xf32>, vector<8x2xf32>, vector<8x2xf32> -> vector<8x2xf32>
    %cst_90 = arith.constant dense<0.000000e+00> : vector<8x48xf32>
    %241 = tpu.matmul %240, %231, %cst_90 {dimension_numbers = #tpu.dot_dimension_numbers<[1], [0], [0], [1], [0, 0, 1, 1], [], []>} : vector<8x2xf32>, vector<2x48xf32>, vector<8x48xf32> -> vector<8x48xf32>
    %242 = vector.extract_strided_slice %236 {offsets = [0, 0], sizes = [1, 48], strides = [1, 1]} : vector<4x48xf32> to vector<1x48xf32>
    %243 = vector.broadcast %8 : vector<8x1xf32> to vector<8x48xf32>
    %244 = vector.broadcast %242 : vector<1x48xf32> to vector<8x48xf32>
    %245 = arith.mulf %243, %244 : vector<8x48xf32>
    %246 = arith.addf %241, %245 : vector<8x48xf32>
    %247 = vector.broadcast %234 : vector<1x48xf32> to vector<8x48xf32>
    %248 = arith.addf %246, %247 : vector<8x48xf32>
    %cst_91 = arith.constant dense<0.000000e+00> : vector<8x32xf32>
    %249 = tpu.matmul %230, %232, %cst_91 {dimension_numbers = #tpu.dot_dimension_numbers<[1], [0], [0], [1], [0, 0, 1, 1], [], []>} : vector<8x16xf32>, vector<16x32xf32>, vector<8x32xf32> -> vector<8x32xf32>
    %250 = vector.extract_strided_slice %248 {offsets = [0, 0], sizes = [8, 16], strides = [1, 1]} : vector<8x48xf32> to vector<8x16xf32>
    %251 = vector.extract_strided_slice %249 {offsets = [0, 0], sizes = [8, 16], strides = [1, 1]} : vector<8x32xf32> to vector<8x16xf32>
    %252 = arith.addf %250, %251 : vector<8x16xf32>
    %253 = arith.negf %252 : vector<8x16xf32>
    %254 = math.exp %253 : vector<8x16xf32>
    %cst_92 = arith.constant 1.000000e+00 : f32
    %255 = vector.broadcast %cst_92 : f32 to vector<8x16xf32>
    %256 = arith.addf %255, %254 : vector<8x16xf32>
    %257 = arith.divf %255, %256 : vector<8x16xf32>
    %258 = vector.extract_strided_slice %248 {offsets = [0, 16], sizes = [8, 16], strides = [1, 1]} : vector<8x48xf32> to vector<8x16xf32>
    %259 = vector.extract_strided_slice %249 {offsets = [0, 16], sizes = [8, 16], strides = [1, 1]} : vector<8x32xf32> to vector<8x16xf32>
    %260 = arith.addf %258, %259 : vector<8x16xf32>
    %261 = arith.negf %260 : vector<8x16xf32>
    %262 = math.exp %261 : vector<8x16xf32>
    %cst_93 = arith.constant 1.000000e+00 : f32
    %263 = vector.broadcast %cst_93 : f32 to vector<8x16xf32>
    %264 = arith.addf %263, %262 : vector<8x16xf32>
    %265 = arith.divf %263, %264 : vector<8x16xf32>
    %266 = vector.extract_strided_slice %248 {offsets = [0, 32], sizes = [8, 16], strides = [1, 1]} : vector<8x48xf32> to vector<8x16xf32>
    %267 = arith.mulf %265, %230 : vector<8x16xf32>
    %cst_94 = arith.constant dense<0.000000e+00> : vector<8x16xf32>
    %268 = tpu.matmul %267, %233, %cst_94 {dimension_numbers = #tpu.dot_dimension_numbers<[1], [0], [0], [1], [0, 0, 1, 1], [], []>} : vector<8x16xf32>, vector<16x16xf32>, vector<8x16xf32> -> vector<8x16xf32>
    %269 = arith.addf %266, %268 : vector<8x16xf32>
    %270 = math.tanh %269 : vector<8x16xf32>
    %271 = arith.mulf %257, %230 : vector<8x16xf32>
    %cst_95 = arith.constant 1.000000e+00 : f32
    %272 = vector.broadcast %cst_95 : f32 to vector<8x16xf32>
    %273 = arith.subf %272, %257 : vector<8x16xf32>
    %274 = arith.mulf %273, %270 : vector<8x16xf32>
    %275 = arith.addf %271, %274 : vector<8x16xf32>
    %cst_96 = arith.constant dense<0.000000e+00> : vector<8x2xf32>
    %276 = tpu.matmul %275, %237, %cst_96 {dimension_numbers = #tpu.dot_dimension_numbers<[1], [0], [0], [1], [0, 0, 1, 1], [], []>} : vector<8x16xf32>, vector<16x2xf32>, vector<8x2xf32> -> vector<8x2xf32>
    %277 = vector.broadcast %238 : vector<1x2xf32> to vector<8x2xf32>
    %278 = arith.addf %276, %277 : vector<8x2xf32>
    %cst_97 = arith.constant dense<0.000000e+00> : vector<8x2xf32>
    %279 = tpu.matmul %0, %278, %cst_97 {dimension_numbers = #tpu.dot_dimension_numbers<[1], [0], [0], [1], [0, 0, 1, 1], [], []>} : vector<8x8xf32>, vector<8x2xf32>, vector<8x2xf32> -> vector<8x2xf32>
    %cst_98 = arith.constant dense<0.000000e+00> : vector<8x48xf32>
    %280 = tpu.matmul %279, %231, %cst_98 {dimension_numbers = #tpu.dot_dimension_numbers<[1], [0], [0], [1], [0, 0, 1, 1], [], []>} : vector<8x2xf32>, vector<2x48xf32>, vector<8x48xf32> -> vector<8x48xf32>
    %281 = vector.extract_strided_slice %236 {offsets = [1, 0], sizes = [1, 48], strides = [1, 1]} : vector<4x48xf32> to vector<1x48xf32>
    %282 = vector.broadcast %8 : vector<8x1xf32> to vector<8x48xf32>
    %283 = vector.broadcast %281 : vector<1x48xf32> to vector<8x48xf32>
    %284 = arith.mulf %282, %283 : vector<8x48xf32>
    %285 = arith.addf %280, %284 : vector<8x48xf32>
    %286 = vector.broadcast %234 : vector<1x48xf32> to vector<8x48xf32>
    %287 = arith.addf %285, %286 : vector<8x48xf32>
    %cst_99 = arith.constant dense<0.000000e+00> : vector<8x32xf32>
    %288 = tpu.matmul %275, %232, %cst_99 {dimension_numbers = #tpu.dot_dimension_numbers<[1], [0], [0], [1], [0, 0, 1, 1], [], []>} : vector<8x16xf32>, vector<16x32xf32>, vector<8x32xf32> -> vector<8x32xf32>
    %289 = vector.extract_strided_slice %287 {offsets = [0, 0], sizes = [8, 16], strides = [1, 1]} : vector<8x48xf32> to vector<8x16xf32>
    %290 = vector.extract_strided_slice %288 {offsets = [0, 0], sizes = [8, 16], strides = [1, 1]} : vector<8x32xf32> to vector<8x16xf32>
    %291 = arith.addf %289, %290 : vector<8x16xf32>
    %292 = arith.negf %291 : vector<8x16xf32>
    %293 = math.exp %292 : vector<8x16xf32>
    %cst_100 = arith.constant 1.000000e+00 : f32
    %294 = vector.broadcast %cst_100 : f32 to vector<8x16xf32>
    %295 = arith.addf %294, %293 : vector<8x16xf32>
    %296 = arith.divf %294, %295 : vector<8x16xf32>
    %297 = vector.extract_strided_slice %287 {offsets = [0, 16], sizes = [8, 16], strides = [1, 1]} : vector<8x48xf32> to vector<8x16xf32>
    %298 = vector.extract_strided_slice %288 {offsets = [0, 16], sizes = [8, 16], strides = [1, 1]} : vector<8x32xf32> to vector<8x16xf32>
    %299 = arith.addf %297, %298 : vector<8x16xf32>
    %300 = arith.negf %299 : vector<8x16xf32>
    %301 = math.exp %300 : vector<8x16xf32>
    %cst_101 = arith.constant 1.000000e+00 : f32
    %302 = vector.broadcast %cst_101 : f32 to vector<8x16xf32>
    %303 = arith.addf %302, %301 : vector<8x16xf32>
    %304 = arith.divf %302, %303 : vector<8x16xf32>
    %305 = vector.extract_strided_slice %287 {offsets = [0, 32], sizes = [8, 16], strides = [1, 1]} : vector<8x48xf32> to vector<8x16xf32>
    %306 = arith.mulf %304, %275 : vector<8x16xf32>
    %cst_102 = arith.constant dense<0.000000e+00> : vector<8x16xf32>
    %307 = tpu.matmul %306, %233, %cst_102 {dimension_numbers = #tpu.dot_dimension_numbers<[1], [0], [0], [1], [0, 0, 1, 1], [], []>} : vector<8x16xf32>, vector<16x16xf32>, vector<8x16xf32> -> vector<8x16xf32>
    %308 = arith.addf %305, %307 : vector<8x16xf32>
    %309 = math.tanh %308 : vector<8x16xf32>
    %310 = arith.mulf %296, %275 : vector<8x16xf32>
    %cst_103 = arith.constant 1.000000e+00 : f32
    %311 = vector.broadcast %cst_103 : f32 to vector<8x16xf32>
    %312 = arith.subf %311, %296 : vector<8x16xf32>
    %313 = arith.mulf %312, %309 : vector<8x16xf32>
    %314 = arith.addf %310, %313 : vector<8x16xf32>
    %cst_104 = arith.constant dense<0.000000e+00> : vector<8x2xf32>
    %315 = tpu.matmul %314, %237, %cst_104 {dimension_numbers = #tpu.dot_dimension_numbers<[1], [0], [0], [1], [0, 0, 1, 1], [], []>} : vector<8x16xf32>, vector<16x2xf32>, vector<8x2xf32> -> vector<8x2xf32>
    %316 = vector.broadcast %238 : vector<1x2xf32> to vector<8x2xf32>
    %317 = arith.addf %315, %316 : vector<8x2xf32>
    %cst_105 = arith.constant dense<0.000000e+00> : vector<8x2xf32>
    %318 = tpu.matmul %0, %317, %cst_105 {dimension_numbers = #tpu.dot_dimension_numbers<[1], [0], [0], [1], [0, 0, 1, 1], [], []>} : vector<8x8xf32>, vector<8x2xf32>, vector<8x2xf32> -> vector<8x2xf32>
    %cst_106 = arith.constant dense<0.000000e+00> : vector<8x48xf32>
    %319 = tpu.matmul %318, %231, %cst_106 {dimension_numbers = #tpu.dot_dimension_numbers<[1], [0], [0], [1], [0, 0, 1, 1], [], []>} : vector<8x2xf32>, vector<2x48xf32>, vector<8x48xf32> -> vector<8x48xf32>
    %320 = vector.extract_strided_slice %236 {offsets = [2, 0], sizes = [1, 48], strides = [1, 1]} : vector<4x48xf32> to vector<1x48xf32>
    %321 = vector.broadcast %8 : vector<8x1xf32> to vector<8x48xf32>
    %322 = vector.broadcast %320 : vector<1x48xf32> to vector<8x48xf32>
    %323 = arith.mulf %321, %322 : vector<8x48xf32>
    %324 = arith.addf %319, %323 : vector<8x48xf32>
    %325 = vector.broadcast %234 : vector<1x48xf32> to vector<8x48xf32>
    %326 = arith.addf %324, %325 : vector<8x48xf32>
    %cst_107 = arith.constant dense<0.000000e+00> : vector<8x32xf32>
    %327 = tpu.matmul %314, %232, %cst_107 {dimension_numbers = #tpu.dot_dimension_numbers<[1], [0], [0], [1], [0, 0, 1, 1], [], []>} : vector<8x16xf32>, vector<16x32xf32>, vector<8x32xf32> -> vector<8x32xf32>
    %328 = vector.extract_strided_slice %326 {offsets = [0, 0], sizes = [8, 16], strides = [1, 1]} : vector<8x48xf32> to vector<8x16xf32>
    %329 = vector.extract_strided_slice %327 {offsets = [0, 0], sizes = [8, 16], strides = [1, 1]} : vector<8x32xf32> to vector<8x16xf32>
    %330 = arith.addf %328, %329 : vector<8x16xf32>
    %331 = arith.negf %330 : vector<8x16xf32>
    %332 = math.exp %331 : vector<8x16xf32>
    %cst_108 = arith.constant 1.000000e+00 : f32
    %333 = vector.broadcast %cst_108 : f32 to vector<8x16xf32>
    %334 = arith.addf %333, %332 : vector<8x16xf32>
    %335 = arith.divf %333, %334 : vector<8x16xf32>
    %336 = vector.extract_strided_slice %326 {offsets = [0, 16], sizes = [8, 16], strides = [1, 1]} : vector<8x48xf32> to vector<8x16xf32>
    %337 = vector.extract_strided_slice %327 {offsets = [0, 16], sizes = [8, 16], strides = [1, 1]} : vector<8x32xf32> to vector<8x16xf32>
    %338 = arith.addf %336, %337 : vector<8x16xf32>
    %339 = arith.negf %338 : vector<8x16xf32>
    %340 = math.exp %339 : vector<8x16xf32>
    %cst_109 = arith.constant 1.000000e+00 : f32
    %341 = vector.broadcast %cst_109 : f32 to vector<8x16xf32>
    %342 = arith.addf %341, %340 : vector<8x16xf32>
    %343 = arith.divf %341, %342 : vector<8x16xf32>
    %344 = vector.extract_strided_slice %326 {offsets = [0, 32], sizes = [8, 16], strides = [1, 1]} : vector<8x48xf32> to vector<8x16xf32>
    %345 = arith.mulf %343, %314 : vector<8x16xf32>
    %cst_110 = arith.constant dense<0.000000e+00> : vector<8x16xf32>
    %346 = tpu.matmul %345, %233, %cst_110 {dimension_numbers = #tpu.dot_dimension_numbers<[1], [0], [0], [1], [0, 0, 1, 1], [], []>} : vector<8x16xf32>, vector<16x16xf32>, vector<8x16xf32> -> vector<8x16xf32>
    %347 = arith.addf %344, %346 : vector<8x16xf32>
    %348 = math.tanh %347 : vector<8x16xf32>
    %349 = arith.mulf %335, %314 : vector<8x16xf32>
    %cst_111 = arith.constant 1.000000e+00 : f32
    %350 = vector.broadcast %cst_111 : f32 to vector<8x16xf32>
    %351 = arith.subf %350, %335 : vector<8x16xf32>
    %352 = arith.mulf %351, %348 : vector<8x16xf32>
    %353 = arith.addf %349, %352 : vector<8x16xf32>
    %cst_112 = arith.constant dense<0.000000e+00> : vector<8x2xf32>
    %354 = tpu.matmul %353, %237, %cst_112 {dimension_numbers = #tpu.dot_dimension_numbers<[1], [0], [0], [1], [0, 0, 1, 1], [], []>} : vector<8x16xf32>, vector<16x2xf32>, vector<8x2xf32> -> vector<8x2xf32>
    %355 = vector.broadcast %238 : vector<1x2xf32> to vector<8x2xf32>
    %356 = arith.addf %354, %355 : vector<8x2xf32>
    %cst_113 = arith.constant dense<0.000000e+00> : vector<8x2xf32>
    %357 = tpu.matmul %0, %356, %cst_113 {dimension_numbers = #tpu.dot_dimension_numbers<[1], [0], [0], [1], [0, 0, 1, 1], [], []>} : vector<8x8xf32>, vector<8x2xf32>, vector<8x2xf32> -> vector<8x2xf32>
    %cst_114 = arith.constant dense<0.000000e+00> : vector<8x48xf32>
    %358 = tpu.matmul %357, %231, %cst_114 {dimension_numbers = #tpu.dot_dimension_numbers<[1], [0], [0], [1], [0, 0, 1, 1], [], []>} : vector<8x2xf32>, vector<2x48xf32>, vector<8x48xf32> -> vector<8x48xf32>
    %359 = vector.extract_strided_slice %236 {offsets = [3, 0], sizes = [1, 48], strides = [1, 1]} : vector<4x48xf32> to vector<1x48xf32>
    %360 = vector.broadcast %8 : vector<8x1xf32> to vector<8x48xf32>
    %361 = vector.broadcast %359 : vector<1x48xf32> to vector<8x48xf32>
    %362 = arith.mulf %360, %361 : vector<8x48xf32>
    %363 = arith.addf %358, %362 : vector<8x48xf32>
    %364 = vector.broadcast %234 : vector<1x48xf32> to vector<8x48xf32>
    %365 = arith.addf %363, %364 : vector<8x48xf32>
    %cst_115 = arith.constant dense<0.000000e+00> : vector<8x32xf32>
    %366 = tpu.matmul %353, %232, %cst_115 {dimension_numbers = #tpu.dot_dimension_numbers<[1], [0], [0], [1], [0, 0, 1, 1], [], []>} : vector<8x16xf32>, vector<16x32xf32>, vector<8x32xf32> -> vector<8x32xf32>
    %367 = vector.extract_strided_slice %365 {offsets = [0, 0], sizes = [8, 16], strides = [1, 1]} : vector<8x48xf32> to vector<8x16xf32>
    %368 = vector.extract_strided_slice %366 {offsets = [0, 0], sizes = [8, 16], strides = [1, 1]} : vector<8x32xf32> to vector<8x16xf32>
    %369 = arith.addf %367, %368 : vector<8x16xf32>
    %370 = arith.negf %369 : vector<8x16xf32>
    %371 = math.exp %370 : vector<8x16xf32>
    %cst_116 = arith.constant 1.000000e+00 : f32
    %372 = vector.broadcast %cst_116 : f32 to vector<8x16xf32>
    %373 = arith.addf %372, %371 : vector<8x16xf32>
    %374 = arith.divf %372, %373 : vector<8x16xf32>
    %375 = vector.extract_strided_slice %365 {offsets = [0, 16], sizes = [8, 16], strides = [1, 1]} : vector<8x48xf32> to vector<8x16xf32>
    %376 = vector.extract_strided_slice %366 {offsets = [0, 16], sizes = [8, 16], strides = [1, 1]} : vector<8x32xf32> to vector<8x16xf32>
    %377 = arith.addf %375, %376 : vector<8x16xf32>
    %378 = arith.negf %377 : vector<8x16xf32>
    %379 = math.exp %378 : vector<8x16xf32>
    %cst_117 = arith.constant 1.000000e+00 : f32
    %380 = vector.broadcast %cst_117 : f32 to vector<8x16xf32>
    %381 = arith.addf %380, %379 : vector<8x16xf32>
    %382 = arith.divf %380, %381 : vector<8x16xf32>
    %383 = vector.extract_strided_slice %365 {offsets = [0, 32], sizes = [8, 16], strides = [1, 1]} : vector<8x48xf32> to vector<8x16xf32>
    %384 = arith.mulf %382, %353 : vector<8x16xf32>
    %cst_118 = arith.constant dense<0.000000e+00> : vector<8x16xf32>
    %385 = tpu.matmul %384, %233, %cst_118 {dimension_numbers = #tpu.dot_dimension_numbers<[1], [0], [0], [1], [0, 0, 1, 1], [], []>} : vector<8x16xf32>, vector<16x16xf32>, vector<8x16xf32> -> vector<8x16xf32>
    %386 = arith.addf %383, %385 : vector<8x16xf32>
    %387 = math.tanh %386 : vector<8x16xf32>
    %388 = arith.mulf %374, %353 : vector<8x16xf32>
    %cst_119 = arith.constant 1.000000e+00 : f32
    %389 = vector.broadcast %cst_119 : f32 to vector<8x16xf32>
    %390 = arith.subf %389, %374 : vector<8x16xf32>
    %391 = arith.mulf %390, %387 : vector<8x16xf32>
    %392 = arith.addf %388, %391 : vector<8x16xf32>
    %cst_120 = arith.constant dense<0.000000e+00> : vector<8x2xf32>
    %393 = tpu.matmul %392, %237, %cst_120 {dimension_numbers = #tpu.dot_dimension_numbers<[1], [0], [0], [1], [0, 0, 1, 1], [], []>} : vector<8x16xf32>, vector<16x2xf32>, vector<8x2xf32> -> vector<8x2xf32>
    %394 = vector.broadcast %238 : vector<1x2xf32> to vector<8x2xf32>
    %395 = arith.addf %393, %394 : vector<8x2xf32>
    %396 = tpu.concatenate %278, %317, %356, %395 in 1 : vector<8x2xf32>, vector<8x2xf32>, vector<8x2xf32>, vector<8x2xf32> -> vector<8x8xf32>
    %c0_121 = arith.constant 0 : index
    %c0_122 = arith.constant 0 : index
    %c0_123 = arith.constant 0 : index
    %397 = vector.load %arg21[%c0_121, %c0_122, %c0_123] : memref<1x8x8xf32, #tpu.memory_space<vmem>>, vector<1x8x8xf32>
    %398 = vector.shape_cast %397 : vector<1x8x8xf32> to vector<8x8xf32>
    %399 = vector.shape_cast %396 : vector<8x8xf32> to vector<1x8x8xf32>
    tpu.vector_store %arg21[%c0_121, %c0_122, %c0_123], %399 {strides = array<i32>} : memref<1x8x8xf32, #tpu.memory_space<vmem>>, vector<1x8x8xf32>,
    return
  }
  func.func @transform_0(%arg0: i32) -> (i32, i32) {
    %c0_i32 = arith.constant 0 : i32
    %c0_i32_0 = arith.constant 0 : i32
    %c0_i32_1 = arith.constant 0 : i32
    return %c0_i32, %c0_i32_0 : i32, i32
  }
  func.func @transform_1(%arg0: i32) -> (i32, i32, i32) {
    %c0_i32 = arith.constant 0 : i32
    %c0_i32_0 = arith.constant 0 : i32
    %c0_i32_1 = arith.constant 0 : i32
    return %arg0, %c0_i32, %c0_i32_0 : i32, i32, i32
  }
  func.func @transform_2(%arg0: i32) -> (i32, i32, i32) {
    %c0_i32 = arith.constant 0 : i32
    %c0_i32_0 = arith.constant 0 : i32
    %c0_i32_1 = arith.constant 0 : i32
    return %arg0, %c0_i32, %c0_i32_0 : i32, i32, i32
  }
  func.func @transform_3(%arg0: i32) -> (i32, i32, i32) {
    %c0_i32 = arith.constant 0 : i32
    %c0_i32_0 = arith.constant 0 : i32
    %c0_i32_1 = arith.constant 0 : i32
    return %arg0, %c0_i32, %c0_i32_0 : i32, i32, i32
  }
  func.func @transform_4(%arg0: i32) -> (i32, i32) {
    %c0_i32 = arith.constant 0 : i32
    %c0_i32_0 = arith.constant 0 : i32
    %c0_i32_1 = arith.constant 0 : i32
    return %c0_i32, %c0_i32_0 : i32, i32
  }
  func.func @transform_5(%arg0: i32) -> (i32, i32) {
    %c0_i32 = arith.constant 0 : i32
    %c0_i32_0 = arith.constant 0 : i32
    %c0_i32_1 = arith.constant 0 : i32
    return %c0_i32, %c0_i32_0 : i32, i32
  }
  func.func @transform_6(%arg0: i32) -> (i32, i32) {
    %c0_i32 = arith.constant 0 : i32
    %c0_i32_0 = arith.constant 0 : i32
    %c0_i32_1 = arith.constant 0 : i32
    return %c0_i32, %c0_i32_0 : i32, i32
  }
  func.func @transform_7(%arg0: i32) -> (i32, i32) {
    %c0_i32 = arith.constant 0 : i32
    %c0_i32_0 = arith.constant 0 : i32
    %c0_i32_1 = arith.constant 0 : i32
    return %c0_i32, %c0_i32_0 : i32, i32
  }
  func.func @transform_8(%arg0: i32) -> (i32, i32) {
    %c0_i32 = arith.constant 0 : i32
    %c0_i32_0 = arith.constant 0 : i32
    %c0_i32_1 = arith.constant 0 : i32
    return %c0_i32, %c0_i32_0 : i32, i32
  }
  func.func @transform_9(%arg0: i32) -> (i32, i32) {
    %c0_i32 = arith.constant 0 : i32
    %c0_i32_0 = arith.constant 0 : i32
    %c0_i32_1 = arith.constant 0 : i32
    return %c0_i32, %c0_i32_0 : i32, i32
  }
  func.func @transform_10(%arg0: i32) -> (i32, i32) {
    %c0_i32 = arith.constant 0 : i32
    %c0_i32_0 = arith.constant 0 : i32
    %c0_i32_1 = arith.constant 0 : i32
    return %c0_i32, %c0_i32_0 : i32, i32
  }
  func.func @transform_11(%arg0: i32) -> (i32, i32) {
    %c0_i32 = arith.constant 0 : i32
    %c0_i32_0 = arith.constant 0 : i32
    %c0_i32_1 = arith.constant 0 : i32
    return %c0_i32, %c0_i32_0 : i32, i32
  }
  func.func @transform_12(%arg0: i32) -> (i32, i32) {
    %c0_i32 = arith.constant 0 : i32
    %c0_i32_0 = arith.constant 0 : i32
    %c0_i32_1 = arith.constant 0 : i32
    return %c0_i32, %c0_i32_0 : i32, i32
  }
  func.func @transform_13(%arg0: i32) -> (i32, i32) {
    %c0_i32 = arith.constant 0 : i32
    %c0_i32_0 = arith.constant 0 : i32
    %c0_i32_1 = arith.constant 0 : i32
    return %c0_i32, %c0_i32_0 : i32, i32
  }
  func.func @transform_14(%arg0: i32) -> (i32, i32) {
    %c0_i32 = arith.constant 0 : i32
    %c0_i32_0 = arith.constant 0 : i32
    %c0_i32_1 = arith.constant 0 : i32
    return %c0_i32, %c0_i32_0 : i32, i32
  }
  func.func @transform_15(%arg0: i32) -> (i32, i32) {
    %c0_i32 = arith.constant 0 : i32
    %c0_i32_0 = arith.constant 0 : i32
    %c0_i32_1 = arith.constant 0 : i32
    return %c0_i32, %c0_i32_0 : i32, i32
  }
  func.func @transform_16(%arg0: i32) -> (i32, i32) {
    %c0_i32 = arith.constant 0 : i32
    %c0_i32_0 = arith.constant 0 : i32
    %c0_i32_1 = arith.constant 0 : i32
    return %c0_i32, %c0_i32_0 : i32, i32
  }
  func.func @transform_17(%arg0: i32) -> (i32, i32) {
    %c0_i32 = arith.constant 0 : i32
    %c0_i32_0 = arith.constant 0 : i32
    %c0_i32_1 = arith.constant 0 : i32
    return %c0_i32, %c0_i32_0 : i32, i32
  }
  func.func @transform_18(%arg0: i32) -> (i32, i32) {
    %c0_i32 = arith.constant 0 : i32
    %c0_i32_0 = arith.constant 0 : i32
    %c0_i32_1 = arith.constant 0 : i32
    return %c0_i32, %c0_i32_0 : i32, i32
  }
  func.func @transform_19(%arg0: i32) -> (i32, i32) {
    %c0_i32 = arith.constant 0 : i32
    %c0_i32_0 = arith.constant 0 : i32
    %c0_i32_1 = arith.constant 0 : i32
    return %c0_i32, %c0_i32_0 : i32, i32
  }
  func.func @transform_20(%arg0: i32) -> (i32, i32, i32) {
    %c0_i32 = arith.constant 0 : i32
    %c0_i32_0 = arith.constant 0 : i32
    %c0_i32_1 = arith.constant 0 : i32
    return %arg0, %c0_i32, %c0_i32_0 : i32, i32, i32
  }
}

</mosaic_0001>

<llo_original>
// kernel: stnscn_forward.1
$region0: #{stnscn_forward.1}
  #allocation0 [shape = 'u32[]', space=smem, size = 0x4, offset = 0x4, fixed_abs, tag = 'smem constant byte address 0x4 - core index']
  #allocation1 [shape = 'u32[144,128]{1,0:T(1,128)}', space=vmem, size = 0x12000, scoped, tag = 'internal scratch']
  %s0 = inlined_call_operand.vmem [shape: f32[8,8], index: 0, kind: input, shape index: {}]
  %s1 = inlined_call_operand.vmem [shape: f32[2,8,8], index: 1, kind: input, shape index: {}]
  %s2 = inlined_call_operand.vmem [shape: f32[2,4,4], index: 2, kind: input, shape index: {}]
  %s3 = inlined_call_operand.vmem [shape: f32[2,4,4], index: 3, kind: input, shape index: {}]
  %s4 = inlined_call_operand.vmem [shape: f32[2,48], index: 4, kind: input, shape index: {}]
  %s5 = inlined_call_operand.hbm [shape: f32[4,48], index: 5, kind: input, shape index: {}]
  %s6 = inlined_call_operand.vmem [shape: f32[16,32], index: 6, kind: input, shape index: {}]
  %s7 = inlined_call_operand.vmem [shape: f32[16,16], index: 7, kind: input, shape index: {}]
  %s8 = inlined_call_operand.hbm [shape: f32[1,48], index: 8, kind: input, shape index: {}]
  %s9 = inlined_call_operand.vmem [shape: f32[4,16], index: 9, kind: input, shape index: {}]
  %s10 = inlined_call_operand.hbm [shape: f32[4,16], index: 10, kind: input, shape index: {}]
  %s11 = inlined_call_operand.vmem [shape: f32[16,16], index: 11, kind: input, shape index: {}]
  %s12 = inlined_call_operand.vmem [shape: f32[16,16], index: 12, kind: input, shape index: {}]
  %s13 = inlined_call_operand.hbm [shape: f32[2,48], index: 13, kind: input, shape index: {}]
  %s14 = inlined_call_operand.hbm [shape: f32[4,48], index: 14, kind: input, shape index: {}]
  %s15 = inlined_call_operand.vmem [shape: f32[16,32], index: 15, kind: input, shape index: {}]
  %s16 = inlined_call_operand.hbm [shape: f32[16,16], index: 16, kind: input, shape index: {}]
  %s17 = inlined_call_operand.hbm [shape: f32[1,48], index: 17, kind: input, shape index: {}]
  %s18 = inlined_call_operand.vmem [shape: f32[16,2], index: 18, kind: input, shape index: {}]
  %s19 = inlined_call_operand.hbm [shape: f32[1,2], index: 19, kind: input, shape index: {}]
  %s20 = inlined_call_operand.vmem [shape: f32[2,8,8], index: 20, kind: output, shape index: {}]
  %s21 = sld [smem:[#allocation0]]
  $region145: #{stnscn_forward.1} parent=0
    _
  %s23 = ssub.s32 1, %s21
  %s24 = scalar_select 0, %s23, %s21
  $region1: #{stnscn_forward.1} parent=0
    #allocation2 [shape = 'u8[2048]{0}', space=vmem, size = 0x800, scoped, tag = 'input window, operand 5, single buffered']
    #allocation3 [shape = 's32[2]{0}', space=sflag, size = 0x8, scoped, tag = 'scoped memory for stnscn_forward.1']
    #allocation4 [shape = 'u8[512]{0}', space=vmem, size = 0x400, scoped, tag = 'input window, operand 8, single buffered']
    #allocation5 [shape = 's32[1]{0}', space=sflag, size = 0x4, scoped, tag = 'scoped memory for stnscn_forward.1']
    #allocation6 [shape = 'u8[2048]{0}', space=vmem, size = 0x800, scoped, tag = 'input window, operand 10, single buffered']
    #allocation7 [shape = 'u8[1024]{0}', space=vmem, size = 0x400, scoped, tag = 'input window, operand 13, single buffered']
    #allocation8 [shape = 's32[1]{0}', space=sflag, size = 0x4, scoped, tag = 'scoped memory for stnscn_forward.1']
    #allocation9 [shape = 'u8[2048]{0}', space=vmem, size = 0x800, scoped, tag = 'input window, operand 14, single buffered']
    #allocation10 [shape = 'u8[8192]{0}', space=vmem, size = 0x2000, scoped, tag = 'input window, operand 16, single buffered']
    #allocation11 [shape = 's32[1]{0}', space=sflag, size = 0x4, scoped, tag = 'scoped memory for stnscn_forward.1']
    #allocation12 [shape = 'u8[512]{0}', space=vmem, size = 0x400, scoped, tag = 'input window, operand 17, single buffered']
    #allocation13 [shape = 'u8[512]{0}', space=vmem, size = 0x400, scoped, tag = 'input window, operand 19, single buffered']
    #allocation14 [shape = 's32[1]{0}', space=sflag, size = 0x4, scoped, tag = 'scoped memory for stnscn_forward.1']
    %25 = vsyncpa [#allocation3], 0
    %26 = vsyncpa [#allocation5], 0
    %27 = vsyncpa [#allocation8], 0
    %28 = vsyncpa [#allocation11], 0
    %29 = vsyncpa [#allocation14], 0
    loop: start=0, step=1, limit=4
    $region2: #{stnscn_forward.1} parent=1 // loop_pre_header
      _
    $region3: #{stnscn_forward.1} parent=1 // loop_header
      %s31 = sphi 0, %s35
      %p32 = scmp.ge.s32.totalorder %s31, 4
      %s39 = sphi 0, %s39
      %s41 = sphi 0, %s39
      %s42 = sphi 0, %s41
      %s56 = sphi 0, %s42
      %s62 = sphi 0, %s64
      %s65 = sphi 0, %s62
      %s66 = sphi 0, %s65
      %s82 = sphi 0, %s66
      %s88 = sphi 0, %s90
      %s91 = sphi 0, %s88
      %s92 = sphi 0, %s91
      %s108 = sphi 0, %s92
      %s114 = sphi 0, %s116
      %s117 = sphi 0, %s114
      %s118 = sphi 0, %s117
      %s134 = sphi 0, %s118
      %s138 = sphi 0, %s138
      %s140 = sphi 0, %s138
      %s141 = sphi 0, %s140
      %s155 = sphi 0, %s141
      %s159 = sphi 0, %s159
      %s161 = sphi 0, %s159
      %s162 = sphi 0, %s161
      %s176 = sphi 0, %s162
      %s180 = sphi 0, %s180
      %s182 = sphi 0, %s180
      %s183 = sphi 0, %s182
      %s197 = sphi 0, %s183
      %s201 = sphi 0, %s201
      %s203 = sphi 0, %s201
      %s204 = sphi 0, %s203
      %s218 = sphi 0, %s204
      %s222 = sphi 0, %s222
      %s224 = sphi 0, %s222
      %s225 = sphi 0, %s224
      %s239 = sphi 0, %s225
      %s243 = sphi 0, %s243
      %s245 = sphi 0, %s243
      %s246 = sphi 0, %s245
      %s260 = sphi 0, %s246
      %s264 = sphi 0, %s264
      %s266 = sphi 0, %s264
      %s267 = sphi 0, %s266
      %s281 = sphi 0, %s267
      %s285 = sphi 0, %s285
      %s287 = sphi 0, %s285
      %s288 = sphi 0, %s287
      %s302 = sphi 0, %s288
      %s306 = sphi 0, %s306
      %s308 = sphi 0, %s306
      %s309 = sphi 0, %s308
      %s323 = sphi 0, %s309
      %s327 = sphi 0, %s327
      %s329 = sphi 0, %s327
      %s330 = sphi 0, %s329
      %s344 = sphi 0, %s330
      %s348 = sphi 0, %s348
      %s350 = sphi 0, %s348
      %s351 = sphi 0, %s350
      %s365 = sphi 0, %s351
      %s369 = sphi 0, %s369
      %s371 = sphi 0, %s369
      %s372 = sphi 0, %s371
      %s386 = sphi 0, %s372
      %s390 = sphi 0, %s390
      %s392 = sphi 0, %s390
      %s393 = sphi 0, %s392
      %s407 = sphi 0, %s393
      %s411 = sphi 0, %s411
      %s413 = sphi 0, %s411
      %s414 = sphi 0, %s413
      %s428 = sphi 0, %s414
      %s432 = sphi 0, %s432
      %s434 = sphi 0, %s432
      %s435 = sphi 0, %s434
      %s449 = sphi 0, %s435
      %s453 = sphi 0, %s453
      %s455 = sphi 0, %s453
      %s456 = sphi 0, %s455
      %s470 = sphi 0, %s456
      %s476 = sphi 0, %s478
      %s479 = sphi 0, %s476
      %s480 = sphi 0, %s479
      %s496 = sphi 0, %s480
    $region4: #{stnscn_forward.1} parent=1 // loop_header_branch
      %34 = sbr.rel (%p32) target = $region8
    $region5: #{stnscn_forward.1} parent=1 // loop_body
      %s36 = ssub.s32 %s31, 1
      %s37 = ssub.s32 %s31, 2
      %s38 = sadd.s32 %s31, 1
      %s40 = sadd.s32 %s39, 1
      %p43 = scmp.eq.s32.totalorder %s31, 1
      %p44 = scmp.ne.s32.totalorder %s39, %s41
      %p45 = scmp.eq.s32.totalorder %s31, 0
      %p46 = por %p44, %p45
      %p47 = scmp.ne.s32.totalorder %s39, %s41
      %p48 = scmp.eq.s32.totalorder %s36, 1
      %p49 = por %p47, %p48
      %p50 = scmp.ne.s32.totalorder %s41, %s42
      %p51 = scmp.eq.s32.totalorder %s36, 0
      %p52 = por %p50, %p51
      %p53 = scmp.ne.s32.totalorder %s41, %s42
      %p54 = scmp.eq.s32.totalorder %s37, 1
      %p55 = por %p53, %p54
      %p57 = scmp.ne.s32.totalorder %s42, %s56
      %p58 = scmp.eq.s32.totalorder %s37, 0
      %p59 = por %p57, %p58
      %s60 = ssub.s32 %s31, %s38
      %p61 = scmp.eq.s32.totalorder %s60, 0
      %s63 = sadd.s32 %s62, 1
      %s64 = scalar_select %p61, %s62, %s63
      %p67 = pneg %p61
      %p68 = scmp.eq.s32.totalorder %s31, 1
      %p69 = por %p67, %p68
      %p70 = scmp.ne.s32.totalorder %s62, %s65
      %p71 = scmp.eq.s32.totalorder %s31, 0
      %p72 = por %p70, %p71
      %p73 = scmp.ne.s32.totalorder %s62, %s65
      %p74 = scmp.eq.s32.totalorder %s36, 1
      %p75 = por %p73, %p74
      %p76 = scmp.ne.s32.totalorder %s65, %s66
      %p77 = scmp.eq.s32.totalorder %s36, 0
      %p78 = por %p76, %p77
      %p79 = scmp.ne.s32.totalorder %s65, %s66
      %p80 = scmp.eq.s32.totalorder %s37, 1
      %p81 = por %p79, %p80
      %p83 = scmp.ne.s32.totalorder %s66, %s82
      %p84 = scmp.eq.s32.totalorder %s37, 0
      %p85 = por %p83, %p84
      %s86 = ssub.s32 %s31, %s38
      %p87 = scmp.eq.s32.totalorder %s86, 0
      %s89 = sadd.s32 %s88, 1
      %s90 = scalar_select %p87, %s88, %s89
      %p93 = pneg %p87
      %p94 = scmp.eq.s32.totalorder %s31, 1
      %p95 = por %p93, %p94
      %p96 = scmp.ne.s32.totalorder %s88, %s91
      %p97 = scmp.eq.s32.totalorder %s31, 0
      %p98 = por %p96, %p97
      %p99 = scmp.ne.s32.totalorder %s88, %s91
      %p100 = scmp.eq.s32.totalorder %s36, 1
      %p101 = por %p99, %p100
      %p102 = scmp.ne.s32.totalorder %s91, %s92
      %p103 = scmp.eq.s32.totalorder %s36, 0
      %p104 = por %p102, %p103
      %p105 = scmp.ne.s32.totalorder %s91, %s92
      %p106 = scmp.eq.s32.totalorder %s37, 1
      %p107 = por %p105, %p106
      %p109 = scmp.ne.s32.totalorder %s92, %s108
      %p110 = scmp.eq.s32.totalorder %s37, 0
      %p111 = por %p109, %p110
      %s112 = ssub.s32 %s31, %s38
      %p113 = scmp.eq.s32.totalorder %s112, 0
      %s115 = sadd.s32 %s114, 1
      %s116 = scalar_select %p113, %s114, %s115
      %p119 = pneg %p113
      %p120 = scmp.eq.s32.totalorder %s31, 1
      %p121 = por %p119, %p120
      %p122 = scmp.ne.s32.totalorder %s114, %s117
      %p123 = scmp.eq.s32.totalorder %s31, 0
      %p124 = por %p122, %p123
      %p125 = scmp.ne.s32.totalorder %s114, %s117
      %p126 = scmp.eq.s32.totalorder %s36, 1
      %p127 = por %p125, %p126
      %p128 = scmp.ne.s32.totalorder %s117, %s118
      %p129 = scmp.eq.s32.totalorder %s36, 0
      %p130 = por %p128, %p129
      %p131 = scmp.ne.s32.totalorder %s117, %s118
      %p132 = scmp.eq.s32.totalorder %s37, 1
      %p133 = por %p131, %p132
      %p135 = scmp.ne.s32.totalorder %s118, %s134
      %p136 = scmp.eq.s32.totalorder %s37, 0
      %p137 = por %p135, %p136
      %s139 = sadd.s32 %s138, 1
      %p142 = scmp.eq.s32.totalorder %s31, 1
      %p143 = scmp.ne.s32.totalorder %s138, %s140
      %p144 = scmp.eq.s32.totalorder %s31, 0
      %p145 = por %p143, %p144
      %p146 = scmp.ne.s32.totalorder %s138, %s140
      %p147 = scmp.eq.s32.totalorder %s36, 1
      %p148 = por %p146, %p147
      %p149 = scmp.ne.s32.totalorder %s140, %s141
      %p150 = scmp.eq.s32.totalorder %s36, 0
      %p151 = por %p149, %p150
      %p152 = scmp.ne.s32.totalorder %s140, %s141
      %p153 = scmp.eq.s32.totalorder %s37, 1
      %p154 = por %p152, %p153
      %p156 = scmp.ne.s32.totalorder %s141, %s155
      %p157 = scmp.eq.s32.totalorder %s37, 0
      %p158 = por %p156, %p157
      %s160 = sadd.s32 %s159, 1
      %p163 = scmp.eq.s32.totalorder %s31, 1
      %p164 = scmp.ne.s32.totalorder %s159, %s161
      %p165 = scmp.eq.s32.totalorder %s31, 0
      %p166 = por %p164, %p165
      %p167 = scmp.ne.s32.totalorder %s159, %s161
      %p168 = scmp.eq.s32.totalorder %s36, 1
      %p169 = por %p167, %p168
      %p170 = scmp.ne.s32.totalorder %s161, %s162
      %p171 = scmp.eq.s32.totalorder %s36, 0
      %p172 = por %p170, %p171
      %p173 = scmp.ne.s32.totalorder %s161, %s162
      %p174 = scmp.eq.s32.totalorder %s37, 1
      %p175 = por %p173, %p174
      %p177 = scmp.ne.s32.totalorder %s162, %s176
      %p178 = scmp.eq.s32.totalorder %s37, 0
      %p179 = por %p177, %p178
      %s181 = sadd.s32 %s180, 1
      %p184 = scmp.eq.s32.totalorder %s31, 1
      %p185 = scmp.ne.s32.totalorder %s180, %s182
      %p186 = scmp.eq.s32.totalorder %s31, 0
      %p187 = por %p185, %p186
      %p188 = scmp.ne.s32.totalorder %s180, %s182
      %p189 = scmp.eq.s32.totalorder %s36, 1
      %p190 = por %p188, %p189
      %p191 = scmp.ne.s32.totalorder %s182, %s183
      %p192 = scmp.eq.s32.totalorder %s36, 0
      %p193 = por %p191, %p192
      %p194 = scmp.ne.s32.totalorder %s182, %s183
      %p195 = scmp.eq.s32.totalorder %s37, 1
      %p196 = por %p194, %p195
      %p198 = scmp.ne.s32.totalorder %s183, %s197
      %p199 = scmp.eq.s32.totalorder %s37, 0
      %p200 = por %p198, %p199
      %s202 = sadd.s32 %s201, 1
      %p205 = scmp.eq.s32.totalorder %s31, 1
      %p206 = scmp.ne.s32.totalorder %s201, %s203
      %p207 = scmp.eq.s32.totalorder %s31, 0
      %p208 = por %p206, %p207
      %p209 = scmp.ne.s32.totalorder %s201, %s203
      %p210 = scmp.eq.s32.totalorder %s36, 1
      %p211 = por %p209, %p210
      %p212 = scmp.ne.s32.totalorder %s203, %s204
      %p213 = scmp.eq.s32.totalorder %s36, 0
      %p214 = por %p212, %p213
      %p215 = scmp.ne.s32.totalorder %s203, %s204
      %p216 = scmp.eq.s32.totalorder %s37, 1
      %p217 = por %p215, %p216
      %p219 = scmp.ne.s32.totalorder %s204, %s218
      %p220 = scmp.eq.s32.totalorder %s37, 0
      %p221 = por %p219, %p220
      %s223 = sadd.s32 %s222, 1
      %p226 = scmp.eq.s32.totalorder %s31, 1
      %p227 = scmp.ne.s32.totalorder %s222, %s224
      %p228 = scmp.eq.s32.totalorder %s31, 0
      %p229 = por %p227, %p228
      %p230 = scmp.ne.s32.totalorder %s222, %s224
      %p231 = scmp.eq.s32.totalorder %s36, 1
      %p232 = por %p230, %p231
      %p233 = scmp.ne.s32.totalorder %s224, %s225
      %p234 = scmp.eq.s32.totalorder %s36, 0
      %p235 = por %p233, %p234
      %p236 = scmp.ne.s32.totalorder %s224, %s225
      %p237 = scmp.eq.s32.totalorder %s37, 1
      %p238 = por %p236, %p237
      %p240 = scmp.ne.s32.totalorder %s225, %s239
      %p241 = scmp.eq.s32.totalorder %s37, 0
      %p242 = por %p240, %p241
      %s244 = sadd.s32 %s243, 1
      %p247 = scmp.eq.s32.totalorder %s31, 1
      %p248 = scmp.ne.s32.totalorder %s243, %s245
      %p249 = scmp.eq.s32.totalorder %s31, 0
      %p250 = por %p248, %p249
      %p251 = scmp.ne.s32.totalorder %s243, %s245
      %p252 = scmp.eq.s32.totalorder %s36, 1
      %p253 = por %p251, %p252
      %p254 = scmp.ne.s32.totalorder %s245, %s246
      %p255 = scmp.eq.s32.totalorder %s36, 0
      %p256 = por %p254, %p255
      %p257 = scmp.ne.s32.totalorder %s245, %s246
      %p258 = scmp.eq.s32.totalorder %s37, 1
      %p259 = por %p257, %p258
      %p261 = scmp.ne.s32.totalorder %s246, %s260
      %p262 = scmp.eq.s32.totalorder %s37, 0
      %p263 = por %p261, %p262
      %s265 = sadd.s32 %s264, 1
      %p268 = scmp.eq.s32.totalorder %s31, 1
      %p269 = scmp.ne.s32.totalorder %s264, %s266
      %p270 = scmp.eq.s32.totalorder %s31, 0
      %p271 = por %p269, %p270
      %p272 = scmp.ne.s32.totalorder %s264, %s266
      %p273 = scmp.eq.s32.totalorder %s36, 1
      %p274 = por %p272, %p273
      %p275 = scmp.ne.s32.totalorder %s266, %s267
      %p276 = scmp.eq.s32.totalorder %s36, 0
      %p277 = por %p275, %p276
      %p278 = scmp.ne.s32.totalorder %s266, %s267
      %p279 = scmp.eq.s32.totalorder %s37, 1
      %p280 = por %p278, %p279
      %p282 = scmp.ne.s32.totalorder %s267, %s281
      %p283 = scmp.eq.s32.totalorder %s37, 0
      %p284 = por %p282, %p283
      %s286 = sadd.s32 %s285, 1
      %p289 = scmp.eq.s32.totalorder %s31, 1
      %p290 = scmp.ne.s32.totalorder %s285, %s287
      %p291 = scmp.eq.s32.totalorder %s31, 0
      %p292 = por %p290, %p291
      %p293 = scmp.ne.s32.totalorder %s285, %s287
      %p294 = scmp.eq.s32.totalorder %s36, 1
      %p295 = por %p293, %p294
      %p296 = scmp.ne.s32.totalorder %s287, %s288
      %p297 = scmp.eq.s32.totalorder %s36, 0
      %p298 = por %p296, %p297
      %p299 = scmp.ne.s32.totalorder %s287, %s288
      %p300 = scmp.eq.s32.totalorder %s37, 1
      %p301 = por %p299, %p300
      %p303 = scmp.ne.s32.totalorder %s288, %s302
      %p304 = scmp.eq.s32.totalorder %s37, 0
      %p305 = por %p303, %p304
      %s307 = sadd.s32 %s306, 1
      %p310 = scmp.eq.s32.totalorder %s31, 1
      %p311 = scmp.ne.s32.totalorder %s306, %s308
      %p312 = scmp.eq.s32.totalorder %s31, 0
      %p313 = por %p311, %p312
      %p314 = scmp.ne.s32.totalorder %s306, %s308
      %p315 = scmp.eq.s32.totalorder %s36, 1
      %p316 = por %p314, %p315
      %p317 = scmp.ne.s32.totalorder %s308, %s309
      %p318 = scmp.eq.s32.totalorder %s36, 0
      %p319 = por %p317, %p318
      %p320 = scmp.ne.s32.totalorder %s308, %s309
      %p321 = scmp.eq.s32.totalorder %s37, 1
      %p322 = por %p320, %p321
      %p324 = scmp.ne.s32.totalorder %s309, %s323
      %p325 = scmp.eq.s32.totalorder %s37, 0
      %p326 = por %p324, %p325
      %s328 = sadd.s32 %s327, 1
      %p331 = scmp.eq.s32.totalorder %s31, 1
      %p332 = scmp.ne.s32.totalorder %s327, %s329
      %p333 = scmp.eq.s32.totalorder %s31, 0
      %p334 = por %p332, %p333
      %p335 = scmp.ne.s32.totalorder %s327, %s329
      %p336 = scmp.eq.s32.totalorder %s36, 1
      %p337 = por %p335, %p336
      %p338 = scmp.ne.s32.totalorder %s329, %s330
      %p339 = scmp.eq.s32.totalorder %s36, 0
      %p340 = por %p338, %p339
      %p341 = scmp.ne.s32.totalorder %s329, %s330
      %p342 = scmp.eq.s32.totalorder %s37, 1
      %p343 = por %p341, %p342
      %p345 = scmp.ne.s32.totalorder %s330, %s344
      %p346 = scmp.eq.s32.totalorder %s37, 0
      %p347 = por %p345, %p346
      %s349 = sadd.s32 %s348, 1
      %p352 = scmp.eq.s32.totalorder %s31, 1
      %p353 = scmp.ne.s32.totalorder %s348, %s350
      %p354 = scmp.eq.s32.totalorder %s31, 0
      %p355 = por %p353, %p354
      %p356 = scmp.ne.s32.totalorder %s348, %s350
      %p357 = scmp.eq.s32.totalorder %s36, 1
      %p358 = por %p356, %p357
      %p359 = scmp.ne.s32.totalorder %s350, %s351
      %p360 = scmp.eq.s32.totalorder %s36, 0
      %p361 = por %p359, %p360
      %p362 = scmp.ne.s32.totalorder %s350, %s351
      %p363 = scmp.eq.s32.totalorder %s37, 1
      %p364 = por %p362, %p363
      %p366 = scmp.ne.s32.totalorder %s351, %s365
      %p367 = scmp.eq.s32.totalorder %s37, 0
      %p368 = por %p366, %p367
      %s370 = sadd.s32 %s369, 1
      %p373 = scmp.eq.s32.totalorder %s31, 1
      %p374 = scmp.ne.s32.totalorder %s369, %s371
      %p375 = scmp.eq.s32.totalorder %s31, 0
      %p376 = por %p374, %p375
      %p377 = scmp.ne.s32.totalorder %s369, %s371
      %p378 = scmp.eq.s32.totalorder %s36, 1
      %p379 = por %p377, %p378
      %p380 = scmp.ne.s32.totalorder %s371, %s372
      %p381 = scmp.eq.s32.totalorder %s36, 0
      %p382 = por %p380, %p381
      %p383 = scmp.ne.s32.totalorder %s371, %s372
      %p384 = scmp.eq.s32.totalorder %s37, 1
      %p385 = por %p383, %p384
      %p387 = scmp.ne.s32.totalorder %s372, %s386
      %p388 = scmp.eq.s32.totalorder %s37, 0
      %p389 = por %p387, %p388
      %s391 = sadd.s32 %s390, 1
      %p394 = scmp.eq.s32.totalorder %s31, 1
      %p395 = scmp.ne.s32.totalorder %s390, %s392
      %p396 = scmp.eq.s32.totalorder %s31, 0
      %p397 = por %p395, %p396
      %p398 = scmp.ne.s32.totalorder %s390, %s392
      %p399 = scmp.eq.s32.totalorder %s36, 1
      %p400 = por %p398, %p399
      %p401 = scmp.ne.s32.totalorder %s392, %s393
      %p402 = scmp.eq.s32.totalorder %s36, 0
      %p403 = por %p401, %p402
      %p404 = scmp.ne.s32.totalorder %s392, %s393
      %p405 = scmp.eq.s32.totalorder %s37, 1
      %p406 = por %p404, %p405
      %p408 = scmp.ne.s32.totalorder %s393, %s407
      %p409 = scmp.eq.s32.totalorder %s37, 0
      %p410 = por %p408, %p409
      %s412 = sadd.s32 %s411, 1
      %p415 = scmp.eq.s32.totalorder %s31, 1
      %p416 = scmp.ne.s32.totalorder %s411, %s413
      %p417 = scmp.eq.s32.totalorder %s31, 0
      %p418 = por %p416, %p417
      %p419 = scmp.ne.s32.totalorder %s411, %s413
      %p420 = scmp.eq.s32.totalorder %s36, 1
      %p421 = por %p419, %p420
      %p422 = scmp.ne.s32.totalorder %s413, %s414
      %p423 = scmp.eq.s32.totalorder %s36, 0
      %p424 = por %p422, %p423
      %p425 = scmp.ne.s32.totalorder %s413, %s414
      %p426 = scmp.eq.s32.totalorder %s37, 1
      %p427 = por %p425, %p426
      %p429 = scmp.ne.s32.totalorder %s414, %s428
      %p430 = scmp.eq.s32.totalorder %s37, 0
      %p431 = por %p429, %p430
      %s433 = sadd.s32 %s432, 1
      %p436 = scmp.eq.s32.totalorder %s31, 1
      %p437 = scmp.ne.s32.totalorder %s432, %s434
      %p438 = scmp.eq.s32.totalorder %s31, 0
      %p439 = por %p437, %p438
      %p440 = scmp.ne.s32.totalorder %s432, %s434
      %p441 = scmp.eq.s32.totalorder %s36, 1
      %p442 = por %p440, %p441
      %p443 = scmp.ne.s32.totalorder %s434, %s435
      %p444 = scmp.eq.s32.totalorder %s36, 0
      %p445 = por %p443, %p444
      %p446 = scmp.ne.s32.totalorder %s434, %s435
      %p447 = scmp.eq.s32.totalorder %s37, 1
      %p448 = por %p446, %p447
      %p450 = scmp.ne.s32.totalorder %s435, %s449
      %p451 = scmp.eq.s32.totalorder %s37, 0
      %p452 = por %p450, %p451
      %s454 = sadd.s32 %s453, 1
      %p457 = scmp.eq.s32.totalorder %s31, 1
      %p458 = scmp.ne.s32.totalorder %s453, %s455
      %p459 = scmp.eq.s32.totalorder %s31, 0
      %p460 = por %p458, %p459
      %p461 = scmp.ne.s32.totalorder %s453, %s455
      %p462 = scmp.eq.s32.totalorder %s36, 1
      %p463 = por %p461, %p462
      %p464 = scmp.ne.s32.totalorder %s455, %s456
      %p465 = scmp.eq.s32.totalorder %s36, 0
      %p466 = por %p464, %p465
      %p467 = scmp.ne.s32.totalorder %s455, %s456
      %p468 = scmp.eq.s32.totalorder %s37, 1
      %p469 = por %p467, %p468
      %p471 = scmp.ne.s32.totalorder %s456, %s470
      %p472 = scmp.eq.s32.totalorder %s37, 0
      %p473 = por %p471, %p472
      %s474 = ssub.s32 %s31, %s38
      %p475 = scmp.eq.s32.totalorder %s474, 0
      %s477 = sadd.s32 %s476, 1
      %s478 = scalar_select %p475, %s476, %s477
      %p481 = pneg %p475
      %p482 = scmp.eq.s32.totalorder %s31, 1
      %p483 = por %p481, %p482
      %p484 = scmp.ne.s32.totalorder %s476, %s479
      %p485 = scmp.eq.s32.totalorder %s31, 0
      %p486 = por %p484, %p485
      %p487 = scmp.ne.s32.totalorder %s476, %s479
      %p488 = scmp.eq.s32.totalorder %s36, 1
      %p489 = por %p487, %p488
      %p490 = scmp.ne.s32.totalorder %s479, %s480
      %p491 = scmp.eq.s32.totalorder %s36, 0
      %p492 = por %p490, %p491
      %p493 = scmp.ne.s32.totalorder %s479, %s480
      %p494 = scmp.eq.s32.totalorder %s37, 1
      %p495 = por %p493, %p494
      %p497 = scmp.ne.s32.totalorder %s480, %s496
      %p498 = scmp.eq.s32.totalorder %s37, 0
      %p499 = por %p497, %p498
      %p500 = scmp.le.s32.totalorder 1, %s31
      %p501 = scmp.lt.s32.totalorder %s31, 3
      %p502 = pnand %p500, %p501
      %p503 = pneg %p502
      // Predicated region
      $region9: #{stnscn_forward.1} parent=5 // pred_check
        _
      $region10: #{stnscn_forward.1} parent=5 // pred_check_branch
        %505 = sbr.rel (%p502) target = $region12
      $region11: #{stnscn_forward.1} parent=5 // pred_region
        %s506 = ssub.s32 %s31, 1
        // Predicated region
        $region13: #{stnscn_forward.1} parent=11 // pred_check
          %p507 = pneg %p52
        $region14: #{stnscn_forward.1} parent=11 // pred_check_branch
          %509 = sbr.rel (%p507) target = $region16
        $region15: #{stnscn_forward.1} parent=11 // pred_region
          _
        $region16: #{stnscn_forward.1} parent=11 // pred_fallthru
          _
        // Predicated region
        $region17: #{stnscn_forward.1} parent=11 // pred_check
          %p510 = pneg %p151
        $region18: #{stnscn_forward.1} parent=11 // pred_check_branch
          %512 = sbr.rel (%p510) target = $region20
        $region19: #{stnscn_forward.1} parent=11 // pred_region
          _
        $region20: #{stnscn_forward.1} parent=11 // pred_fallthru
          _
        // Predicated region
        $region21: #{stnscn_forward.1} parent=11 // pred_check
          %p513 = pneg %p172
        $region22: #{stnscn_forward.1} parent=11 // pred_check_branch
          %515 = sbr.rel (%p513) target = $region24
        $region23: #{stnscn_forward.1} parent=11 // pred_region
          %s517 = ssub.s32 64, 64
          %518 = vsyncadd [#allocation3], %s517
          %s520 = sshll.u32 [#allocation2], 4
          %s521 = int_to_ptr.vmem [resolvable:$true] %s520
          %523 = dma.hbm_to_vmem [thread:$0]  %s5, 64, %s521, [#allocation3]
        $region24: #{stnscn_forward.1} parent=11 // pred_fallthru
          _
        // Predicated region
        $region25: #{stnscn_forward.1} parent=11 // pred_check
          %p524 = pneg %p193
        $region26: #{stnscn_forward.1} parent=11 // pred_check_branch
          %526 = sbr.rel (%p524) target = $region28
        $region27: #{stnscn_forward.1} parent=11 // pred_region
          _
        $region28: #{stnscn_forward.1} parent=11 // pred_fallthru
          _
        // Predicated region
        $region29: #{stnscn_forward.1} parent=11 // pred_check
          %p527 = pneg %p214
        $region30: #{stnscn_forward.1} parent=11 // pred_check_branch
          %529 = sbr.rel (%p527) target = $region32
        $region31: #{stnscn_forward.1} parent=11 // pred_region
          _
        $region32: #{stnscn_forward.1} parent=11 // pred_fallthru
          _
        // Predicated region
        $region33: #{stnscn_forward.1} parent=11 // pred_check
          %p530 = pneg %p235
        $region34: #{stnscn_forward.1} parent=11 // pred_check_branch
          %532 = sbr.rel (%p530) target = $region36
        $region35: #{stnscn_forward.1} parent=11 // pred_region
          %s534 = ssub.s32 16, 16
          %535 = vsyncadd [#allocation5], %s534
          %s537 = sshll.u32 [#allocation4], 4
          %s538 = int_to_ptr.vmem [resolvable:$true] %s537
          %540 = dma.hbm_to_vmem [thread:$0]  %s8, 16, %s538, [#allocation5]
        $region36: #{stnscn_forward.1} parent=11 // pred_fallthru
          _
        // Predicated region
        $region37: #{stnscn_forward.1} parent=11 // pred_check
          %p541 = pneg %p256
        $region38: #{stnscn_forward.1} parent=11 // pred_check_branch
          %543 = sbr.rel (%p541) target = $region40
        $region39: #{stnscn_forward.1} parent=11 // pred_region
          _
        $region40: #{stnscn_forward.1} parent=11 // pred_fallthru
          _
        // Predicated region
        $region41: #{stnscn_forward.1} parent=11 // pred_check
          %p544 = pneg %p277
        $region42: #{stnscn_forward.1} parent=11 // pred_check_branch
          %546 = sbr.rel (%p544) target = $region44
        $region43: #{stnscn_forward.1} parent=11 // pred_region
          %s548 = ssub.s32 64, 64
          %549 = vsyncadd [#allocation5], %s548
          %s551 = sshll.u32 [#allocation6], 4
          %s552 = int_to_ptr.vmem [resolvable:$true] %s551
          %554 = dma.hbm_to_vmem [thread:$0]  %s10, 64, %s552, [#allocation5]
        $region44: #{stnscn_forward.1} parent=11 // pred_fallthru
          _
        // Predicated region
        $region45: #{stnscn_forward.1} parent=11 // pred_check
          %p555 = pneg %p298
        $region46: #{stnscn_forward.1} parent=11 // pred_check_branch
          %557 = sbr.rel (%p555) target = $region48
        $region47: #{stnscn_forward.1} parent=11 // pred_region
          _
        $region48: #{stnscn_forward.1} parent=11 // pred_fallthru
          _
        // Predicated region
        $region49: #{stnscn_forward.1} parent=11 // pred_check
          %p558 = pneg %p319
        $region50: #{stnscn_forward.1} parent=11 // pred_check_branch
          %560 = sbr.rel (%p558) target = $region52
        $region51: #{stnscn_forward.1} parent=11 // pred_region
          _
        $region52: #{stnscn_forward.1} parent=11 // pred_fallthru
          _
        // Predicated region
        $region53: #{stnscn_forward.1} parent=11 // pred_check
          %p561 = pneg %p340
        $region54: #{stnscn_forward.1} parent=11 // pred_check_branch
          %563 = sbr.rel (%p561) target = $region56
        $region55: #{stnscn_forward.1} parent=11 // pred_region
          %s565 = ssub.s32 32, 32
          %566 = vsyncadd [#allocation8], %s565
          %s568 = sshll.u32 [#allocation7], 4
          %s569 = int_to_ptr.vmem [resolvable:$true] %s568
          %571 = dma.hbm_to_vmem [thread:$0]  %s13, 32, %s569, [#allocation8]
        $region56: #{stnscn_forward.1} parent=11 // pred_fallthru
          _
        // Predicated region
        $region57: #{stnscn_forward.1} parent=11 // pred_check
          %p572 = pneg %p361
        $region58: #{stnscn_forward.1} parent=11 // pred_check_branch
          %574 = sbr.rel (%p572) target = $region60
        $region59: #{stnscn_forward.1} parent=11 // pred_region
          %s576 = ssub.s32 64, 64
          %577 = vsyncadd [#allocation8], %s576
          %s579 = sshll.u32 [#allocation9], 4
          %s580 = int_to_ptr.vmem [resolvable:$true] %s579
          %582 = dma.hbm_to_vmem [thread:$0]  %s14, 64, %s580, [#allocation8]
        $region60: #{stnscn_forward.1} parent=11 // pred_fallthru
          _
        // Predicated region
        $region61: #{stnscn_forward.1} parent=11 // pred_check
          %p583 = pneg %p382
        $region62: #{stnscn_forward.1} parent=11 // pred_check_branch
          %585 = sbr.rel (%p583) target = $region64
        $region63: #{stnscn_forward.1} parent=11 // pred_region
          _
        $region64: #{stnscn_forward.1} parent=11 // pred_fallthru
          _
        // Predicated region
        $region65: #{stnscn_forward.1} parent=11 // pred_check
          %p586 = pneg %p403
        $region66: #{stnscn_forward.1} parent=11 // pred_check_branch
          %588 = sbr.rel (%p586) target = $region68
        $region67: #{stnscn_forward.1} parent=11 // pred_region
          %s590 = ssub.s32 256, 256
          %591 = vsyncadd [#allocation11], %s590
          %s592 = sshll.u32 [#allocation10], 4
          %s593 = int_to_ptr.vmem [resolvable:$true] %s592
          %598 = dma.hbm_to_vmem [thread:$0]  %s16, 256, %s593, [#allocation11], 128, 128, 8
        $region68: #{stnscn_forward.1} parent=11 // pred_fallthru
          _
        // Predicated region
        $region69: #{stnscn_forward.1} parent=11 // pred_check
          %p599 = pneg %p424
        $region70: #{stnscn_forward.1} parent=11 // pred_check_branch
          %601 = sbr.rel (%p599) target = $region72
        $region71: #{stnscn_forward.1} parent=11 // pred_region
          %s603 = ssub.s32 16, 16
          %604 = vsyncadd [#allocation11], %s603
          %s606 = sshll.u32 [#allocation12], 4
          %s607 = int_to_ptr.vmem [resolvable:$true] %s606
          %609 = dma.hbm_to_vmem [thread:$0]  %s17, 16, %s607, [#allocation11]
        $region72: #{stnscn_forward.1} parent=11 // pred_fallthru
          _
        // Predicated region
        $region73: #{stnscn_forward.1} parent=11 // pred_check
          %p610 = pneg %p445
        $region74: #{stnscn_forward.1} parent=11 // pred_check_branch
          %612 = sbr.rel (%p610) target = $region76
        $region75: #{stnscn_forward.1} parent=11 // pred_region
          _
        $region76: #{stnscn_forward.1} parent=11 // pred_fallthru
          _
        // Predicated region
        $region77: #{stnscn_forward.1} parent=11 // pred_check
          %p613 = pneg %p466
        $region78: #{stnscn_forward.1} parent=11 // pred_check_branch
          %615 = sbr.rel (%p613) target = $region80
        $region79: #{stnscn_forward.1} parent=11 // pred_region
          %s617 = ssub.s32 16, 16
          %618 = vsyncadd [#allocation14], %s617
          %s620 = sshll.u32 [#allocation13], 4
          %s621 = int_to_ptr.vmem [resolvable:$true] %s620
          %623 = dma.hbm_to_vmem [thread:$0]  %s19, 16, %s621, [#allocation14]
        $region80: #{stnscn_forward.1} parent=11 // pred_fallthru
          _
      $region12: #{stnscn_forward.1} parent=5 // pred_fallthru
        _
      %p624 = scmp.lt.s32.totalorder %s31, 2
      // Predicated region
      $region81: #{stnscn_forward.1} parent=5 // pred_check
        %p625 = pneg %p624
      $region82: #{stnscn_forward.1} parent=5 // pred_check_branch
        %627 = sbr.rel (%p625) target = $region84
      $region83: #{stnscn_forward.1} parent=5 // pred_region
        // Predicated region
        $region85: #{stnscn_forward.1} parent=83 // pred_check
          %p628 = pneg %p72
        $region86: #{stnscn_forward.1} parent=83 // pred_check_branch
          %630 = sbr.rel (%p628) target = $region88
        $region87: #{stnscn_forward.1} parent=83 // pred_region
          %p631 = scmp.lt.s32.totalorder %s31, 1
          %s632 = scalar_select %p631, %s31, 1
          %s633 = smul.addr %s632, 8
          %s634 = scalar_lea.vmem %s1, %s633
        $region88: #{stnscn_forward.1} parent=83 // pred_fallthru
          _
        // Predicated region
        $region89: #{stnscn_forward.1} parent=83 // pred_check
          %p635 = pneg %p98
        $region90: #{stnscn_forward.1} parent=83 // pred_check_branch
          %637 = sbr.rel (%p635) target = $region92
        $region91: #{stnscn_forward.1} parent=83 // pred_region
          %p638 = scmp.lt.s32.totalorder %s31, 1
          %s639 = scalar_select %p638, %s31, 1
          %s640 = smul.addr %s639, 4
          %s641 = scalar_lea.vmem %s2, %s640
        $region92: #{stnscn_forward.1} parent=83 // pred_fallthru
          _
        // Predicated region
        $region93: #{stnscn_forward.1} parent=83 // pred_check
          %p642 = pneg %p124
        $region94: #{stnscn_forward.1} parent=83 // pred_check_branch
          %644 = sbr.rel (%p642) target = $region96
        $region95: #{stnscn_forward.1} parent=83 // pred_region
          %p645 = scmp.lt.s32.totalorder %s31, 1
          %s646 = scalar_select %p645, %s31, 1
          %s647 = smul.addr %s646, 4
          %s648 = scalar_lea.vmem %s3, %s647
        $region96: #{stnscn_forward.1} parent=83 // pred_fallthru
          _
      $region84: #{stnscn_forward.1} parent=5 // pred_fallthru
        _
      %p649 = scmp.le.s32.totalorder 1, %s31
      %p650 = scmp.lt.s32.totalorder %s31, 3
      %p651 = pnand %p649, %p650
      %p652 = pneg %p651
      // Predicated region
      $region97: #{stnscn_forward.1} parent=5 // pred_check
        _
      $region98: #{stnscn_forward.1} parent=5 // pred_check_branch
        %654 = sbr.rel (%p651) target = $region100
      $region99: #{stnscn_forward.1} parent=5 // pred_region
        %s655 = ssub.s32 %s31, 1
        // Predicated region
        $region101: #{stnscn_forward.1} parent=99 // pred_check
          %p656 = pneg %p172
        $region102: #{stnscn_forward.1} parent=99 // pred_check_branch
          %658 = sbr.rel (%p656) target = $region104
        $region103: #{stnscn_forward.1} parent=99 // pred_region
          %659 = dma.done [#allocation3], 64
        $region104: #{stnscn_forward.1} parent=99 // pred_fallthru
          _
        // Predicated region
        $region105: #{stnscn_forward.1} parent=99 // pred_check
          %p660 = pneg %p235
        $region106: #{stnscn_forward.1} parent=99 // pred_check_branch
          %662 = sbr.rel (%p660) target = $region108
        $region107: #{stnscn_forward.1} parent=99 // pred_region
          %663 = dma.done [#allocation5], 16
        $region108: #{stnscn_forward.1} parent=99 // pred_fallthru
          _
        // Predicated region
        $region109: #{stnscn_forward.1} parent=99 // pred_check
          %p664 = pneg %p277
        $region110: #{stnscn_forward.1} parent=99 // pred_check_branch
          %666 = sbr.rel (%p664) target = $region112
        $region111: #{stnscn_forward.1} parent=99 // pred_region
          %667 = dma.done [#allocation5], 64
        $region112: #{stnscn_forward.1} parent=99 // pred_fallthru
          _
        // Predicated region
        $region113: #{stnscn_forward.1} parent=99 // pred_check
          %p668 = pneg %p340
        $region114: #{stnscn_forward.1} parent=99 // pred_check_branch
          %670 = sbr.rel (%p668) target = $region116
        $region115: #{stnscn_forward.1} parent=99 // pred_region
          %671 = dma.done [#allocation8], 32
        $region116: #{stnscn_forward.1} parent=99 // pred_fallthru
          _
        // Predicated region
        $region117: #{stnscn_forward.1} parent=99 // pred_check
          %p672 = pneg %p361
        $region118: #{stnscn_forward.1} parent=99 // pred_check_branch
          %674 = sbr.rel (%p672) target = $region120
        $region119: #{stnscn_forward.1} parent=99 // pred_region
          %675 = dma.done [#allocation8], 64
        $region120: #{stnscn_forward.1} parent=99 // pred_fallthru
          _
        // Predicated region
        $region121: #{stnscn_forward.1} parent=99 // pred_check
          %p676 = pneg %p403
        $region122: #{stnscn_forward.1} parent=99 // pred_check_branch
          %678 = sbr.rel (%p676) target = $region124
        $region123: #{stnscn_forward.1} parent=99 // pred_region
          %679 = dma.done [#allocation11], 256
        $region124: #{stnscn_forward.1} parent=99 // pred_fallthru
          _
        // Predicated region
        $region125: #{stnscn_forward.1} parent=99 // pred_check
          %p680 = pneg %p424
        $region126: #{stnscn_forward.1} parent=99 // pred_check_branch
          %682 = sbr.rel (%p680) target = $region128
        $region127: #{stnscn_forward.1} parent=99 // pred_region
          %683 = dma.done [#allocation11], 16
        $region128: #{stnscn_forward.1} parent=99 // pred_fallthru
          _
        // Predicated region
        $region129: #{stnscn_forward.1} parent=99 // pred_check
          %p684 = pneg %p466
        $region130: #{stnscn_forward.1} parent=99 // pred_check_branch
          %686 = sbr.rel (%p684) target = $region132
        $region131: #{stnscn_forward.1} parent=99 // pred_region
          %687 = dma.done [#allocation14], 16
        $region132: #{stnscn_forward.1} parent=99 // pred_fallthru
          _
        %p688 = pneg %p52
        %p689 = pneg %p49
        %p690 = scmp.lt.s32.totalorder %s36, 1
        %s691 = scalar_select %p690, %s36, 1
        %s692 = smul.addr %s691, 8
        %s693 = scalar_lea.vmem %s1, %s692
        %p694 = pneg %p78
        %p695 = pneg %p75
        %p696 = scmp.lt.s32.totalorder %s36, 1
        %s697 = scalar_select %p696, %s36, 1
        %s698 = smul.addr %s697, 4
        %s699 = scalar_lea.vmem %s2, %s698
        %p700 = pneg %p104
        %p701 = pneg %p101
        %p702 = scmp.lt.s32.totalorder %s36, 1
        %s703 = scalar_select %p702, %s36, 1
        %s704 = smul.addr %s703, 4
        %s705 = scalar_lea.vmem %s3, %s704
        %p706 = pneg %p130
        %p707 = pneg %p127
        %p708 = pneg %p151
        %p709 = pneg %p148
        %p710 = pneg %p172
        %p711 = pneg %p169
        %p712 = pneg %p193
        %p713 = pneg %p190
        %p714 = pneg %p214
        %p715 = pneg %p211
        %p716 = pneg %p235
        %p717 = pneg %p232
        %p718 = pneg %p256
        %p719 = pneg %p253
        %p720 = pneg %p277
        %p721 = pneg %p274
        %p722 = pneg %p298
        %p723 = pneg %p295
        %p724 = pneg %p319
        %p725 = pneg %p316
        %p726 = pneg %p340
        %p727 = pneg %p337
        %p728 = pneg %p361
        %p729 = pneg %p358
        %p730 = pneg %p382
        %p731 = pneg %p379
        %p732 = pneg %p403
        %p733 = pneg %p400
        %p734 = pneg %p424
        %p735 = pneg %p421
        %p736 = pneg %p445
        %p737 = pneg %p442
        %p738 = pneg %p466
        %p739 = pneg %p463
        %p740 = pneg %p492
        %p741 = pneg %p489
        %p742 = scmp.lt.s32.totalorder %s36, 1
        %s743 = scalar_select %p742, %s36, 1
        %s744 = smul.addr %s743, 8
        %s745 = scalar_lea.vmem %s20, %s744
        %p746 = scmp.lt.s32.totalorder %s36, 1
        %s747 = scalar_select %p746, %s36, 1
        %s748 = smul.addr %s747, 8
        %s749 = scalar_lea.vmem %s1, %s748
        %p750 = scmp.lt.s32.totalorder %s36, 1
        %s751 = scalar_select %p750, %s36, 1
        %s752 = smul.addr %s751, 4
        %s753 = scalar_lea.vmem %s2, %s752
        %p754 = scmp.lt.s32.totalorder %s36, 1
        %s755 = scalar_select %p754, %s36, 1
        %s756 = smul.addr %s755, 4
        %s757 = scalar_lea.vmem %s3, %s756
        %p758 = scmp.lt.s32.totalorder %s36, 1
        %s759 = scalar_select %p758, %s36, 1
        %s760 = smul.addr %s759, 8
        %s761 = scalar_lea.vmem %s20, %s760
        %v762 = vld [vmem:[%s0] sm:$0xff]
        %v763 = vld [vmem:[%s749] sm:$0xff]
        %v764 = vld [vmem:[%s753] sm:$0xf]
        %v765 = vld [vmem:[%s757] sm:$0xf]
        %vm766 = vcmask 64512
        %v767 = vsel %vm766, %v762, 0.0
        %768 = vadd.xlane.f32.xlu0 %v767
        %v769 = vpop.xlane.xlu0 %768
        %vm770 = vcmask 27648
        %v771 = vsel %vm770, %v765, 0.0
        %v772 = vrot.slane %v771, 4
        %v773 = vadd.f32 %v771, %v772
        %v774 = vrot.slane %v773, 2
        %v775 = vadd.f32 %v773, %v774
        %v776 = vrot.slane %v775, 1
        %v777 = vadd.f32 %v775, %v776
        %v778 = vrcp.pop 4.0
        %v779 = vmul.f32 %v777, %v778
        %v780 = vld [vmem:[%s9] sm:$0xf]
        %vm781 = vcmask 31744
        %v783 = vsel %vm781, %v779, 0
        %vm785 = vcmask 1043456
        %v787 = vsel %vm785, %v780, 0
        %789 = vmatprep.subr.mxu0 0.0
        %790 = vmatpush1.msra.mxu0 %v787
        %791 = vmatprep.subr.mxu0 0.0
        %792 = vmatpush1.msra.mxu0 0.0
        %793 = vmatprep.subr.mxu0 0.0
        %794 = vmatpush1.msra.mxu0 0.0
        %795 = vmatprep.subr.mxu0 0.0
        %796 = vmatpush1.msra.mxu0 0.0
        %797 = vmatprep.subr.mxu0 0.0
        %798 = vmatpush1.msra.mxu0 0.0
        %799 = vmatprep.subr.mxu0 0.0
        %800 = vmatpush1.msra.mxu0 0.0
        %801 = vmatprep.subr.mxu0 0.0
        %802 = vmatpush1.msra.mxu0 0.0
        %803 = vmatprep.subr.mxu0 0.0
        %804 = vmatpush1.msra.mxu0 0.0
        %805 = vmatprep.subr.mxu0 0.0
        %806 = vmatpush1.msra.mxu0 0.0
        %807 = vmatprep.subr.mxu0 0.0
        %808 = vmatpush1.msra.mxu0 0.0
        %809 = vmatprep.subr.mxu0 0.0
        %810 = vmatpush1.msra.mxu0 0.0
        %811 = vmatprep.subr.mxu0 0.0
        %812 = vmatpush1.msra.mxu0 0.0
        %813 = vmatprep.subr.mxu0 0.0
        %814 = vmatpush1.msra.mxu0 0.0
        %815 = vmatprep.subr.mxu0 0.0
        %816 = vmatpush1.msra.mxu0 0.0
        %817 = vmatprep.subr.mxu0 0.0
        %818 = vmatpush1.msra.mxu0 0.0
        %819 = vmatprep.subr.mxu0 0.0
        %820 = vmatpush1.msra.mxu0 0.0
        %821 = vmatprep.subr.mxu0 0.0
        %822 = vmatpush1.msra.mxu0 0.0
        %823 = vmatprep.subr.mxu0 0.0
        %824 = vmatpush1.msra.mxu0 0.0
        %825 = vmatprep.subr.mxu0 0.0
        %826 = vmatpush1.msra.mxu0 0.0
        %827 = vmatprep.subr.mxu0 0.0
        %828 = vmatpush1.msra.mxu0 0.0
        %829 = vmatprep.subr.mxu0 0.0
        %830 = vmatpush1.msra.mxu0 0.0
        %831 = vmatprep.subr.mxu0 0.0
        %832 = vmatpush1.msra.mxu0 0.0
        %833 = vmatprep.subr.mxu0 0.0
        %834 = vmatpush1.msra.mxu0 0.0
        %835 = vmatprep.subr.mxu0 0.0
        %836 = vmatpush1.msra.mxu0 0.0
        %837 = vmatprep.subr.mxu0 0.0
        %838 = vmatpush1.msra.mxu0 0.0
        %839 = vmatprep.subr.mxu0 0.0
        %840 = vmatpush1.msra.mxu0 0.0
        %841 = vmatprep.subr.mxu0 0.0
        %842 = vmatpush1.msra.mxu0 0.0
        %843 = vmatprep.subr.mxu0 0.0
        %844 = vmatpush1.msra.mxu0 0.0
        %845 = vmatprep.subr.mxu0 0.0
        %846 = vmatpush1.msra.mxu0 0.0
        %847 = vmatprep.subr.mxu0 0.0
        %848 = vmatpush1.msra.mxu0 0.0
        %849 = vmatprep.subr.mxu0 0.0
        %850 = vmatpush1.msra.mxu0 0.0
        %851 = vmatprep.subr.mxu0 0.0
        %852 = vmatpush1.msra.mxu0 0.0
        %853 = vmatprep.mubr.f32.mxu0 0.0
        %854 = vmatmul.mubr.f32.gmra.mrb[0].mxu0 %v783
        %v855 = vpop.f32.mrb[0].mxu0
        %v856 = vadd.f32 0.0, %v855
        %v857 = vpop.f32.mrb[0].mxu0
        %858 = vdwg.mxu0
        %v859 = vld [vmem:[#allocation6] sm:$0xf]
        %v861 = vsel %vm781, %v764, 0
        %v864 = vsel %vm785, %v859, 0
        %866 = vmatprep.subr.mxu0 0.0
        %867 = vmatpush1.msra.mxu0 %v864
        %868 = vmatprep.subr.mxu0 0.0
        %869 = vmatpush1.msra.mxu0 0.0
        %870 = vmatprep.subr.mxu0 0.0
        %871 = vmatpush1.msra.mxu0 0.0
        %872 = vmatprep.subr.mxu0 0.0
        %873 = vmatpush1.msra.mxu0 0.0
        %874 = vmatprep.subr.mxu0 0.0
        %875 = vmatpush1.msra.mxu0 0.0
        %876 = vmatprep.subr.mxu0 0.0
        %877 = vmatpush1.msra.mxu0 0.0
        %878 = vmatprep.subr.mxu0 0.0
        %879 = vmatpush1.msra.mxu0 0.0
        %880 = vmatprep.subr.mxu0 0.0
        %881 = vmatpush1.msra.mxu0 0.0
        %882 = vmatprep.subr.mxu0 0.0
        %883 = vmatpush1.msra.mxu0 0.0
        %884 = vmatprep.subr.mxu0 0.0
        %885 = vmatpush1.msra.mxu0 0.0
        %886 = vmatprep.subr.mxu0 0.0
        %887 = vmatpush1.msra.mxu0 0.0
        %888 = vmatprep.subr.mxu0 0.0
        %889 = vmatpush1.msra.mxu0 0.0
        %890 = vmatprep.subr.mxu0 0.0
        %891 = vmatpush1.msra.mxu0 0.0
        %892 = vmatprep.subr.mxu0 0.0
        %893 = vmatpush1.msra.mxu0 0.0
        %894 = vmatprep.subr.mxu0 0.0
        %895 = vmatpush1.msra.mxu0 0.0
        %896 = vmatprep.subr.mxu0 0.0
        %897 = vmatpush1.msra.mxu0 0.0
        %898 = vmatprep.subr.mxu0 0.0
        %899 = vmatpush1.msra.mxu0 0.0
        %900 = vmatprep.subr.mxu0 0.0
        %901 = vmatpush1.msra.mxu0 0.0
        %902 = vmatprep.subr.mxu0 0.0
        %903 = vmatpush1.msra.mxu0 0.0
        %904 = vmatprep.subr.mxu0 0.0
        %905 = vmatpush1.msra.mxu0 0.0
        %906 = vmatprep.subr.mxu0 0.0
        %907 = vmatpush1.msra.mxu0 0.0
        %908 = vmatprep.subr.mxu0 0.0
        %909 = vmatpush1.msra.mxu0 0.0
        %910 = vmatprep.subr.mxu0 0.0
        %911 = vmatpush1.msra.mxu0 0.0
        %912 = vmatprep.subr.mxu0 0.0
        %913 = vmatpush1.msra.mxu0 0.0
        %914 = vmatprep.subr.mxu0 0.0
        %915 = vmatpush1.msra.mxu0 0.0
        %916 = vmatprep.subr.mxu0 0.0
        %917 = vmatpush1.msra.mxu0 0.0
        %918 = vmatprep.subr.mxu0 0.0
        %919 = vmatpush1.msra.mxu0 0.0
        %920 = vmatprep.subr.mxu0 0.0
        %921 = vmatpush1.msra.mxu0 0.0
        %922 = vmatprep.subr.mxu0 0.0
        %923 = vmatpush1.msra.mxu0 0.0
        %924 = vmatprep.subr.mxu0 0.0
        %925 = vmatpush1.msra.mxu0 0.0
        %926 = vmatprep.subr.mxu0 0.0
        %927 = vmatpush1.msra.mxu0 0.0
        %928 = vmatprep.subr.mxu0 0.0
        %929 = vmatpush1.msra.mxu0 0.0
        %930 = vmatprep.mubr.f32.mxu0 0.0
        %931 = vmatmul.mubr.f32.gmra.mrb[0].mxu0 %v861
        %v932 = vpop.f32.mrb[0].mxu0
        %v933 = vadd.f32 0.0, %v932
        %v934 = vpop.f32.mrb[0].mxu0
        %935 = vdwg.mxu0
        %v936 = vlaneseq
        %v937 = vshrl.u32 %v936, 7
        %v938 = vsub.s32 0, %v937
        %v939 = vrot.slane %v856, %v938
        %v940 = vmul.f32 %v933, %v939
        %vm941 = vcmask 60416
        %v942 = vsel %vm941, %v940, 0.0
        %943 = vadd.xlane.f32.xlu0 %v942
        %v944 = vpop.xlane.xlu0 %943
        %v945 = vmul.f32 %v944, 0.35355338
        %v946 = vsel %vm785, %v945, -inf
        %v947 = vrot.slane %v946, 4
        %v948 = vmax.f32 %v946, %v947
        %v949 = vrot.slane %v948, 2
        %v950 = vmax.f32 %v948, %v949
        %v951 = vrot.slane %v950, 1
        %v952 = vmax.f32 %v950, %v951
        %v953 = vsub.f32 %v945, %v952
        %v954 = vmul.f32 %v953, 1.442695
        %v955 = vpow.pop %v954
        %v956 = vsel %vm785, %v955, 0.0
        %v957 = vrot.slane %v956, 4
        %v958 = vadd.f32 %v956, %v957
        %v959 = vrot.slane %v958, 2
        %v960 = vadd.f32 %v958, %v959
        %v961 = vrot.slane %v960, 1
        %v962 = vadd.f32 %v960, %v961
        %v963 = vrcp.pop %v962
        %v964 = vmul.f32 %v955, %v963
        %966 = vrot.lane.b32.xlu0 %v940, 120
        %v967 = vpop.permute.xlu0 %966
        %v969 = vsel %vm941, %v967, 0.0
        %970 = vadd.xlane.f32.xlu0 %v969
        %v971 = vpop.xlane.xlu0 %970
        %v972 = vmul.f32 %v971, 0.35355338
        %v973 = vsel %vm785, %v972, -inf
        %v974 = vrot.slane %v973, 4
        %v975 = vmax.f32 %v973, %v974
        %v976 = vrot.slane %v975, 2
        %v977 = vmax.f32 %v975, %v976
        %v978 = vrot.slane %v977, 1
        %v979 = vmax.f32 %v977, %v978
        %v980 = vsub.f32 %v972, %v979
        %v981 = vmul.f32 %v980, 1.442695
        %v982 = vpow.pop %v981
        %v983 = vsel %vm785, %v982, 0.0
        %v984 = vrot.slane %v983, 4
        %v985 = vadd.f32 %v983, %v984
        %v986 = vrot.slane %v985, 2
        %v987 = vadd.f32 %v985, %v986
        %v988 = vrot.slane %v987, 1
        %v989 = vadd.f32 %v987, %v988
        %v990 = vrcp.pop %v989
        %v991 = vmul.f32 %v982, %v990
        %v992 = vsel %vm766, %v964, %v991
        %v993 = vld [vmem:[%s11] sm:$0xff]
        %v994 = vld [vmem:[%s11 + $0x8] sm:$0xff]
        %v995 = vld [vmem:[%s4] sm:$0x3]
        %v996 = vld [vmem:[%s6] sm:$0xff]
        %v997 = vld [vmem:[%s6 + $0x8] sm:$0xff]
        %v998 = vld [vmem:[%s7] sm:$0xff]
        %v999 = vld [vmem:[%s7 + $0x8] sm:$0xff]
        %v1000 = vld [vmem:[#allocation4] sm:$0x1]
        %v1001 = vld [vmem:[#allocation2] sm:$0xf]
        %v1003 = vsel %vm785, %v1001, 0
        %1005 = vmatprep.subr.mxu0 0.0
        %1006 = vmatpush1.msra.mxu0 %v1003
        %1007 = vmatprep.subr.mxu0 0.0
        %1008 = vmatpush1.msra.mxu0 0.0
        %1009 = vmatprep.subr.mxu0 0.0
        %1010 = vmatpush1.msra.mxu0 0.0
        %1011 = vmatprep.subr.mxu0 0.0
        %1012 = vmatpush1.msra.mxu0 0.0
        %1013 = vmatprep.subr.mxu0 0.0
        %1014 = vmatpush1.msra.mxu0 0.0
        %1015 = vmatprep.subr.mxu0 0.0
        %1016 = vmatpush1.msra.mxu0 0.0
        %1017 = vmatprep.subr.mxu0 0.0
        %1018 = vmatpush1.msra.mxu0 0.0
        %1019 = vmatprep.subr.mxu0 0.0
        %1020 = vmatpush1.msra.mxu0 0.0
        %1021 = vmatprep.subr.mxu0 0.0
        %1022 = vmatpush1.msra.mxu0 0.0
        %1023 = vmatprep.subr.mxu0 0.0
        %1024 = vmatpush1.msra.mxu0 0.0
        %1025 = vmatprep.subr.mxu0 0.0
        %1026 = vmatpush1.msra.mxu0 0.0
        %1027 = vmatprep.subr.mxu0 0.0
        %1028 = vmatpush1.msra.mxu0 0.0
        %1029 = vmatprep.subr.mxu0 0.0
        %1030 = vmatpush1.msra.mxu0 0.0
        %1031 = vmatprep.subr.mxu0 0.0
        %1032 = vmatpush1.msra.mxu0 0.0
        %1033 = vmatprep.subr.mxu0 0.0
        %1034 = vmatpush1.msra.mxu0 0.0
        %1035 = vmatprep.subr.mxu0 0.0
        %1036 = vmatpush1.msra.mxu0 0.0
        %1037 = vmatprep.subr.mxu0 0.0
        %1038 = vmatpush1.msra.mxu0 0.0
        %1039 = vmatprep.subr.mxu0 0.0
        %1040 = vmatpush1.msra.mxu0 0.0
        %1041 = vmatprep.subr.mxu0 0.0
        %1042 = vmatpush1.msra.mxu0 0.0
        %1043 = vmatprep.subr.mxu0 0.0
        %1044 = vmatpush1.msra.mxu0 0.0
        %1045 = vmatprep.subr.mxu0 0.0
        %1046 = vmatpush1.msra.mxu0 0.0
        %1047 = vmatprep.subr.mxu0 0.0
        %1048 = vmatpush1.msra.mxu0 0.0
        %1049 = vmatprep.subr.mxu0 0.0
        %1050 = vmatpush1.msra.mxu0 0.0
        %1051 = vmatprep.subr.mxu0 0.0
        %1052 = vmatpush1.msra.mxu0 0.0
        %1053 = vmatprep.subr.mxu0 0.0
        %1054 = vmatpush1.msra.mxu0 0.0
        %1055 = vmatprep.subr.mxu0 0.0
        %1056 = vmatpush1.msra.mxu0 0.0
        %1057 = vmatprep.subr.mxu0 0.0
        %1058 = vmatpush1.msra.mxu0 0.0
        %1059 = vmatprep.subr.mxu0 0.0
        %1060 = vmatpush1.msra.mxu0 0.0
        %1061 = vmatprep.subr.mxu0 0.0
        %1062 = vmatpush1.msra.mxu0 0.0
        %1063 = vmatprep.subr.mxu0 0.0
        %1064 = vmatpush1.msra.mxu0 0.0
        %1065 = vmatprep.subr.mxu0 0.0
        %1066 = vmatpush1.msra.mxu0 0.0
        %1067 = vmatprep.subr.mxu0 0.0
        %1068 = vmatpush1.msra.mxu0 0.0
        %1069 = vmatprep.mubr.f32.mxu0 0.0
        %1070 = vmatmul.mubr.f32.gmra.mrb[0].mxu0 %v861
        %v1071 = vpop.f32.mrb[0].mxu0
        %v1072 = vadd.f32 0.0, %v1071
        %v1073 = vpop.f32.mrb[0].mxu0
        %1074 = vdwg.mxu0
        %v1076 = vsel %vm766, %v762, 0
        %1078 = vmatprep.subr.mxu0 0.0
        %1079 = vmatpush1.msra.mxu0 %v763
        %1080 = vmatprep.subr.mxu0 0.0
        %1081 = vmatpush1.msra.mxu0 0.0
        %1082 = vmatprep.subr.mxu0 0.0
        %1083 = vmatpush1.msra.mxu0 0.0
        %1084 = vmatprep.subr.mxu0 0.0
        %1085 = vmatpush1.msra.mxu0 0.0
        %1086 = vmatprep.subr.mxu0 0.0
        %1087 = vmatpush1.msra.mxu0 0.0
        %1088 = vmatprep.subr.mxu0 0.0
        %1089 = vmatpush1.msra.mxu0 0.0
        %1090 = vmatprep.subr.mxu0 0.0
        %1091 = vmatpush1.msra.mxu0 0.0
        %1092 = vmatprep.subr.mxu0 0.0
        %1093 = vmatpush1.msra.mxu0 0.0
        %1094 = vmatprep.subr.mxu0 0.0
        %1095 = vmatpush1.msra.mxu0 0.0
        %1096 = vmatprep.subr.mxu0 0.0
        %1097 = vmatpush1.msra.mxu0 0.0
        %1098 = vmatprep.subr.mxu0 0.0
        %1099 = vmatpush1.msra.mxu0 0.0
        %1100 = vmatprep.subr.mxu0 0.0
        %1101 = vmatpush1.msra.mxu0 0.0
        %1102 = vmatprep.subr.mxu0 0.0
        %1103 = vmatpush1.msra.mxu0 0.0
        %1104 = vmatprep.subr.mxu0 0.0
        %1105 = vmatpush1.msra.mxu0 0.0
        %1106 = vmatprep.subr.mxu0 0.0
        %1107 = vmatpush1.msra.mxu0 0.0
        %1108 = vmatprep.subr.mxu0 0.0
        %1109 = vmatpush1.msra.mxu0 0.0
        %1110 = vmatprep.subr.mxu0 0.0
        %1111 = vmatpush1.msra.mxu0 0.0
        %1112 = vmatprep.subr.mxu0 0.0
        %1113 = vmatpush1.msra.mxu0 0.0
        %1114 = vmatprep.subr.mxu0 0.0
        %1115 = vmatpush1.msra.mxu0 0.0
        %1116 = vmatprep.subr.mxu0 0.0
        %1117 = vmatpush1.msra.mxu0 0.0
        %1118 = vmatprep.subr.mxu0 0.0
        %1119 = vmatpush1.msra.mxu0 0.0
        %1120 = vmatprep.subr.mxu0 0.0
        %1121 = vmatpush1.msra.mxu0 0.0
        %1122 = vmatprep.subr.mxu0 0.0
        %1123 = vmatpush1.msra.mxu0 0.0
        %1124 = vmatprep.subr.mxu0 0.0
        %1125 = vmatpush1.msra.mxu0 0.0
        %1126 = vmatprep.subr.mxu0 0.0
        %1127 = vmatpush1.msra.mxu0 0.0
        %1128 = vmatprep.subr.mxu0 0.0
        %1129 = vmatpush1.msra.mxu0 0.0
        %1130 = vmatprep.subr.mxu0 0.0
        %1131 = vmatpush1.msra.mxu0 0.0
        %1132 = vmatprep.subr.mxu0 0.0
        %1133 = vmatpush1.msra.mxu0 0.0
        %1134 = vmatprep.subr.mxu0 0.0
        %1135 = vmatpush1.msra.mxu0 0.0
        %1136 = vmatprep.subr.mxu0 0.0
        %1137 = vmatpush1.msra.mxu0 0.0
        %1138 = vmatprep.subr.mxu0 0.0
        %1139 = vmatpush1.msra.mxu0 0.0
        %1140 = vmatprep.subr.mxu0 0.0
        %1141 = vmatpush1.msra.mxu0 0.0
        %1142 = vmatprep.mubr.f32.mxu0 0.0
        %1143 = vmatmul.mubr.f32.gmra.mrb[0].mxu0 %v1076
        %v1144 = vpop.f32.mrb[0].mxu0
        %v1145 = vadd.f32 0.0, %v1144
        %v1146 = vpop.f32.mrb[0].mxu0
        %1147 = vdwg.mxu0
        %v1148 = vlaneseq
        %v1149 = vshrl.u32 %v1148, 7
        %v1150 = vsub.s32 0, %v1149
        %v1151 = vrot.slane %v1072, %v1150
        %v1152 = vmul.f32 %v769, %v1151
        %vm1153 = vcmask 15360
        %v1155 = vsel %vm1153, %v1145, 0
        %vm1157 = vcmask 1041408
        %v1159 = vsel %vm1157, %v995, 0
        %1161 = vmatprep.subr.mxu0 0.0
        %1162 = vmatpush1.msra.mxu0 %v1159
        %1163 = vmatprep.subr.mxu0 0.0
        %1164 = vmatpush1.msra.mxu0 0.0
        %1165 = vmatprep.subr.mxu0 0.0
        %1166 = vmatpush1.msra.mxu0 0.0
        %1167 = vmatprep.subr.mxu0 0.0
        %1168 = vmatpush1.msra.mxu0 0.0
        %1169 = vmatprep.subr.mxu0 0.0
        %1170 = vmatpush1.msra.mxu0 0.0
        %1171 = vmatprep.subr.mxu0 0.0
        %1172 = vmatpush1.msra.mxu0 0.0
        %1173 = vmatprep.subr.mxu0 0.0
        %1174 = vmatpush1.msra.mxu0 0.0
        %1175 = vmatprep.subr.mxu0 0.0
        %1176 = vmatpush1.msra.mxu0 0.0
        %1177 = vmatprep.subr.mxu0 0.0
        %1178 = vmatpush1.msra.mxu0 0.0
        %1179 = vmatprep.subr.mxu0 0.0
        %1180 = vmatpush1.msra.mxu0 0.0
        %1181 = vmatprep.subr.mxu0 0.0
        %1182 = vmatpush1.msra.mxu0 0.0
        %1183 = vmatprep.subr.mxu0 0.0
        %1184 = vmatpush1.msra.mxu0 0.0
        %1185 = vmatprep.subr.mxu0 0.0
        %1186 = vmatpush1.msra.mxu0 0.0
        %1187 = vmatprep.subr.mxu0 0.0
        %1188 = vmatpush1.msra.mxu0 0.0
        %1189 = vmatprep.subr.mxu0 0.0
        %1190 = vmatpush1.msra.mxu0 0.0
        %1191 = vmatprep.subr.mxu0 0.0
        %1192 = vmatpush1.msra.mxu0 0.0
        %1193 = vmatprep.subr.mxu0 0.0
        %1194 = vmatpush1.msra.mxu0 0.0
        %1195 = vmatprep.subr.mxu0 0.0
        %1196 = vmatpush1.msra.mxu0 0.0
        %1197 = vmatprep.subr.mxu0 0.0
        %1198 = vmatpush1.msra.mxu0 0.0
        %1199 = vmatprep.subr.mxu0 0.0
        %1200 = vmatpush1.msra.mxu0 0.0
        %1201 = vmatprep.subr.mxu0 0.0
        %1202 = vmatpush1.msra.mxu0 0.0
        %1203 = vmatprep.subr.mxu0 0.0
        %1204 = vmatpush1.msra.mxu0 0.0
        %1205 = vmatprep.subr.mxu0 0.0
        %1206 = vmatpush1.msra.mxu0 0.0
        %1207 = vmatprep.subr.mxu0 0.0
        %1208 = vmatpush1.msra.mxu0 0.0
        %1209 = vmatprep.subr.mxu0 0.0
        %1210 = vmatpush1.msra.mxu0 0.0
        %1211 = vmatprep.subr.mxu0 0.0
        %1212 = vmatpush1.msra.mxu0 0.0
        %1213 = vmatprep.subr.mxu0 0.0
        %1214 = vmatpush1.msra.mxu0 0.0
        %1215 = vmatprep.subr.mxu0 0.0
        %1216 = vmatpush1.msra.mxu0 0.0
        %1217 = vmatprep.subr.mxu0 0.0
        %1218 = vmatpush1.msra.mxu0 0.0
        %1219 = vmatprep.subr.mxu0 0.0
        %1220 = vmatpush1.msra.mxu0 0.0
        %1221 = vmatprep.subr.mxu0 0.0
        %1222 = vmatpush1.msra.mxu0 0.0
        %1223 = vmatprep.subr.mxu0 0.0
        %1224 = vmatpush1.msra.mxu0 0.0
        %1225 = vmatprep.mubr.f32.mxu0 0.0
        %1226 = vmatmul.mubr.f32.gmra.mrb[0].mxu0 %v1155
        %v1227 = vpop.f32.mrb[0].mxu0
        %v1228 = vadd.f32 %v1152, %v1227
        %v1229 = vpop.f32.mrb[0].mxu0
        %1230 = vdwg.mxu0
        %v1232 = vlaneseq
        %v1233 = vshrl.u32 %v1232, 7
        %v1234 = vsub.s32 0, %v1233
        %v1235 = vrot.slane %v1000, %v1234
        %v1237 = vadd.f32 %v1228, %v1235
        %vm1238 = vcmask 130048
        %v1240 = vsel %vm1238, 0.0, 0
        %1242 = vmatprep.subr.mxu0 0.0
        %1243 = vmatpush1.msra.mxu0 %v996
        %1244 = vmatprep.subr.mxu0 0.0
        %1245 = vmatpush1.msra.mxu0 %v997
        %1246 = vmatprep.subr.mxu0 0.0
        %1247 = vmatpush1.msra.mxu0 0.0
        %1248 = vmatprep.subr.mxu0 0.0
        %1249 = vmatpush1.msra.mxu0 0.0
        %1250 = vmatprep.subr.mxu0 0.0
        %1251 = vmatpush1.msra.mxu0 0.0
        %1252 = vmatprep.subr.mxu0 0.0
        %1253 = vmatpush1.msra.mxu0 0.0
        %1254 = vmatprep.subr.mxu0 0.0
        %1255 = vmatpush1.msra.mxu0 0.0
        %1256 = vmatprep.subr.mxu0 0.0
        %1257 = vmatpush1.msra.mxu0 0.0
        %1258 = vmatprep.subr.mxu0 0.0
        %1259 = vmatpush1.msra.mxu0 0.0
        %1260 = vmatprep.subr.mxu0 0.0
        %1261 = vmatpush1.msra.mxu0 0.0
        %1262 = vmatprep.subr.mxu0 0.0
        %1263 = vmatpush1.msra.mxu0 0.0
        %1264 = vmatprep.subr.mxu0 0.0
        %1265 = vmatpush1.msra.mxu0 0.0
        %1266 = vmatprep.subr.mxu0 0.0
        %1267 = vmatpush1.msra.mxu0 0.0
        %1268 = vmatprep.subr.mxu0 0.0
        %1269 = vmatpush1.msra.mxu0 0.0
        %1270 = vmatprep.subr.mxu0 0.0
        %1271 = vmatpush1.msra.mxu0 0.0
        %1272 = vmatprep.subr.mxu0 0.0
        %1273 = vmatpush1.msra.mxu0 0.0
        %1274 = vmatprep.subr.mxu0 0.0
        %1275 = vmatpush1.msra.mxu0 0.0
        %1276 = vmatprep.subr.mxu0 0.0
        %1277 = vmatpush1.msra.mxu0 0.0
        %1278 = vmatprep.subr.mxu0 0.0
        %1279 = vmatpush1.msra.mxu0 0.0
        %1280 = vmatprep.subr.mxu0 0.0
        %1281 = vmatpush1.msra.mxu0 0.0
        %1282 = vmatprep.subr.mxu0 0.0
        %1283 = vmatpush1.msra.mxu0 0.0
        %1284 = vmatprep.subr.mxu0 0.0
        %1285 = vmatpush1.msra.mxu0 0.0
        %1286 = vmatprep.subr.mxu0 0.0
        %1287 = vmatpush1.msra.mxu0 0.0
        %1288 = vmatprep.subr.mxu0 0.0
        %1289 = vmatpush1.msra.mxu0 0.0
        %1290 = vmatprep.subr.mxu0 0.0
        %1291 = vmatpush1.msra.mxu0 0.0
        %1292 = vmatprep.subr.mxu0 0.0
        %1293 = vmatpush1.msra.mxu0 0.0
        %1294 = vmatprep.subr.mxu0 0.0
        %1295 = vmatpush1.msra.mxu0 0.0
        %1296 = vmatprep.subr.mxu0 0.0
        %1297 = vmatpush1.msra.mxu0 0.0
        %1298 = vmatprep.subr.mxu0 0.0
        %1299 = vmatpush1.msra.mxu0 0.0
        %1300 = vmatprep.subr.mxu0 0.0
        %1301 = vmatpush1.msra.mxu0 0.0
        %1302 = vmatprep.subr.mxu0 0.0
        %1303 = vmatpush1.msra.mxu0 0.0
        %1304 = vmatprep.subr.mxu0 0.0
        %1305 = vmatpush1.msra.mxu0 0.0
        %1306 = vmatprep.mubr.f32.mxu0 0.0
        %1307 = vmatmul.mubr.f32.gmra.mrb[0].mxu0 %v1240
        %v1308 = vpop.f32.mrb[0].mxu0
        %v1309 = vadd.f32 0.0, %v1308
        %v1310 = vpop.f32.mrb[0].mxu0
        %1311 = vdwg.mxu0
        %v1312 = vadd.f32 %v1237, %v1309
        %v1313 = vxor.u32 %v1312, 2147483648
        %v1314 = vmul.f32 %v1313, 1.442695
        %v1315 = vpow.pop %v1314
        %v1316 = vadd.f32 %v1315, 1.0
        %v1317 = vrcp.pop %v1316
        %v1318 = vmul.f32 1.0, %v1317
        %v1319 = vmul.f32 %v1318, 0.0
        %1321 = vrot.lane.b32.xlu0 %v1319, 112
        %v1322 = vpop.permute.xlu0 %1321
        %v1323 = vsel %vm1238, %v1322, 0
        %1325 = vmatprep.subr.mxu0 0.0
        %1326 = vmatpush1.msra.mxu0 %v998
        %1327 = vmatprep.subr.mxu0 0.0
        %1328 = vmatpush1.msra.mxu0 %v999
        %1329 = vmatprep.subr.mxu0 0.0
        %1330 = vmatpush1.msra.mxu0 0.0
        %1331 = vmatprep.subr.mxu0 0.0
        %1332 = vmatpush1.msra.mxu0 0.0
        %1333 = vmatprep.subr.mxu0 0.0
        %1334 = vmatpush1.msra.mxu0 0.0
        %1335 = vmatprep.subr.mxu0 0.0
        %1336 = vmatpush1.msra.mxu0 0.0
        %1337 = vmatprep.subr.mxu0 0.0
        %1338 = vmatpush1.msra.mxu0 0.0
        %1339 = vmatprep.subr.mxu0 0.0
        %1340 = vmatpush1.msra.mxu0 0.0
        %1341 = vmatprep.subr.mxu0 0.0
        %1342 = vmatpush1.msra.mxu0 0.0
        %1343 = vmatprep.subr.mxu0 0.0
        %1344 = vmatpush1.msra.mxu0 0.0
        %1345 = vmatprep.subr.mxu0 0.0
        %1346 = vmatpush1.msra.mxu0 0.0
        %1347 = vmatprep.subr.mxu0 0.0
        %1348 = vmatpush1.msra.mxu0 0.0
        %1349 = vmatprep.subr.mxu0 0.0
        %1350 = vmatpush1.msra.mxu0 0.0
        %1351 = vmatprep.subr.mxu0 0.0
        %1352 = vmatpush1.msra.mxu0 0.0
        %1353 = vmatprep.subr.mxu0 0.0
        %1354 = vmatpush1.msra.mxu0 0.0
        %1355 = vmatprep.subr.mxu0 0.0
        %1356 = vmatpush1.msra.mxu0 0.0
        %1357 = vmatprep.subr.mxu0 0.0
        %1358 = vmatpush1.msra.mxu0 0.0
        %1359 = vmatprep.subr.mxu0 0.0
        %1360 = vmatpush1.msra.mxu0 0.0
        %1361 = vmatprep.subr.mxu0 0.0
        %1362 = vmatpush1.msra.mxu0 0.0
        %1363 = vmatprep.subr.mxu0 0.0
        %1364 = vmatpush1.msra.mxu0 0.0
        %1365 = vmatprep.subr.mxu0 0.0
        %1366 = vmatpush1.msra.mxu0 0.0
        %1367 = vmatprep.subr.mxu0 0.0
        %1368 = vmatpush1.msra.mxu0 0.0
        %1369 = vmatprep.subr.mxu0 0.0
        %1370 = vmatpush1.msra.mxu0 0.0
        %1371 = vmatprep.subr.mxu0 0.0
        %1372 = vmatpush1.msra.mxu0 0.0
        %1373 = vmatprep.subr.mxu0 0.0
        %1374 = vmatpush1.msra.mxu0 0.0
        %1375 = vmatprep.subr.mxu0 0.0
        %1376 = vmatpush1.msra.mxu0 0.0
        %1377 = vmatprep.subr.mxu0 0.0
        %1378 = vmatpush1.msra.mxu0 0.0
        %1379 = vmatprep.subr.mxu0 0.0
        %1380 = vmatpush1.msra.mxu0 0.0
        %1381 = vmatprep.subr.mxu0 0.0
        %1382 = vmatpush1.msra.mxu0 0.0
        %1383 = vmatprep.subr.mxu0 0.0
        %1384 = vmatpush1.msra.mxu0 0.0
        %1385 = vmatprep.subr.mxu0 0.0
        %1386 = vmatpush1.msra.mxu0 0.0
        %1387 = vmatprep.subr.mxu0 0.0
        %1388 = vmatpush1.msra.mxu0 0.0
        %1389 = vmatprep.mubr.f32.mxu0 0.0
        %1390 = vmatmul.mubr.f32.gmra.mrb[0].mxu0 %v1323
        %v1391 = vpop.f32.mrb[0].mxu0
        %v1392 = vadd.f32 0.0, %v1391
        %v1393 = vpop.f32.mrb[0].mxu0
        %1394 = vdwg.mxu0
        %1396 = vrot.lane.b32.xlu0 %v1392, 32
        %v1397 = vpop.permute.xlu0 %1396
        %v1399 = vadd.f32 %v1237, %v1397
        %v1400 = vtanh.pop %v1399
        %v1401 = vsub.f32 1.0, %v1318
        %1403 = vrot.lane.b32.xlu0 %v1400, 96
        %v1404 = vpop.permute.xlu0 %1403
        %v1406 = vmul.f32 %v1401, %v1404
        %v1407 = vadd.f32 %v1319, %v1406
        %v1409 = vsel %vm1238, %v1407, 0
        %1411 = vmatprep.subr.mxu0 0.0
        %1412 = vmatpush1.msra.mxu0 %v993
        %1413 = vmatprep.subr.mxu0 0.0
        %1414 = vmatpush1.msra.mxu0 %v994
        %1415 = vmatprep.subr.mxu0 0.0
        %1416 = vmatpush1.msra.mxu0 0.0
        %1417 = vmatprep.subr.mxu0 0.0
        %1418 = vmatpush1.msra.mxu0 0.0
        %1419 = vmatprep.subr.mxu0 0.0
        %1420 = vmatpush1.msra.mxu0 0.0
        %1421 = vmatprep.subr.mxu0 0.0
        %1422 = vmatpush1.msra.mxu0 0.0
        %1423 = vmatprep.subr.mxu0 0.0
        %1424 = vmatpush1.msra.mxu0 0.0
        %1425 = vmatprep.subr.mxu0 0.0
        %1426 = vmatpush1.msra.mxu0 0.0
        %1427 = vmatprep.subr.mxu0 0.0
        %1428 = vmatpush1.msra.mxu0 0.0
        %1429 = vmatprep.subr.mxu0 0.0
        %1430 = vmatpush1.msra.mxu0 0.0
        %1431 = vmatprep.subr.mxu0 0.0
        %1432 = vmatpush1.msra.mxu0 0.0
        %1433 = vmatprep.subr.mxu0 0.0
        %1434 = vmatpush1.msra.mxu0 0.0
        %1435 = vmatprep.subr.mxu0 0.0
        %1436 = vmatpush1.msra.mxu0 0.0
        %1437 = vmatprep.subr.mxu0 0.0
        %1438 = vmatpush1.msra.mxu0 0.0
        %1439 = vmatprep.subr.mxu0 0.0
        %1440 = vmatpush1.msra.mxu0 0.0
        %1441 = vmatprep.subr.mxu0 0.0
        %1442 = vmatpush1.msra.mxu0 0.0
        %1443 = vmatprep.subr.mxu0 0.0
        %1444 = vmatpush1.msra.mxu0 0.0
        %1445 = vmatprep.subr.mxu0 0.0
        %1446 = vmatpush1.msra.mxu0 0.0
        %1447 = vmatprep.subr.mxu0 0.0
        %1448 = vmatpush1.msra.mxu0 0.0
        %1449 = vmatprep.subr.mxu0 0.0
        %1450 = vmatpush1.msra.mxu0 0.0
        %1451 = vmatprep.subr.mxu0 0.0
        %1452 = vmatpush1.msra.mxu0 0.0
        %1453 = vmatprep.subr.mxu0 0.0
        %1454 = vmatpush1.msra.mxu0 0.0
        %1455 = vmatprep.subr.mxu0 0.0
        %1456 = vmatpush1.msra.mxu0 0.0
        %1457 = vmatprep.subr.mxu0 0.0
        %1458 = vmatpush1.msra.mxu0 0.0
        %1459 = vmatprep.subr.mxu0 0.0
        %1460 = vmatpush1.msra.mxu0 0.0
        %1461 = vmatprep.subr.mxu0 0.0
        %1462 = vmatpush1.msra.mxu0 0.0
        %1463 = vmatprep.subr.mxu0 0.0
        %1464 = vmatpush1.msra.mxu0 0.0
        %1465 = vmatprep.subr.mxu0 0.0
        %1466 = vmatpush1.msra.mxu0 0.0
        %1467 = vmatprep.subr.mxu0 0.0
        %1468 = vmatpush1.msra.mxu0 0.0
        %1469 = vmatprep.subr.mxu0 0.0
        %1470 = vmatpush1.msra.mxu0 0.0
        %1471 = vmatprep.subr.mxu0 0.0
        %1472 = vmatpush1.msra.mxu0 0.0
        %1473 = vmatprep.subr.mxu0 0.0
        %1474 = vmatpush1.msra.mxu0 0.0
        %1475 = vmatprep.mubr.f32.mxu0 0.0
        %1476 = vmatmul.mubr.f32.gmra.mrb[0].mxu0 %v1409
        %v1477 = vpop.f32.mrb[0].mxu0
        %v1478 = vadd.f32 0.0, %v1477
        %v1479 = vpop.f32.mrb[0].mxu0
        %1480 = vdwg.mxu0
        %v1481 = vlaneseq
        %v1482 = vshrl.u32 %v1481, 7
        %v1483 = vsub.s32 0, %v1482
        %v1484 = vrot.slane %v992, %v1483
        %v1485 = vmul.f32 %v1484, %v1478
        %v1486 = vadd.f32 %v1485, 0.0
        %v1487 = vlaneseq
        %v1488 = vshrl.u32 %v1487, 7
        %v1489 = vsub.s32 1, %v1488
        %v1490 = vrot.slane %v1072, %v1489
        %v1491 = vmul.f32 %v769, %v1490
        %1492 = vrot.lane.b32.xlu0 %v1145, 126
        %v1493 = vpop.permute.xlu0 %1492
        %v1494 = vsel %vm1153, %v1493, 0
        %1496 = vmatprep.subr.mxu0 0.0
        %1497 = vmatpush1.msra.mxu0 %v1159
        %1498 = vmatprep.subr.mxu0 0.0
        %1499 = vmatpush1.msra.mxu0 0.0
        %1500 = vmatprep.subr.mxu0 0.0
        %1501 = vmatpush1.msra.mxu0 0.0
        %1502 = vmatprep.subr.mxu0 0.0
        %1503 = vmatpush1.msra.mxu0 0.0
        %1504 = vmatprep.subr.mxu0 0.0
        %1505 = vmatpush1.msra.mxu0 0.0
        %1506 = vmatprep.subr.mxu0 0.0
        %1507 = vmatpush1.msra.mxu0 0.0
        %1508 = vmatprep.subr.mxu0 0.0
        %1509 = vmatpush1.msra.mxu0 0.0
        %1510 = vmatprep.subr.mxu0 0.0
        %1511 = vmatpush1.msra.mxu0 0.0
        %1512 = vmatprep.subr.mxu0 0.0
        %1513 = vmatpush1.msra.mxu0 0.0
        %1514 = vmatprep.subr.mxu0 0.0
        %1515 = vmatpush1.msra.mxu0 0.0
        %1516 = vmatprep.subr.mxu0 0.0
        %1517 = vmatpush1.msra.mxu0 0.0
        %1518 = vmatprep.subr.mxu0 0.0
        %1519 = vmatpush1.msra.mxu0 0.0
        %1520 = vmatprep.subr.mxu0 0.0
        %1521 = vmatpush1.msra.mxu0 0.0
        %1522 = vmatprep.subr.mxu0 0.0
        %1523 = vmatpush1.msra.mxu0 0.0
        %1524 = vmatprep.subr.mxu0 0.0
        %1525 = vmatpush1.msra.mxu0 0.0
        %1526 = vmatprep.subr.mxu0 0.0
        %1527 = vmatpush1.msra.mxu0 0.0
        %1528 = vmatprep.subr.mxu0 0.0
        %1529 = vmatpush1.msra.mxu0 0.0
        %1530 = vmatprep.subr.mxu0 0.0
        %1531 = vmatpush1.msra.mxu0 0.0
        %1532 = vmatprep.subr.mxu0 0.0
        %1533 = vmatpush1.msra.mxu0 0.0
        %1534 = vmatprep.subr.mxu0 0.0
        %1535 = vmatpush1.msra.mxu0 0.0
        %1536 = vmatprep.subr.mxu0 0.0
        %1537 = vmatpush1.msra.mxu0 0.0
        %1538 = vmatprep.subr.mxu0 0.0
        %1539 = vmatpush1.msra.mxu0 0.0
        %1540 = vmatprep.subr.mxu0 0.0
        %1541 = vmatpush1.msra.mxu0 0.0
        %1542 = vmatprep.subr.mxu0 0.0
        %1543 = vmatpush1.msra.mxu0 0.0
        %1544 = vmatprep.subr.mxu0 0.0
        %1545 = vmatpush1.msra.mxu0 0.0
        %1546 = vmatprep.subr.mxu0 0.0
        %1547 = vmatpush1.msra.mxu0 0.0
        %1548 = vmatprep.subr.mxu0 0.0
        %1549 = vmatpush1.msra.mxu0 0.0
        %1550 = vmatprep.subr.mxu0 0.0
        %1551 = vmatpush1.msra.mxu0 0.0
        %1552 = vmatprep.subr.mxu0 0.0
        %1553 = vmatpush1.msra.mxu0 0.0
        %1554 = vmatprep.subr.mxu0 0.0
        %1555 = vmatpush1.msra.mxu0 0.0
        %1556 = vmatprep.subr.mxu0 0.0
        %1557 = vmatpush1.msra.mxu0 0.0
        %1558 = vmatprep.subr.mxu0 0.0
        %1559 = vmatpush1.msra.mxu0 0.0
        %1560 = vmatprep.mubr.f32.mxu0 0.0
        %1561 = vmatmul.mubr.f32.gmra.mrb[0].mxu0 %v1494
        %v1562 = vpop.f32.mrb[0].mxu0
        %v1563 = vadd.f32 %v1491, %v1562
        %v1564 = vpop.f32.mrb[0].mxu0
        %1565 = vdwg.mxu0
        %v1566 = vadd.f32 %v1563, %v1235
        %1567 = vmatprep.subr.mxu0 0.0
        %1568 = vmatpush1.msra.mxu0 %v996
        %1569 = vmatprep.subr.mxu0 0.0
        %1570 = vmatpush1.msra.mxu0 %v997
        %1571 = vmatprep.subr.mxu0 0.0
        %1572 = vmatpush1.msra.mxu0 0.0
        %1573 = vmatprep.subr.mxu0 0.0
        %1574 = vmatpush1.msra.mxu0 0.0
        %1575 = vmatprep.subr.mxu0 0.0
        %1576 = vmatpush1.msra.mxu0 0.0
        %1577 = vmatprep.subr.mxu0 0.0
        %1578 = vmatpush1.msra.mxu0 0.0
        %1579 = vmatprep.subr.mxu0 0.0
        %1580 = vmatpush1.msra.mxu0 0.0
        %1581 = vmatprep.subr.mxu0 0.0
        %1582 = vmatpush1.msra.mxu0 0.0
        %1583 = vmatprep.subr.mxu0 0.0
        %1584 = vmatpush1.msra.mxu0 0.0
        %1585 = vmatprep.subr.mxu0 0.0
        %1586 = vmatpush1.msra.mxu0 0.0
        %1587 = vmatprep.subr.mxu0 0.0
        %1588 = vmatpush1.msra.mxu0 0.0
        %1589 = vmatprep.subr.mxu0 0.0
        %1590 = vmatpush1.msra.mxu0 0.0
        %1591 = vmatprep.subr.mxu0 0.0
        %1592 = vmatpush1.msra.mxu0 0.0
        %1593 = vmatprep.subr.mxu0 0.0
        %1594 = vmatpush1.msra.mxu0 0.0
        %1595 = vmatprep.subr.mxu0 0.0
        %1596 = vmatpush1.msra.mxu0 0.0
        %1597 = vmatprep.subr.mxu0 0.0
        %1598 = vmatpush1.msra.mxu0 0.0
        %1599 = vmatprep.subr.mxu0 0.0
        %1600 = vmatpush1.msra.mxu0 0.0
        %1601 = vmatprep.subr.mxu0 0.0
        %1602 = vmatpush1.msra.mxu0 0.0
        %1603 = vmatprep.subr.mxu0 0.0
        %1604 = vmatpush1.msra.mxu0 0.0
        %1605 = vmatprep.subr.mxu0 0.0
        %1606 = vmatpush1.msra.mxu0 0.0
        %1607 = vmatprep.subr.mxu0 0.0
        %1608 = vmatpush1.msra.mxu0 0.0
        %1609 = vmatprep.subr.mxu0 0.0
        %1610 = vmatpush1.msra.mxu0 0.0
        %1611 = vmatprep.subr.mxu0 0.0
        %1612 = vmatpush1.msra.mxu0 0.0
        %1613 = vmatprep.subr.mxu0 0.0
        %1614 = vmatpush1.msra.mxu0 0.0
        %1615 = vmatprep.subr.mxu0 0.0
        %1616 = vmatpush1.msra.mxu0 0.0
        %1617 = vmatprep.subr.mxu0 0.0
        %1618 = vmatpush1.msra.mxu0 0.0
        %1619 = vmatprep.subr.mxu0 0.0
        %1620 = vmatpush1.msra.mxu0 0.0
        %1621 = vmatprep.subr.mxu0 0.0
        %1622 = vmatpush1.msra.mxu0 0.0
        %1623 = vmatprep.subr.mxu0 0.0
        %1624 = vmatpush1.msra.mxu0 0.0
        %1625 = vmatprep.subr.mxu0 0.0
        %1626 = vmatpush1.msra.mxu0 0.0
        %1627 = vmatprep.subr.mxu0 0.0
        %1628 = vmatpush1.msra.mxu0 0.0
        %1629 = vmatprep.subr.mxu0 0.0
        %1630 = vmatpush1.msra.mxu0 0.0
        %1631 = vmatprep.mubr.f32.mxu0 0.0
        %1632 = vmatmul.mubr.f32.gmra.mrb[0].mxu0 %v1409
        %v1633 = vpop.f32.mrb[0].mxu0
        %v1634 = vadd.f32 0.0, %v1633
        %v1635 = vpop.f32.mrb[0].mxu0
        %1636 = vdwg.mxu0
        %v1637 = vadd.f32 %v1566, %v1634
        %v1638 = vxor.u32 %v1637, 2147483648
        %v1639 = vmul.f32 %v1638, 1.442695
        %v1640 = vpow.pop %v1639
        %v1641 = vadd.f32 %v1640, 1.0
        %v1642 = vrcp.pop %v1641
        %v1643 = vmul.f32 1.0, %v1642
        %1644 = vrot.lane.b32.xlu0 %v1407, 16
        %v1645 = vpop.permute.xlu0 %1644
        %v1647 = vmul.f32 %v1643, %v1645
        %1649 = vrot.lane.b32.xlu0 %v1647, 112
        %v1650 = vpop.permute.xlu0 %1649
        %v1651 = vsel %vm1238, %v1650, 0
        %1653 = vmatprep.subr.mxu0 0.0
        %1654 = vmatpush1.msra.mxu0 %v998
        %1655 = vmatprep.subr.mxu0 0.0
        %1656 = vmatpush1.msra.mxu0 %v999
        %1657 = vmatprep.subr.mxu0 0.0
        %1658 = vmatpush1.msra.mxu0 0.0
        %1659 = vmatprep.subr.mxu0 0.0
        %1660 = vmatpush1.msra.mxu0 0.0
        %1661 = vmatprep.subr.mxu0 0.0
        %1662 = vmatpush1.msra.mxu0 0.0
        %1663 = vmatprep.subr.mxu0 0.0
        %1664 = vmatpush1.msra.mxu0 0.0
        %1665 = vmatprep.subr.mxu0 0.0
        %1666 = vmatpush1.msra.mxu0 0.0
        %1667 = vmatprep.subr.mxu0 0.0
        %1668 = vmatpush1.msra.mxu0 0.0
        %1669 = vmatprep.subr.mxu0 0.0
        %1670 = vmatpush1.msra.mxu0 0.0
        %1671 = vmatprep.subr.mxu0 0.0
        %1672 = vmatpush1.msra.mxu0 0.0
        %1673 = vmatprep.subr.mxu0 0.0
        %1674 = vmatpush1.msra.mxu0 0.0
        %1675 = vmatprep.subr.mxu0 0.0
        %1676 = vmatpush1.msra.mxu0 0.0
        %1677 = vmatprep.subr.mxu0 0.0
        %1678 = vmatpush1.msra.mxu0 0.0
        %1679 = vmatprep.subr.mxu0 0.0
        %1680 = vmatpush1.msra.mxu0 0.0
        %1681 = vmatprep.subr.mxu0 0.0
        %1682 = vmatpush1.msra.mxu0 0.0
        %1683 = vmatprep.subr.mxu0 0.0
        %1684 = vmatpush1.msra.mxu0 0.0
        %1685 = vmatprep.subr.mxu0 0.0
        %1686 = vmatpush1.msra.mxu0 0.0
        %1687 = vmatprep.subr.mxu0 0.0
        %1688 = vmatpush1.msra.mxu0 0.0
        %1689 = vmatprep.subr.mxu0 0.0
        %1690 = vmatpush1.msra.mxu0 0.0
        %1691 = vmatprep.subr.mxu0 0.0
        %1692 = vmatpush1.msra.mxu0 0.0
        %1693 = vmatprep.subr.mxu0 0.0
        %1694 = vmatpush1.msra.mxu0 0.0
        %1695 = vmatprep.subr.mxu0 0.0
        %1696 = vmatpush1.msra.mxu0 0.0
        %1697 = vmatprep.subr.mxu0 0.0
        %1698 = vmatpush1.msra.mxu0 0.0
        %1699 = vmatprep.subr.mxu0 0.0
        %1700 = vmatpush1.msra.mxu0 0.0
        %1701 = vmatprep.subr.mxu0 0.0
        %1702 = vmatpush1.msra.mxu0 0.0
        %1703 = vmatprep.subr.mxu0 0.0
        %1704 = vmatpush1.msra.mxu0 0.0
        %1705 = vmatprep.subr.mxu0 0.0
        %1706 = vmatpush1.msra.mxu0 0.0
        %1707 = vmatprep.subr.mxu0 0.0
        %1708 = vmatpush1.msra.mxu0 0.0
        %1709 = vmatprep.subr.mxu0 0.0
        %1710 = vmatpush1.msra.mxu0 0.0
        %1711 = vmatprep.subr.mxu0 0.0
        %1712 = vmatpush1.msra.mxu0 0.0
        %1713 = vmatprep.subr.mxu0 0.0
        %1714 = vmatpush1.msra.mxu0 0.0
        %1715 = vmatprep.subr.mxu0 0.0
        %1716 = vmatpush1.msra.mxu0 0.0
        %1717 = vmatprep.mubr.f32.mxu0 0.0
        %1718 = vmatmul.mubr.f32.gmra.mrb[0].mxu0 %v1651
        %v1719 = vpop.f32.mrb[0].mxu0
        %v1720 = vadd.f32 0.0, %v1719
        %v1721 = vpop.f32.mrb[0].mxu0
        %1722 = vdwg.mxu0
        %1724 = vrot.lane.b32.xlu0 %v1720, 32
        %v1725 = vpop.permute.xlu0 %1724
        %v1727 = vadd.f32 %v1566, %v1725
        %v1728 = vtanh.pop %v1727
        %v1729 = vmul.f32 %v1643, %v1407
        %v1730 = vsub.f32 1.0, %v1643
        %1732 = vrot.lane.b32.xlu0 %v1728, 96
        %v1733 = vpop.permute.xlu0 %1732
        %v1735 = vmul.f32 %v1730, %v1733
        %v1736 = vadd.f32 %v1729, %v1735
        %v1738 = vsel %vm1238, %v1736, 0
        %1740 = vmatprep.subr.mxu0 0.0
        %1741 = vmatpush1.msra.mxu0 %v993
        %1742 = vmatprep.subr.mxu0 0.0
        %1743 = vmatpush1.msra.mxu0 %v994
        %1744 = vmatprep.subr.mxu0 0.0
        %1745 = vmatpush1.msra.mxu0 0.0
        %1746 = vmatprep.subr.mxu0 0.0
        %1747 = vmatpush1.msra.mxu0 0.0
        %1748 = vmatprep.subr.mxu0 0.0
        %1749 = vmatpush1.msra.mxu0 0.0
        %1750 = vmatprep.subr.mxu0 0.0
        %1751 = vmatpush1.msra.mxu0 0.0
        %1752 = vmatprep.subr.mxu0 0.0
        %1753 = vmatpush1.msra.mxu0 0.0
        %1754 = vmatprep.subr.mxu0 0.0
        %1755 = vmatpush1.msra.mxu0 0.0
        %1756 = vmatprep.subr.mxu0 0.0
        %1757 = vmatpush1.msra.mxu0 0.0
        %1758 = vmatprep.subr.mxu0 0.0
        %1759 = vmatpush1.msra.mxu0 0.0
        %1760 = vmatprep.subr.mxu0 0.0
        %1761 = vmatpush1.msra.mxu0 0.0
        %1762 = vmatprep.subr.mxu0 0.0
        %1763 = vmatpush1.msra.mxu0 0.0
        %1764 = vmatprep.subr.mxu0 0.0
        %1765 = vmatpush1.msra.mxu0 0.0
        %1766 = vmatprep.subr.mxu0 0.0
        %1767 = vmatpush1.msra.mxu0 0.0
        %1768 = vmatprep.subr.mxu0 0.0
        %1769 = vmatpush1.msra.mxu0 0.0
        %1770 = vmatprep.subr.mxu0 0.0
        %1771 = vmatpush1.msra.mxu0 0.0
        %1772 = vmatprep.subr.mxu0 0.0
        %1773 = vmatpush1.msra.mxu0 0.0
        %1774 = vmatprep.subr.mxu0 0.0
        %1775 = vmatpush1.msra.mxu0 0.0
        %1776 = vmatprep.subr.mxu0 0.0
        %1777 = vmatpush1.msra.mxu0 0.0
        %1778 = vmatprep.subr.mxu0 0.0
        %1779 = vmatpush1.msra.mxu0 0.0
        %1780 = vmatprep.subr.mxu0 0.0
        %1781 = vmatpush1.msra.mxu0 0.0
        %1782 = vmatprep.subr.mxu0 0.0
        %1783 = vmatpush1.msra.mxu0 0.0
        %1784 = vmatprep.subr.mxu0 0.0
        %1785 = vmatpush1.msra.mxu0 0.0
        %1786 = vmatprep.subr.mxu0 0.0
        %1787 = vmatpush1.msra.mxu0 0.0
        %1788 = vmatprep.subr.mxu0 0.0
        %1789 = vmatpush1.msra.mxu0 0.0
        %1790 = vmatprep.subr.mxu0 0.0
        %1791 = vmatpush1.msra.mxu0 0.0
        %1792 = vmatprep.subr.mxu0 0.0
        %1793 = vmatpush1.msra.mxu0 0.0
        %1794 = vmatprep.subr.mxu0 0.0
        %1795 = vmatpush1.msra.mxu0 0.0
        %1796 = vmatprep.subr.mxu0 0.0
        %1797 = vmatpush1.msra.mxu0 0.0
        %1798 = vmatprep.subr.mxu0 0.0
        %1799 = vmatpush1.msra.mxu0 0.0
        %1800 = vmatprep.subr.mxu0 0.0
        %1801 = vmatpush1.msra.mxu0 0.0
        %1802 = vmatprep.subr.mxu0 0.0
        %1803 = vmatpush1.msra.mxu0 0.0
        %1804 = vmatprep.mubr.f32.mxu0 0.0
        %1805 = vmatmul.mubr.f32.gmra.mrb[0].mxu0 %v1738
        %v1806 = vpop.f32.mrb[0].mxu0
        %v1807 = vadd.f32 0.0, %v1806
        %v1808 = vpop.f32.mrb[0].mxu0
        %1809 = vdwg.mxu0
        %v1810 = vlaneseq
        %v1811 = vshrl.u32 %v1810, 7
        %v1812 = vsub.s32 1, %v1811
        %v1813 = vrot.slane %v992, %v1812
        %v1814 = vmul.f32 %v1813, %v1807
        %v1815 = vadd.f32 %v1486, %v1814
        %v1816 = vlaneseq
        %v1817 = vshrl.u32 %v1816, 7
        %v1818 = vsub.s32 2, %v1817
        %v1819 = vrot.slane %v1072, %v1818
        %v1820 = vmul.f32 %v769, %v1819
        %1821 = vrot.lane.b32.xlu0 %v1145, 124
        %v1822 = vpop.permute.xlu0 %1821
        %v1823 = vsel %vm1153, %v1822, 0
        %1825 = vmatprep.subr.mxu0 0.0
        %1826 = vmatpush1.msra.mxu0 %v1159
        %1827 = vmatprep.subr.mxu0 0.0
        %1828 = vmatpush1.msra.mxu0 0.0
        %1829 = vmatprep.subr.mxu0 0.0
        %1830 = vmatpush1.msra.mxu0 0.0
        %1831 = vmatprep.subr.mxu0 0.0
        %1832 = vmatpush1.msra.mxu0 0.0
        %1833 = vmatprep.subr.mxu0 0.0
        %1834 = vmatpush1.msra.mxu0 0.0
        %1835 = vmatprep.subr.mxu0 0.0
        %1836 = vmatpush1.msra.mxu0 0.0
        %1837 = vmatprep.subr.mxu0 0.0
        %1838 = vmatpush1.msra.mxu0 0.0
        %1839 = vmatprep.subr.mxu0 0.0
        %1840 = vmatpush1.msra.mxu0 0.0
        %1841 = vmatprep.subr.mxu0 0.0
        %1842 = vmatpush1.msra.mxu0 0.0
        %1843 = vmatprep.subr.mxu0 0.0
        %1844 = vmatpush1.msra.mxu0 0.0
        %1845 = vmatprep.subr.mxu0 0.0
        %1846 = vmatpush1.msra.mxu0 0.0
        %1847 = vmatprep.subr.mxu0 0.0
        %1848 = vmatpush1.msra.mxu0 0.0
        %1849 = vmatprep.subr.mxu0 0.0
        %1850 = vmatpush1.msra.mxu0 0.0
        %1851 = vmatprep.subr.mxu0 0.0
        %1852 = vmatpush1.msra.mxu0 0.0
        %1853 = vmatprep.subr.mxu0 0.0
        %1854 = vmatpush1.msra.mxu0 0.0
        %1855 = vmatprep.subr.mxu0 0.0
        %1856 = vmatpush1.msra.mxu0 0.0
        %1857 = vmatprep.subr.mxu0 0.0
        %1858 = vmatpush1.msra.mxu0 0.0
        %1859 = vmatprep.subr.mxu0 0.0
        %1860 = vmatpush1.msra.mxu0 0.0
        %1861 = vmatprep.subr.mxu0 0.0
        %1862 = vmatpush1.msra.mxu0 0.0
        %1863 = vmatprep.subr.mxu0 0.0
        %1864 = vmatpush1.msra.mxu0 0.0
        %1865 = vmatprep.subr.mxu0 0.0
        %1866 = vmatpush1.msra.mxu0 0.0
        %1867 = vmatprep.subr.mxu0 0.0
        %1868 = vmatpush1.msra.mxu0 0.0
        %1869 = vmatprep.subr.mxu0 0.0
        %1870 = vmatpush1.msra.mxu0 0.0
        %1871 = vmatprep.subr.mxu0 0.0
        %1872 = vmatpush1.msra.mxu0 0.0
        %1873 = vmatprep.subr.mxu0 0.0
        %1874 = vmatpush1.msra.mxu0 0.0
        %1875 = vmatprep.subr.mxu0 0.0
        %1876 = vmatpush1.msra.mxu0 0.0
        %1877 = vmatprep.subr.mxu0 0.0
        %1878 = vmatpush1.msra.mxu0 0.0
        %1879 = vmatprep.subr.mxu0 0.0
        %1880 = vmatpush1.msra.mxu0 0.0
        %1881 = vmatprep.subr.mxu0 0.0
        %1882 = vmatpush1.msra.mxu0 0.0
        %1883 = vmatprep.subr.mxu0 0.0
        %1884 = vmatpush1.msra.mxu0 0.0
        %1885 = vmatprep.subr.mxu0 0.0
        %1886 = vmatpush1.msra.mxu0 0.0
        %1887 = vmatprep.subr.mxu0 0.0
        %1888 = vmatpush1.msra.mxu0 0.0
        %1889 = vmatprep.mubr.f32.mxu0 0.0
        %1890 = vmatmul.mubr.f32.gmra.mrb[0].mxu0 %v1823
        %v1891 = vpop.f32.mrb[0].mxu0
        %v1892 = vadd.f32 %v1820, %v1891
        %v1893 = vpop.f32.mrb[0].mxu0
        %1894 = vdwg.mxu0
        %v1895 = vadd.f32 %v1892, %v1235
        %1896 = vmatprep.subr.mxu0 0.0
        %1897 = vmatpush1.msra.mxu0 %v996
        %1898 = vmatprep.subr.mxu0 0.0
        %1899 = vmatpush1.msra.mxu0 %v997
        %1900 = vmatprep.subr.mxu0 0.0
        %1901 = vmatpush1.msra.mxu0 0.0
        %1902 = vmatprep.subr.mxu0 0.0
        %1903 = vmatpush1.msra.mxu0 0.0
        %1904 = vmatprep.subr.mxu0 0.0
        %1905 = vmatpush1.msra.mxu0 0.0
        %1906 = vmatprep.subr.mxu0 0.0
        %1907 = vmatpush1.msra.mxu0 0.0
        %1908 = vmatprep.subr.mxu0 0.0
        %1909 = vmatpush1.msra.mxu0 0.0
        %1910 = vmatprep.subr.mxu0 0.0
        %1911 = vmatpush1.msra.mxu0 0.0
        %1912 = vmatprep.subr.mxu0 0.0
        %1913 = vmatpush1.msra.mxu0 0.0
        %1914 = vmatprep.subr.mxu0 0.0
        %1915 = vmatpush1.msra.mxu0 0.0
        %1916 = vmatprep.subr.mxu0 0.0
        %1917 = vmatpush1.msra.mxu0 0.0
        %1918 = vmatprep.subr.mxu0 0.0
        %1919 = vmatpush1.msra.mxu0 0.0
        %1920 = vmatprep.subr.mxu0 0.0
        %1921 = vmatpush1.msra.mxu0 0.0
        %1922 = vmatprep.subr.mxu0 0.0
        %1923 = vmatpush1.msra.mxu0 0.0
        %1924 = vmatprep.subr.mxu0 0.0
        %1925 = vmatpush1.msra.mxu0 0.0
        %1926 = vmatprep.subr.mxu0 0.0
        %1927 = vmatpush1.msra.mxu0 0.0
        %1928 = vmatprep.subr.mxu0 0.0
        %1929 = vmatpush1.msra.mxu0 0.0
        %1930 = vmatprep.subr.mxu0 0.0
        %1931 = vmatpush1.msra.mxu0 0.0
        %1932 = vmatprep.subr.mxu0 0.0
        %1933 = vmatpush1.msra.mxu0 0.0
        %1934 = vmatprep.subr.mxu0 0.0
        %1935 = vmatpush1.msra.mxu0 0.0
        %1936 = vmatprep.subr.mxu0 0.0
        %1937 = vmatpush1.msra.mxu0 0.0
        %1938 = vmatprep.subr.mxu0 0.0
        %1939 = vmatpush1.msra.mxu0 0.0
        %1940 = vmatprep.subr.mxu0 0.0
        %1941 = vmatpush1.msra.mxu0 0.0
        %1942 = vmatprep.subr.mxu0 0.0
        %1943 = vmatpush1.msra.mxu0 0.0
        %1944 = vmatprep.subr.mxu0 0.0
        %1945 = vmatpush1.msra.mxu0 0.0
        %1946 = vmatprep.subr.mxu0 0.0
        %1947 = vmatpush1.msra.mxu0 0.0
        %1948 = vmatprep.subr.mxu0 0.0
        %1949 = vmatpush1.msra.mxu0 0.0
        %1950 = vmatprep.subr.mxu0 0.0
        %1951 = vmatpush1.msra.mxu0 0.0
        %1952 = vmatprep.subr.mxu0 0.0
        %1953 = vmatpush1.msra.mxu0 0.0
        %1954 = vmatprep.subr.mxu0 0.0
        %1955 = vmatpush1.msra.mxu0 0.0
        %1956 = vmatprep.subr.mxu0 0.0
        %1957 = vmatpush1.msra.mxu0 0.0
        %1958 = vmatprep.subr.mxu0 0.0
        %1959 = vmatpush1.msra.mxu0 0.0
        %1960 = vmatprep.mubr.f32.mxu0 0.0
        %1961 = vmatmul.mubr.f32.gmra.mrb[0].mxu0 %v1738
        %v1962 = vpop.f32.mrb[0].mxu0
        %v1963 = vadd.f32 0.0, %v1962
        %v1964 = vpop.f32.mrb[0].mxu0
        %1965 = vdwg.mxu0
        %v1966 = vadd.f32 %v1895, %v1963
        %v1967 = vxor.u32 %v1966, 2147483648
        %v1968 = vmul.f32 %v1967, 1.442695
        %v1969 = vpow.pop %v1968
        %v1970 = vadd.f32 %v1969, 1.0
        %v1971 = vrcp.pop %v1970
        %v1972 = vmul.f32 1.0, %v1971
        %1973 = vrot.lane.b32.xlu0 %v1736, 16
        %v1974 = vpop.permute.xlu0 %1973
        %v1976 = vmul.f32 %v1972, %v1974
        %1978 = vrot.lane.b32.xlu0 %v1976, 112
        %v1979 = vpop.permute.xlu0 %1978
        %v1980 = vsel %vm1238, %v1979, 0
        %1982 = vmatprep.subr.mxu0 0.0
        %1983 = vmatpush1.msra.mxu0 %v998
        %1984 = vmatprep.subr.mxu0 0.0
        %1985 = vmatpush1.msra.mxu0 %v999
        %1986 = vmatprep.subr.mxu0 0.0
        %1987 = vmatpush1.msra.mxu0 0.0
        %1988 = vmatprep.subr.mxu0 0.0
        %1989 = vmatpush1.msra.mxu0 0.0
        %1990 = vmatprep.subr.mxu0 0.0
        %1991 = vmatpush1.msra.mxu0 0.0
        %1992 = vmatprep.subr.mxu0 0.0
        %1993 = vmatpush1.msra.mxu0 0.0
        %1994 = vmatprep.subr.mxu0 0.0
        %1995 = vmatpush1.msra.mxu0 0.0
        %1996 = vmatprep.subr.mxu0 0.0
        %1997 = vmatpush1.msra.mxu0 0.0
        %1998 = vmatprep.subr.mxu0 0.0
        %1999 = vmatpush1.msra.mxu0 0.0
        %2000 = vmatprep.subr.mxu0 0.0
        %2001 = vmatpush1.msra.mxu0 0.0
        %2002 = vmatprep.subr.mxu0 0.0
        %2003 = vmatpush1.msra.mxu0 0.0
        %2004 = vmatprep.subr.mxu0 0.0
        %2005 = vmatpush1.msra.mxu0 0.0
        %2006 = vmatprep.subr.mxu0 0.0
        %2007 = vmatpush1.msra.mxu0 0.0
        %2008 = vmatprep.subr.mxu0 0.0
        %2009 = vmatpush1.msra.mxu0 0.0
        %2010 = vmatprep.subr.mxu0 0.0
        %2011 = vmatpush1.msra.mxu0 0.0
        %2012 = vmatprep.subr.mxu0 0.0
        %2013 = vmatpush1.msra.mxu0 0.0
        %2014 = vmatprep.subr.mxu0 0.0
        %2015 = vmatpush1.msra.mxu0 0.0
        %2016 = vmatprep.subr.mxu0 0.0
        %2017 = vmatpush1.msra.mxu0 0.0
        %2018 = vmatprep.subr.mxu0 0.0
        %2019 = vmatpush1.msra.mxu0 0.0
        %2020 = vmatprep.subr.mxu0 0.0
        %2021 = vmatpush1.msra.mxu0 0.0
        %2022 = vmatprep.subr.mxu0 0.0
        %2023 = vmatpush1.msra.mxu0 0.0
        %2024 = vmatprep.subr.mxu0 0.0
        %2025 = vmatpush1.msra.mxu0 0.0
        %2026 = vmatprep.subr.mxu0 0.0
        %2027 = vmatpush1.msra.mxu0 0.0
        %2028 = vmatprep.subr.mxu0 0.0
        %2029 = vmatpush1.msra.mxu0 0.0
        %2030 = vmatprep.subr.mxu0 0.0
        %2031 = vmatpush1.msra.mxu0 0.0
        %2032 = vmatprep.subr.mxu0 0.0
        %2033 = vmatpush1.msra.mxu0 0.0
        %2034 = vmatprep.subr.mxu0 0.0
        %2035 = vmatpush1.msra.mxu0 0.0
        %2036 = vmatprep.subr.mxu0 0.0
        %2037 = vmatpush1.msra.mxu0 0.0
        %2038 = vmatprep.subr.mxu0 0.0
        %2039 = vmatpush1.msra.mxu0 0.0
        %2040 = vmatprep.subr.mxu0 0.0
        %2041 = vmatpush1.msra.mxu0 0.0
        %2042 = vmatprep.subr.mxu0 0.0
        %2043 = vmatpush1.msra.mxu0 0.0
        %2044 = vmatprep.subr.mxu0 0.0
        %2045 = vmatpush1.msra.mxu0 0.0
        %2046 = vmatprep.mubr.f32.mxu0 0.0
        %2047 = vmatmul.mubr.f32.gmra.mrb[0].mxu0 %v1980
        %v2048 = vpop.f32.mrb[0].mxu0
        %v2049 = vadd.f32 0.0, %v2048
        %v2050 = vpop.f32.mrb[0].mxu0
        %2051 = vdwg.mxu0
        %2053 = vrot.lane.b32.xlu0 %v2049, 32
        %v2054 = vpop.permute.xlu0 %2053
        %v2056 = vadd.f32 %v1895, %v2054
        %v2057 = vtanh.pop %v2056
        %v2058 = vmul.f32 %v1972, %v1736
        %v2059 = vsub.f32 1.0, %v1972
        %2061 = vrot.lane.b32.xlu0 %v2057, 96
        %v2062 = vpop.permute.xlu0 %2061
        %v2064 = vmul.f32 %v2059, %v2062
        %v2065 = vadd.f32 %v2058, %v2064
        %v2067 = vsel %vm1238, %v2065, 0
        %2069 = vmatprep.subr.mxu0 0.0
        %2070 = vmatpush1.msra.mxu0 %v993
        %2071 = vmatprep.subr.mxu0 0.0
        %2072 = vmatpush1.msra.mxu0 %v994
        %2073 = vmatprep.subr.mxu0 0.0
        %2074 = vmatpush1.msra.mxu0 0.0
        %2075 = vmatprep.subr.mxu0 0.0
        %2076 = vmatpush1.msra.mxu0 0.0
        %2077 = vmatprep.subr.mxu0 0.0
        %2078 = vmatpush1.msra.mxu0 0.0
        %2079 = vmatprep.subr.mxu0 0.0
        %2080 = vmatpush1.msra.mxu0 0.0
        %2081 = vmatprep.subr.mxu0 0.0
        %2082 = vmatpush1.msra.mxu0 0.0
        %2083 = vmatprep.subr.mxu0 0.0
        %2084 = vmatpush1.msra.mxu0 0.0
        %2085 = vmatprep.subr.mxu0 0.0
        %2086 = vmatpush1.msra.mxu0 0.0
        %2087 = vmatprep.subr.mxu0 0.0
        %2088 = vmatpush1.msra.mxu0 0.0
        %2089 = vmatprep.subr.mxu0 0.0
        %2090 = vmatpush1.msra.mxu0 0.0
        %2091 = vmatprep.subr.mxu0 0.0
        %2092 = vmatpush1.msra.mxu0 0.0
        %2093 = vmatprep.subr.mxu0 0.0
        %2094 = vmatpush1.msra.mxu0 0.0
        %2095 = vmatprep.subr.mxu0 0.0
        %2096 = vmatpush1.msra.mxu0 0.0
        %2097 = vmatprep.subr.mxu0 0.0
        %2098 = vmatpush1.msra.mxu0 0.0
        %2099 = vmatprep.subr.mxu0 0.0
        %2100 = vmatpush1.msra.mxu0 0.0
        %2101 = vmatprep.subr.mxu0 0.0
        %2102 = vmatpush1.msra.mxu0 0.0
        %2103 = vmatprep.subr.mxu0 0.0
        %2104 = vmatpush1.msra.mxu0 0.0
        %2105 = vmatprep.subr.mxu0 0.0
        %2106 = vmatpush1.msra.mxu0 0.0
        %2107 = vmatprep.subr.mxu0 0.0
        %2108 = vmatpush1.msra.mxu0 0.0
        %2109 = vmatprep.subr.mxu0 0.0
        %2110 = vmatpush1.msra.mxu0 0.0
        %2111 = vmatprep.subr.mxu0 0.0
        %2112 = vmatpush1.msra.mxu0 0.0
        %2113 = vmatprep.subr.mxu0 0.0
        %2114 = vmatpush1.msra.mxu0 0.0
        %2115 = vmatprep.subr.mxu0 0.0
        %2116 = vmatpush1.msra.mxu0 0.0
        %2117 = vmatprep.subr.mxu0 0.0
        %2118 = vmatpush1.msra.mxu0 0.0
        %2119 = vmatprep.subr.mxu0 0.0
        %2120 = vmatpush1.msra.mxu0 0.0
        %2121 = vmatprep.subr.mxu0 0.0
        %2122 = vmatpush1.msra.mxu0 0.0
        %2123 = vmatprep.subr.mxu0 0.0
        %2124 = vmatpush1.msra.mxu0 0.0
        %2125 = vmatprep.subr.mxu0 0.0
        %2126 = vmatpush1.msra.mxu0 0.0
        %2127 = vmatprep.subr.mxu0 0.0
        %2128 = vmatpush1.msra.mxu0 0.0
        %2129 = vmatprep.subr.mxu0 0.0
        %2130 = vmatpush1.msra.mxu0 0.0
        %2131 = vmatprep.subr.mxu0 0.0
        %2132 = vmatpush1.msra.mxu0 0.0
        %2133 = vmatprep.mubr.f32.mxu0 0.0
        %2134 = vmatmul.mubr.f32.gmra.mrb[0].mxu0 %v2067
        %v2135 = vpop.f32.mrb[0].mxu0
        %v2136 = vadd.f32 0.0, %v2135
        %v2137 = vpop.f32.mrb[0].mxu0
        %2138 = vdwg.mxu0
        %v2139 = vlaneseq
        %v2140 = vshrl.u32 %v2139, 7
        %v2141 = vsub.s32 2, %v2140
        %v2142 = vrot.slane %v992, %v2141
        %v2143 = vmul.f32 %v2142, %v2136
        %v2144 = vadd.f32 %v1815, %v2143
        %v2145 = vlaneseq
        %v2146 = vshrl.u32 %v2145, 7
        %v2147 = vsub.s32 3, %v2146
        %v2148 = vrot.slane %v1072, %v2147
        %v2149 = vmul.f32 %v769, %v2148
        %2150 = vrot.lane.b32.xlu0 %v1145, 122
        %v2151 = vpop.permute.xlu0 %2150
        %v2152 = vsel %vm1153, %v2151, 0
        %2154 = vmatprep.subr.mxu0 0.0
        %2155 = vmatpush1.msra.mxu0 %v1159
        %2156 = vmatprep.subr.mxu0 0.0
        %2157 = vmatpush1.msra.mxu0 0.0
        %2158 = vmatprep.subr.mxu0 0.0
        %2159 = vmatpush1.msra.mxu0 0.0
        %2160 = vmatprep.subr.mxu0 0.0
        %2161 = vmatpush1.msra.mxu0 0.0
        %2162 = vmatprep.subr.mxu0 0.0
        %2163 = vmatpush1.msra.mxu0 0.0
        %2164 = vmatprep.subr.mxu0 0.0
        %2165 = vmatpush1.msra.mxu0 0.0
        %2166 = vmatprep.subr.mxu0 0.0
        %2167 = vmatpush1.msra.mxu0 0.0
        %2168 = vmatprep.subr.mxu0 0.0
        %2169 = vmatpush1.msra.mxu0 0.0
        %2170 = vmatprep.subr.mxu0 0.0
        %2171 = vmatpush1.msra.mxu0 0.0
        %2172 = vmatprep.subr.mxu0 0.0
        %2173 = vmatpush1.msra.mxu0 0.0
        %2174 = vmatprep.subr.mxu0 0.0
        %2175 = vmatpush1.msra.mxu0 0.0
        %2176 = vmatprep.subr.mxu0 0.0
        %2177 = vmatpush1.msra.mxu0 0.0
        %2178 = vmatprep.subr.mxu0 0.0
        %2179 = vmatpush1.msra.mxu0 0.0
        %2180 = vmatprep.subr.mxu0 0.0
        %2181 = vmatpush1.msra.mxu0 0.0
        %2182 = vmatprep.subr.mxu0 0.0
        %2183 = vmatpush1.msra.mxu0 0.0
        %2184 = vmatprep.subr.mxu0 0.0
        %2185 = vmatpush1.msra.mxu0 0.0
        %2186 = vmatprep.subr.mxu0 0.0
        %2187 = vmatpush1.msra.mxu0 0.0
        %2188 = vmatprep.subr.mxu0 0.0
        %2189 = vmatpush1.msra.mxu0 0.0
        %2190 = vmatprep.subr.mxu0 0.0
        %2191 = vmatpush1.msra.mxu0 0.0
        %2192 = vmatprep.subr.mxu0 0.0
        %2193 = vmatpush1.msra.mxu0 0.0
        %2194 = vmatprep.subr.mxu0 0.0
        %2195 = vmatpush1.msra.mxu0 0.0
        %2196 = vmatprep.subr.mxu0 0.0
        %2197 = vmatpush1.msra.mxu0 0.0
        %2198 = vmatprep.subr.mxu0 0.0
        %2199 = vmatpush1.msra.mxu0 0.0
        %2200 = vmatprep.subr.mxu0 0.0
        %2201 = vmatpush1.msra.mxu0 0.0
        %2202 = vmatprep.subr.mxu0 0.0
        %2203 = vmatpush1.msra.mxu0 0.0
        %2204 = vmatprep.subr.mxu0 0.0
        %2205 = vmatpush1.msra.mxu0 0.0
        %2206 = vmatprep.subr.mxu0 0.0
        %2207 = vmatpush1.msra.mxu0 0.0
        %2208 = vmatprep.subr.mxu0 0.0
        %2209 = vmatpush1.msra.mxu0 0.0
        %2210 = vmatprep.subr.mxu0 0.0
        %2211 = vmatpush1.msra.mxu0 0.0
        %2212 = vmatprep.subr.mxu0 0.0
        %2213 = vmatpush1.msra.mxu0 0.0
        %2214 = vmatprep.subr.mxu0 0.0
        %2215 = vmatpush1.msra.mxu0 0.0
        %2216 = vmatprep.subr.mxu0 0.0
        %2217 = vmatpush1.msra.mxu0 0.0
        %2218 = vmatprep.mubr.f32.mxu0 0.0
        %2219 = vmatmul.mubr.f32.gmra.mrb[0].mxu0 %v2152
        %v2220 = vpop.f32.mrb[0].mxu0
        %v2221 = vadd.f32 %v2149, %v2220
        %v2222 = vpop.f32.mrb[0].mxu0
        %2223 = vdwg.mxu0
        %v2224 = vadd.f32 %v2221, %v1235
        %2225 = vmatprep.subr.mxu0 0.0
        %2226 = vmatpush1.msra.mxu0 %v996
        %2227 = vmatprep.subr.mxu0 0.0
        %2228 = vmatpush1.msra.mxu0 %v997
        %2229 = vmatprep.subr.mxu0 0.0
        %2230 = vmatpush1.msra.mxu0 0.0
        %2231 = vmatprep.subr.mxu0 0.0
        %2232 = vmatpush1.msra.mxu0 0.0
        %2233 = vmatprep.subr.mxu0 0.0
        %2234 = vmatpush1.msra.mxu0 0.0
        %2235 = vmatprep.subr.mxu0 0.0
        %2236 = vmatpush1.msra.mxu0 0.0
        %2237 = vmatprep.subr.mxu0 0.0
        %2238 = vmatpush1.msra.mxu0 0.0
        %2239 = vmatprep.subr.mxu0 0.0
        %2240 = vmatpush1.msra.mxu0 0.0
        %2241 = vmatprep.subr.mxu0 0.0
        %2242 = vmatpush1.msra.mxu0 0.0
        %2243 = vmatprep.subr.mxu0 0.0
        %2244 = vmatpush1.msra.mxu0 0.0
        %2245 = vmatprep.subr.mxu0 0.0
        %2246 = vmatpush1.msra.mxu0 0.0
        %2247 = vmatprep.subr.mxu0 0.0
        %2248 = vmatpush1.msra.mxu0 0.0
        %2249 = vmatprep.subr.mxu0 0.0
        %2250 = vmatpush1.msra.mxu0 0.0
        %2251 = vmatprep.subr.mxu0 0.0
        %2252 = vmatpush1.msra.mxu0 0.0
        %2253 = vmatprep.subr.mxu0 0.0
        %2254 = vmatpush1.msra.mxu0 0.0
        %2255 = vmatprep.subr.mxu0 0.0
        %2256 = vmatpush1.msra.mxu0 0.0
        %2257 = vmatprep.subr.mxu0 0.0
        %2258 = vmatpush1.msra.mxu0 0.0
        %2259 = vmatprep.subr.mxu0 0.0
        %2260 = vmatpush1.msra.mxu0 0.0
        %2261 = vmatprep.subr.mxu0 0.0
        %2262 = vmatpush1.msra.mxu0 0.0
        %2263 = vmatprep.subr.mxu0 0.0
        %2264 = vmatpush1.msra.mxu0 0.0
        %2265 = vmatprep.subr.mxu0 0.0
        %2266 = vmatpush1.msra.mxu0 0.0
        %2267 = vmatprep.subr.mxu0 0.0
        %2268 = vmatpush1.msra.mxu0 0.0
        %2269 = vmatprep.subr.mxu0 0.0
        %2270 = vmatpush1.msra.mxu0 0.0
        %2271 = vmatprep.subr.mxu0 0.0
        %2272 = vmatpush1.msra.mxu0 0.0
        %2273 = vmatprep.subr.mxu0 0.0
        %2274 = vmatpush1.msra.mxu0 0.0
        %2275 = vmatprep.subr.mxu0 0.0
        %2276 = vmatpush1.msra.mxu0 0.0
        %2277 = vmatprep.subr.mxu0 0.0
        %2278 = vmatpush1.msra.mxu0 0.0
        %2279 = vmatprep.subr.mxu0 0.0
        %2280 = vmatpush1.msra.mxu0 0.0
        %2281 = vmatprep.subr.mxu0 0.0
        %2282 = vmatpush1.msra.mxu0 0.0
        %2283 = vmatprep.subr.mxu0 0.0
        %2284 = vmatpush1.msra.mxu0 0.0
        %2285 = vmatprep.subr.mxu0 0.0
        %2286 = vmatpush1.msra.mxu0 0.0
        %2287 = vmatprep.subr.mxu0 0.0
        %2288 = vmatpush1.msra.mxu0 0.0
        %2289 = vmatprep.mubr.f32.mxu0 0.0
        %2290 = vmatmul.mubr.f32.gmra.mrb[0].mxu0 %v2067
        %v2291 = vpop.f32.mrb[0].mxu0
        %v2292 = vadd.f32 0.0, %v2291
        %v2293 = vpop.f32.mrb[0].mxu0
        %2294 = vdwg.mxu0
        %v2295 = vadd.f32 %v2224, %v2292
        %v2296 = vxor.u32 %v2295, 2147483648
        %v2297 = vmul.f32 %v2296, 1.442695
        %v2298 = vpow.pop %v2297
        %v2299 = vadd.f32 %v2298, 1.0
        %v2300 = vrcp.pop %v2299
        %v2301 = vmul.f32 1.0, %v2300
        %2302 = vrot.lane.b32.xlu0 %v2065, 16
        %v2303 = vpop.permute.xlu0 %2302
        %v2305 = vmul.f32 %v2301, %v2303
        %2307 = vrot.lane.b32.xlu0 %v2305, 112
        %v2308 = vpop.permute.xlu0 %2307
        %v2309 = vsel %vm1238, %v2308, 0
        %2311 = vmatprep.subr.mxu0 0.0
        %2312 = vmatpush1.msra.mxu0 %v998
        %2313 = vmatprep.subr.mxu0 0.0
        %2314 = vmatpush1.msra.mxu0 %v999
        %2315 = vmatprep.subr.mxu0 0.0
        %2316 = vmatpush1.msra.mxu0 0.0
        %2317 = vmatprep.subr.mxu0 0.0
        %2318 = vmatpush1.msra.mxu0 0.0
        %2319 = vmatprep.subr.mxu0 0.0
        %2320 = vmatpush1.msra.mxu0 0.0
        %2321 = vmatprep.subr.mxu0 0.0
        %2322 = vmatpush1.msra.mxu0 0.0
        %2323 = vmatprep.subr.mxu0 0.0
        %2324 = vmatpush1.msra.mxu0 0.0
        %2325 = vmatprep.subr.mxu0 0.0
        %2326 = vmatpush1.msra.mxu0 0.0
        %2327 = vmatprep.subr.mxu0 0.0
        %2328 = vmatpush1.msra.mxu0 0.0
        %2329 = vmatprep.subr.mxu0 0.0
        %2330 = vmatpush1.msra.mxu0 0.0
        %2331 = vmatprep.subr.mxu0 0.0
        %2332 = vmatpush1.msra.mxu0 0.0
        %2333 = vmatprep.subr.mxu0 0.0
        %2334 = vmatpush1.msra.mxu0 0.0
        %2335 = vmatprep.subr.mxu0 0.0
        %2336 = vmatpush1.msra.mxu0 0.0
        %2337 = vmatprep.subr.mxu0 0.0
        %2338 = vmatpush1.msra.mxu0 0.0
        %2339 = vmatprep.subr.mxu0 0.0
        %2340 = vmatpush1.msra.mxu0 0.0
        %2341 = vmatprep.subr.mxu0 0.0
        %2342 = vmatpush1.msra.mxu0 0.0
        %2343 = vmatprep.subr.mxu0 0.0
        %2344 = vmatpush1.msra.mxu0 0.0
        %2345 = vmatprep.subr.mxu0 0.0
        %2346 = vmatpush1.msra.mxu0 0.0
        %2347 = vmatprep.subr.mxu0 0.0
        %2348 = vmatpush1.msra.mxu0 0.0
        %2349 = vmatprep.subr.mxu0 0.0
        %2350 = vmatpush1.msra.mxu0 0.0
        %2351 = vmatprep.subr.mxu0 0.0
        %2352 = vmatpush1.msra.mxu0 0.0
        %2353 = vmatprep.subr.mxu0 0.0
        %2354 = vmatpush1.msra.mxu0 0.0
        %2355 = vmatprep.subr.mxu0 0.0
        %2356 = vmatpush1.msra.mxu0 0.0
        %2357 = vmatprep.subr.mxu0 0.0
        %2358 = vmatpush1.msra.mxu0 0.0
        %2359 = vmatprep.subr.mxu0 0.0
        %2360 = vmatpush1.msra.mxu0 0.0
        %2361 = vmatprep.subr.mxu0 0.0
        %2362 = vmatpush1.msra.mxu0 0.0
        %2363 = vmatprep.subr.mxu0 0.0
        %2364 = vmatpush1.msra.mxu0 0.0
        %2365 = vmatprep.subr.mxu0 0.0
        %2366 = vmatpush1.msra.mxu0 0.0
        %2367 = vmatprep.subr.mxu0 0.0
        %2368 = vmatpush1.msra.mxu0 0.0
        %2369 = vmatprep.subr.mxu0 0.0
        %2370 = vmatpush1.msra.mxu0 0.0
        %2371 = vmatprep.subr.mxu0 0.0
        %2372 = vmatpush1.msra.mxu0 0.0
        %2373 = vmatprep.subr.mxu0 0.0
        %2374 = vmatpush1.msra.mxu0 0.0
        %2375 = vmatprep.mubr.f32.mxu0 0.0
        %2376 = vmatmul.mubr.f32.gmra.mrb[0].mxu0 %v2309
        %v2377 = vpop.f32.mrb[0].mxu0
        %v2378 = vadd.f32 0.0, %v2377
        %v2379 = vpop.f32.mrb[0].mxu0
        %2380 = vdwg.mxu0
        %2382 = vrot.lane.b32.xlu0 %v2378, 32
        %v2383 = vpop.permute.xlu0 %2382
        %v2385 = vadd.f32 %v2224, %v2383
        %v2386 = vtanh.pop %v2385
        %v2387 = vmul.f32 %v2301, %v2065
        %v2388 = vsub.f32 1.0, %v2301
        %2390 = vrot.lane.b32.xlu0 %v2386, 96
        %v2391 = vpop.permute.xlu0 %2390
        %v2393 = vmul.f32 %v2388, %v2391
        %v2394 = vadd.f32 %v2387, %v2393
        %v2396 = vsel %vm1238, %v2394, 0
        %2398 = vmatprep.subr.mxu0 0.0
        %2399 = vmatpush1.msra.mxu0 %v993
        %2400 = vmatprep.subr.mxu0 0.0
        %2401 = vmatpush1.msra.mxu0 %v994
        %2402 = vmatprep.subr.mxu0 0.0
        %2403 = vmatpush1.msra.mxu0 0.0
        %2404 = vmatprep.subr.mxu0 0.0
        %2405 = vmatpush1.msra.mxu0 0.0
        %2406 = vmatprep.subr.mxu0 0.0
        %2407 = vmatpush1.msra.mxu0 0.0
        %2408 = vmatprep.subr.mxu0 0.0
        %2409 = vmatpush1.msra.mxu0 0.0
        %2410 = vmatprep.subr.mxu0 0.0
        %2411 = vmatpush1.msra.mxu0 0.0
        %2412 = vmatprep.subr.mxu0 0.0
        %2413 = vmatpush1.msra.mxu0 0.0
        %2414 = vmatprep.subr.mxu0 0.0
        %2415 = vmatpush1.msra.mxu0 0.0
        %2416 = vmatprep.subr.mxu0 0.0
        %2417 = vmatpush1.msra.mxu0 0.0
        %2418 = vmatprep.subr.mxu0 0.0
        %2419 = vmatpush1.msra.mxu0 0.0
        %2420 = vmatprep.subr.mxu0 0.0
        %2421 = vmatpush1.msra.mxu0 0.0
        %2422 = vmatprep.subr.mxu0 0.0
        %2423 = vmatpush1.msra.mxu0 0.0
        %2424 = vmatprep.subr.mxu0 0.0
        %2425 = vmatpush1.msra.mxu0 0.0
        %2426 = vmatprep.subr.mxu0 0.0
        %2427 = vmatpush1.msra.mxu0 0.0
        %2428 = vmatprep.subr.mxu0 0.0
        %2429 = vmatpush1.msra.mxu0 0.0
        %2430 = vmatprep.subr.mxu0 0.0
        %2431 = vmatpush1.msra.mxu0 0.0
        %2432 = vmatprep.subr.mxu0 0.0
        %2433 = vmatpush1.msra.mxu0 0.0
        %2434 = vmatprep.subr.mxu0 0.0
        %2435 = vmatpush1.msra.mxu0 0.0
        %2436 = vmatprep.subr.mxu0 0.0
        %2437 = vmatpush1.msra.mxu0 0.0
        %2438 = vmatprep.subr.mxu0 0.0
        %2439 = vmatpush1.msra.mxu0 0.0
        %2440 = vmatprep.subr.mxu0 0.0
        %2441 = vmatpush1.msra.mxu0 0.0
        %2442 = vmatprep.subr.mxu0 0.0
        %2443 = vmatpush1.msra.mxu0 0.0
        %2444 = vmatprep.subr.mxu0 0.0
        %2445 = vmatpush1.msra.mxu0 0.0
        %2446 = vmatprep.subr.mxu0 0.0
        %2447 = vmatpush1.msra.mxu0 0.0
        %2448 = vmatprep.subr.mxu0 0.0
        %2449 = vmatpush1.msra.mxu0 0.0
        %2450 = vmatprep.subr.mxu0 0.0
        %2451 = vmatpush1.msra.mxu0 0.0
        %2452 = vmatprep.subr.mxu0 0.0
        %2453 = vmatpush1.msra.mxu0 0.0
        %2454 = vmatprep.subr.mxu0 0.0
        %2455 = vmatpush1.msra.mxu0 0.0
        %2456 = vmatprep.subr.mxu0 0.0
        %2457 = vmatpush1.msra.mxu0 0.0
        %2458 = vmatprep.subr.mxu0 0.0
        %2459 = vmatpush1.msra.mxu0 0.0
        %2460 = vmatprep.subr.mxu0 0.0
        %2461 = vmatpush1.msra.mxu0 0.0
        %2462 = vmatprep.mubr.f32.mxu0 0.0
        %2463 = vmatmul.mubr.f32.gmra.mrb[0].mxu0 %v2396
        %v2464 = vpop.f32.mrb[0].mxu0
        %v2465 = vadd.f32 0.0, %v2464
        %v2466 = vpop.f32.mrb[0].mxu0
        %2467 = vdwg.mxu0
        %v2468 = vlaneseq
        %v2469 = vshrl.u32 %v2468, 7
        %v2470 = vsub.s32 3, %v2469
        %v2471 = vrot.slane %v992, %v2470
        %v2472 = vmul.f32 %v2471, %v2465
        %v2473 = vadd.f32 %v2144, %v2472
        %v2474 = vld [vmem:[%s12] sm:$0xff]
        %v2475 = vld [vmem:[%s12 + $0x8] sm:$0xff]
        %v2477 = vsel %vm1238, %v2473, 0
        %2479 = vmatprep.subr.mxu0 0.0
        %2480 = vmatpush1.msra.mxu0 %v2474
        %2481 = vmatprep.subr.mxu0 0.0
        %2482 = vmatpush1.msra.mxu0 %v2475
        %2483 = vmatprep.subr.mxu0 0.0
        %2484 = vmatpush1.msra.mxu0 0.0
        %2485 = vmatprep.subr.mxu0 0.0
        %2486 = vmatpush1.msra.mxu0 0.0
        %2487 = vmatprep.subr.mxu0 0.0
        %2488 = vmatpush1.msra.mxu0 0.0
        %2489 = vmatprep.subr.mxu0 0.0
        %2490 = vmatpush1.msra.mxu0 0.0
        %2491 = vmatprep.subr.mxu0 0.0
        %2492 = vmatpush1.msra.mxu0 0.0
        %2493 = vmatprep.subr.mxu0 0.0
        %2494 = vmatpush1.msra.mxu0 0.0
        %2495 = vmatprep.subr.mxu0 0.0
        %2496 = vmatpush1.msra.mxu0 0.0
        %2497 = vmatprep.subr.mxu0 0.0
        %2498 = vmatpush1.msra.mxu0 0.0
        %2499 = vmatprep.subr.mxu0 0.0
        %2500 = vmatpush1.msra.mxu0 0.0
        %2501 = vmatprep.subr.mxu0 0.0
        %2502 = vmatpush1.msra.mxu0 0.0
        %2503 = vmatprep.subr.mxu0 0.0
        %2504 = vmatpush1.msra.mxu0 0.0
        %2505 = vmatprep.subr.mxu0 0.0
        %2506 = vmatpush1.msra.mxu0 0.0
        %2507 = vmatprep.subr.mxu0 0.0
        %2508 = vmatpush1.msra.mxu0 0.0
        %2509 = vmatprep.subr.mxu0 0.0
        %2510 = vmatpush1.msra.mxu0 0.0
        %2511 = vmatprep.subr.mxu0 0.0
        %2512 = vmatpush1.msra.mxu0 0.0
        %2513 = vmatprep.subr.mxu0 0.0
        %2514 = vmatpush1.msra.mxu0 0.0
        %2515 = vmatprep.subr.mxu0 0.0
        %2516 = vmatpush1.msra.mxu0 0.0
        %2517 = vmatprep.subr.mxu0 0.0
        %2518 = vmatpush1.msra.mxu0 0.0
        %2519 = vmatprep.subr.mxu0 0.0
        %2520 = vmatpush1.msra.mxu0 0.0
        %2521 = vmatprep.subr.mxu0 0.0
        %2522 = vmatpush1.msra.mxu0 0.0
        %2523 = vmatprep.subr.mxu0 0.0
        %2524 = vmatpush1.msra.mxu0 0.0
        %2525 = vmatprep.subr.mxu0 0.0
        %2526 = vmatpush1.msra.mxu0 0.0
        %2527 = vmatprep.subr.mxu0 0.0
        %2528 = vmatpush1.msra.mxu0 0.0
        %2529 = vmatprep.subr.mxu0 0.0
        %2530 = vmatpush1.msra.mxu0 0.0
        %2531 = vmatprep.subr.mxu0 0.0
        %2532 = vmatpush1.msra.mxu0 0.0
        %2533 = vmatprep.subr.mxu0 0.0
        %2534 = vmatpush1.msra.mxu0 0.0
        %2535 = vmatprep.subr.mxu0 0.0
        %2536 = vmatpush1.msra.mxu0 0.0
        %2537 = vmatprep.subr.mxu0 0.0
        %2538 = vmatpush1.msra.mxu0 0.0
        %2539 = vmatprep.subr.mxu0 0.0
        %2540 = vmatpush1.msra.mxu0 0.0
        %2541 = vmatprep.subr.mxu0 0.0
        %2542 = vmatpush1.msra.mxu0 0.0
        %2543 = vmatprep.mubr.f32.mxu0 0.0
        %2544 = vmatmul.mubr.f32.gmra.mrb[0].mxu0 %v2477
        %v2545 = vpop.f32.mrb[0].mxu0
        %v2546 = vadd.f32 %v2394, %v2545
        %v2547 = vpop.f32.mrb[0].mxu0
        %2548 = vdwg.mxu0
        %v2549 = vld [vmem:[#allocation7] sm:$0x3]
        %v2550 = vld [vmem:[%s15] sm:$0xff]
        %v2551 = vld [vmem:[%s15 + $0x8] sm:$0xff]
        %v2552 = vld [vmem:[#allocation10] sm:$0xff]
        %v2553 = vld [vmem:[#allocation10 + $0x8] sm:$0xff]
        %v2554 = vld [vmem:[#allocation12] sm:$0x1]
        %v2555 = vld [vmem:[#allocation9] sm:$0xf]
        %v2557 = vsel %vm781, %v765, 0
        %v2560 = vsel %vm785, %v2555, 0
        %2562 = vmatprep.subr.mxu0 0.0
        %2563 = vmatpush1.msra.mxu0 %v2560
        %2564 = vmatprep.subr.mxu0 0.0
        %2565 = vmatpush1.msra.mxu0 0.0
        %2566 = vmatprep.subr.mxu0 0.0
        %2567 = vmatpush1.msra.mxu0 0.0
        %2568 = vmatprep.subr.mxu0 0.0
        %2569 = vmatpush1.msra.mxu0 0.0
        %2570 = vmatprep.subr.mxu0 0.0
        %2571 = vmatpush1.msra.mxu0 0.0
        %2572 = vmatprep.subr.mxu0 0.0
        %2573 = vmatpush1.msra.mxu0 0.0
        %2574 = vmatprep.subr.mxu0 0.0
        %2575 = vmatpush1.msra.mxu0 0.0
        %2576 = vmatprep.subr.mxu0 0.0
        %2577 = vmatpush1.msra.mxu0 0.0
        %2578 = vmatprep.subr.mxu0 0.0
        %2579 = vmatpush1.msra.mxu0 0.0
        %2580 = vmatprep.subr.mxu0 0.0
        %2581 = vmatpush1.msra.mxu0 0.0
        %2582 = vmatprep.subr.mxu0 0.0
        %2583 = vmatpush1.msra.mxu0 0.0
        %2584 = vmatprep.subr.mxu0 0.0
        %2585 = vmatpush1.msra.mxu0 0.0
        %2586 = vmatprep.subr.mxu0 0.0
        %2587 = vmatpush1.msra.mxu0 0.0
        %2588 = vmatprep.subr.mxu0 0.0
        %2589 = vmatpush1.msra.mxu0 0.0
        %2590 = vmatprep.subr.mxu0 0.0
        %2591 = vmatpush1.msra.mxu0 0.0
        %2592 = vmatprep.subr.mxu0 0.0
        %2593 = vmatpush1.msra.mxu0 0.0
        %2594 = vmatprep.subr.mxu0 0.0
        %2595 = vmatpush1.msra.mxu0 0.0
        %2596 = vmatprep.subr.mxu0 0.0
        %2597 = vmatpush1.msra.mxu0 0.0
        %2598 = vmatprep.subr.mxu0 0.0
        %2599 = vmatpush1.msra.mxu0 0.0
        %2600 = vmatprep.subr.mxu0 0.0
        %2601 = vmatpush1.msra.mxu0 0.0
        %2602 = vmatprep.subr.mxu0 0.0
        %2603 = vmatpush1.msra.mxu0 0.0
        %2604 = vmatprep.subr.mxu0 0.0
        %2605 = vmatpush1.msra.mxu0 0.0
        %2606 = vmatprep.subr.mxu0 0.0
        %2607 = vmatpush1.msra.mxu0 0.0
        %2608 = vmatprep.subr.mxu0 0.0
        %2609 = vmatpush1.msra.mxu0 0.0
        %2610 = vmatprep.subr.mxu0 0.0
        %2611 = vmatpush1.msra.mxu0 0.0
        %2612 = vmatprep.subr.mxu0 0.0
        %2613 = vmatpush1.msra.mxu0 0.0
        %2614 = vmatprep.subr.mxu0 0.0
        %2615 = vmatpush1.msra.mxu0 0.0
        %2616 = vmatprep.subr.mxu0 0.0
        %2617 = vmatpush1.msra.mxu0 0.0
        %2618 = vmatprep.subr.mxu0 0.0
        %2619 = vmatpush1.msra.mxu0 0.0
        %2620 = vmatprep.subr.mxu0 0.0
        %2621 = vmatpush1.msra.mxu0 0.0
        %2622 = vmatprep.subr.mxu0 0.0
        %2623 = vmatpush1.msra.mxu0 0.0
        %2624 = vmatprep.subr.mxu0 0.0
        %2625 = vmatpush1.msra.mxu0 0.0
        %2626 = vmatprep.mubr.f32.mxu0 0.0
        %2627 = vmatmul.mubr.f32.gmra.mrb[0].mxu0 %v2557
        %v2628 = vpop.f32.mrb[0].mxu0
        %v2629 = vadd.f32 0.0, %v2628
        %v2630 = vpop.f32.mrb[0].mxu0
        %2631 = vdwg.mxu0
        %v2632 = vld [vmem:[%s18] sm:$0xff]
        %v2633 = vld [vmem:[%s18 + $0x8] sm:$0xff]
        %v2634 = vld [vmem:[#allocation13] sm:$0x1]
        %2635 = vmatprep.subr.mxu0 0.0
        %2636 = vmatpush1.msra.mxu0 0.0
        %2637 = vmatprep.subr.mxu0 0.0
        %2638 = vmatpush1.msra.mxu0 0.0
        %2639 = vmatprep.subr.mxu0 0.0
        %2640 = vmatpush1.msra.mxu0 0.0
        %2641 = vmatprep.subr.mxu0 0.0
        %2642 = vmatpush1.msra.mxu0 0.0
        %2643 = vmatprep.subr.mxu0 0.0
        %2644 = vmatpush1.msra.mxu0 0.0
        %2645 = vmatprep.subr.mxu0 0.0
        %2646 = vmatpush1.msra.mxu0 0.0
        %2647 = vmatprep.subr.mxu0 0.0
        %2648 = vmatpush1.msra.mxu0 0.0
        %2649 = vmatprep.subr.mxu0 0.0
        %2650 = vmatpush1.msra.mxu0 0.0
        %2651 = vmatprep.subr.mxu0 0.0
        %2652 = vmatpush1.msra.mxu0 0.0
        %2653 = vmatprep.subr.mxu0 0.0
        %2654 = vmatpush1.msra.mxu0 0.0
        %2655 = vmatprep.subr.mxu0 0.0
        %2656 = vmatpush1.msra.mxu0 0.0
        %2657 = vmatprep.subr.mxu0 0.0
        %2658 = vmatpush1.msra.mxu0 0.0
        %2659 = vmatprep.subr.mxu0 0.0
        %2660 = vmatpush1.msra.mxu0 0.0
        %2661 = vmatprep.subr.mxu0 0.0
        %2662 = vmatpush1.msra.mxu0 0.0
        %2663 = vmatprep.subr.mxu0 0.0
        %2664 = vmatpush1.msra.mxu0 0.0
        %2665 = vmatprep.subr.mxu0 0.0
        %2666 = vmatpush1.msra.mxu0 0.0
        %2667 = vmatprep.subr.mxu0 0.0
        %2668 = vmatpush1.msra.mxu0 0.0
        %2669 = vmatprep.subr.mxu0 0.0
        %2670 = vmatpush1.msra.mxu0 0.0
        %2671 = vmatprep.subr.mxu0 0.0
        %2672 = vmatpush1.msra.mxu0 0.0
        %2673 = vmatprep.subr.mxu0 0.0
        %2674 = vmatpush1.msra.mxu0 0.0
        %2675 = vmatprep.subr.mxu0 0.0
        %2676 = vmatpush1.msra.mxu0 0.0
        %2677 = vmatprep.subr.mxu0 0.0
        %2678 = vmatpush1.msra.mxu0 0.0
        %2679 = vmatprep.subr.mxu0 0.0
        %2680 = vmatpush1.msra.mxu0 0.0
        %2681 = vmatprep.subr.mxu0 0.0
        %2682 = vmatpush1.msra.mxu0 0.0
        %2683 = vmatprep.subr.mxu0 0.0
        %2684 = vmatpush1.msra.mxu0 0.0
        %2685 = vmatprep.subr.mxu0 0.0
        %2686 = vmatpush1.msra.mxu0 0.0
        %2687 = vmatprep.subr.mxu0 0.0
        %2688 = vmatpush1.msra.mxu0 0.0
        %2689 = vmatprep.subr.mxu0 0.0
        %2690 = vmatpush1.msra.mxu0 0.0
        %2691 = vmatprep.subr.mxu0 0.0
        %2692 = vmatpush1.msra.mxu0 0.0
        %2693 = vmatprep.subr.mxu0 0.0
        %2694 = vmatpush1.msra.mxu0 0.0
        %2695 = vmatprep.subr.mxu0 0.0
        %2696 = vmatpush1.msra.mxu0 0.0
        %2697 = vmatprep.subr.mxu0 0.0
        %2698 = vmatpush1.msra.mxu0 0.0
        %2699 = vmatprep.mubr.f32.mxu0 0.0
        %2700 = vmatmul.mubr.f32.gmra.mrb[0].mxu0 %v1076
        %v2701 = vpop.f32.mrb[0].mxu0
        %v2702 = vadd.f32 0.0, %v2701
        %v2703 = vpop.f32.mrb[0].mxu0
        %2704 = vdwg.mxu0
        %v2705 = vlaneseq
        %v2706 = vshrl.u32 %v2705, 7
        %v2707 = vsub.s32 0, %v2706
        %v2708 = vrot.slane %v2629, %v2707
        %v2709 = vmul.f32 %v769, %v2708
        %v2711 = vsel %vm1153, %v2702, 0
        %v2714 = vsel %vm1157, %v2549, 0
        %2716 = vmatprep.subr.mxu0 0.0
        %2717 = vmatpush1.msra.mxu0 %v2714
        %2718 = vmatprep.subr.mxu0 0.0
        %2719 = vmatpush1.msra.mxu0 0.0
        %2720 = vmatprep.subr.mxu0 0.0
        %2721 = vmatpush1.msra.mxu0 0.0
        %2722 = vmatprep.subr.mxu0 0.0
        %2723 = vmatpush1.msra.mxu0 0.0
        %2724 = vmatprep.subr.mxu0 0.0
        %2725 = vmatpush1.msra.mxu0 0.0
        %2726 = vmatprep.subr.mxu0 0.0
        %2727 = vmatpush1.msra.mxu0 0.0
        %2728 = vmatprep.subr.mxu0 0.0
        %2729 = vmatpush1.msra.mxu0 0.0
        %2730 = vmatprep.subr.mxu0 0.0
        %2731 = vmatpush1.msra.mxu0 0.0
        %2732 = vmatprep.subr.mxu0 0.0
        %2733 = vmatpush1.msra.mxu0 0.0
        %2734 = vmatprep.subr.mxu0 0.0
        %2735 = vmatpush1.msra.mxu0 0.0
        %2736 = vmatprep.subr.mxu0 0.0
        %2737 = vmatpush1.msra.mxu0 0.0
        %2738 = vmatprep.subr.mxu0 0.0
        %2739 = vmatpush1.msra.mxu0 0.0
        %2740 = vmatprep.subr.mxu0 0.0
        %2741 = vmatpush1.msra.mxu0 0.0
        %2742 = vmatprep.subr.mxu0 0.0
        %2743 = vmatpush1.msra.mxu0 0.0
        %2744 = vmatprep.subr.mxu0 0.0
        %2745 = vmatpush1.msra.mxu0 0.0
        %2746 = vmatprep.subr.mxu0 0.0
        %2747 = vmatpush1.msra.mxu0 0.0
        %2748 = vmatprep.subr.mxu0 0.0
        %2749 = vmatpush1.msra.mxu0 0.0
        %2750 = vmatprep.subr.mxu0 0.0
        %2751 = vmatpush1.msra.mxu0 0.0
        %2752 = vmatprep.subr.mxu0 0.0
        %2753 = vmatpush1.msra.mxu0 0.0
        %2754 = vmatprep.subr.mxu0 0.0
        %2755 = vmatpush1.msra.mxu0 0.0
        %2756 = vmatprep.subr.mxu0 0.0
        %2757 = vmatpush1.msra.mxu0 0.0
        %2758 = vmatprep.subr.mxu0 0.0
        %2759 = vmatpush1.msra.mxu0 0.0
        %2760 = vmatprep.subr.mxu0 0.0
        %2761 = vmatpush1.msra.mxu0 0.0
        %2762 = vmatprep.subr.mxu0 0.0
        %2763 = vmatpush1.msra.mxu0 0.0
        %2764 = vmatprep.subr.mxu0 0.0
        %2765 = vmatpush1.msra.mxu0 0.0
        %2766 = vmatprep.subr.mxu0 0.0
        %2767 = vmatpush1.msra.mxu0 0.0
        %2768 = vmatprep.subr.mxu0 0.0
        %2769 = vmatpush1.msra.mxu0 0.0
        %2770 = vmatprep.subr.mxu0 0.0
        %2771 = vmatpush1.msra.mxu0 0.0
        %2772 = vmatprep.subr.mxu0 0.0
        %2773 = vmatpush1.msra.mxu0 0.0
        %2774 = vmatprep.subr.mxu0 0.0
        %2775 = vmatpush1.msra.mxu0 0.0
        %2776 = vmatprep.subr.mxu0 0.0
        %2777 = vmatpush1.msra.mxu0 0.0
        %2778 = vmatprep.subr.mxu0 0.0
        %2779 = vmatpush1.msra.mxu0 0.0
        %2780 = vmatprep.mubr.f32.mxu0 0.0
        %2781 = vmatmul.mubr.f32.gmra.mrb[0].mxu0 %v2711
        %v2782 = vpop.f32.mrb[0].mxu0
        %v2783 = vadd.f32 %v2709, %v2782
        %v2784 = vpop.f32.mrb[0].mxu0
        %2785 = vdwg.mxu0
        %v2787 = vlaneseq
        %v2788 = vshrl.u32 %v2787, 7
        %v2789 = vsub.s32 0, %v2788
        %v2790 = vrot.slane %v2554, %v2789
        %v2792 = vadd.f32 %v2783, %v2790
        %v2794 = vsel %vm1238, %v2546, 0
        %2796 = vmatprep.subr.mxu0 0.0
        %2797 = vmatpush1.msra.mxu0 %v2550
        %2798 = vmatprep.subr.mxu0 0.0
        %2799 = vmatpush1.msra.mxu0 %v2551
        %2800 = vmatprep.subr.mxu0 0.0
        %2801 = vmatpush1.msra.mxu0 0.0
        %2802 = vmatprep.subr.mxu0 0.0
        %2803 = vmatpush1.msra.mxu0 0.0
        %2804 = vmatprep.subr.mxu0 0.0
        %2805 = vmatpush1.msra.mxu0 0.0
        %2806 = vmatprep.subr.mxu0 0.0
        %2807 = vmatpush1.msra.mxu0 0.0
        %2808 = vmatprep.subr.mxu0 0.0
        %2809 = vmatpush1.msra.mxu0 0.0
        %2810 = vmatprep.subr.mxu0 0.0
        %2811 = vmatpush1.msra.mxu0 0.0
        %2812 = vmatprep.subr.mxu0 0.0
        %2813 = vmatpush1.msra.mxu0 0.0
        %2814 = vmatprep.subr.mxu0 0.0
        %2815 = vmatpush1.msra.mxu0 0.0
        %2816 = vmatprep.subr.mxu0 0.0
        %2817 = vmatpush1.msra.mxu0 0.0
        %2818 = vmatprep.subr.mxu0 0.0
        %2819 = vmatpush1.msra.mxu0 0.0
        %2820 = vmatprep.subr.mxu0 0.0
        %2821 = vmatpush1.msra.mxu0 0.0
        %2822 = vmatprep.subr.mxu0 0.0
        %2823 = vmatpush1.msra.mxu0 0.0
        %2824 = vmatprep.subr.mxu0 0.0
        %2825 = vmatpush1.msra.mxu0 0.0
        %2826 = vmatprep.subr.mxu0 0.0
        %2827 = vmatpush1.msra.mxu0 0.0
        %2828 = vmatprep.subr.mxu0 0.0
        %2829 = vmatpush1.msra.mxu0 0.0
        %2830 = vmatprep.subr.mxu0 0.0
        %2831 = vmatpush1.msra.mxu0 0.0
        %2832 = vmatprep.subr.mxu0 0.0
        %2833 = vmatpush1.msra.mxu0 0.0
        %2834 = vmatprep.subr.mxu0 0.0
        %2835 = vmatpush1.msra.mxu0 0.0
        %2836 = vmatprep.subr.mxu0 0.0
        %2837 = vmatpush1.msra.mxu0 0.0
        %2838 = vmatprep.subr.mxu0 0.0
        %2839 = vmatpush1.msra.mxu0 0.0
        %2840 = vmatprep.subr.mxu0 0.0
        %2841 = vmatpush1.msra.mxu0 0.0
        %2842 = vmatprep.subr.mxu0 0.0
        %2843 = vmatpush1.msra.mxu0 0.0
        %2844 = vmatprep.subr.mxu0 0.0
        %2845 = vmatpush1.msra.mxu0 0.0
        %2846 = vmatprep.subr.mxu0 0.0
        %2847 = vmatpush1.msra.mxu0 0.0
        %2848 = vmatprep.subr.mxu0 0.0
        %2849 = vmatpush1.msra.mxu0 0.0
        %2850 = vmatprep.subr.mxu0 0.0
        %2851 = vmatpush1.msra.mxu0 0.0
        %2852 = vmatprep.subr.mxu0 0.0
        %2853 = vmatpush1.msra.mxu0 0.0
        %2854 = vmatprep.subr.mxu0 0.0
        %2855 = vmatpush1.msra.mxu0 0.0
        %2856 = vmatprep.subr.mxu0 0.0
        %2857 = vmatpush1.msra.mxu0 0.0
        %2858 = vmatprep.subr.mxu0 0.0
        %2859 = vmatpush1.msra.mxu0 0.0
        %2860 = vmatprep.mubr.f32.mxu0 0.0
        %2861 = vmatmul.mubr.f32.gmra.mrb[0].mxu0 %v2794
        %v2862 = vpop.f32.mrb[0].mxu0
        %v2863 = vadd.f32 0.0, %v2862
        %v2864 = vpop.f32.mrb[0].mxu0
        %2865 = vdwg.mxu0
        %v2866 = vadd.f32 %v2792, %v2863
        %v2867 = vxor.u32 %v2866, 2147483648
        %v2868 = vmul.f32 %v2867, 1.442695
        %v2869 = vpow.pop %v2868
        %v2870 = vadd.f32 %v2869, 1.0
        %v2871 = vrcp.pop %v2870
        %v2872 = vmul.f32 1.0, %v2871
        %2873 = vrot.lane.b32.xlu0 %v2546, 16
        %v2874 = vpop.permute.xlu0 %2873
        %v2876 = vmul.f32 %v2872, %v2874
        %2878 = vrot.lane.b32.xlu0 %v2876, 112
        %v2879 = vpop.permute.xlu0 %2878
        %v2880 = vsel %vm1238, %v2879, 0
        %2882 = vmatprep.subr.mxu0 0.0
        %2883 = vmatpush1.msra.mxu0 %v2552
        %2884 = vmatprep.subr.mxu0 0.0
        %2885 = vmatpush1.msra.mxu0 %v2553
        %2886 = vmatprep.subr.mxu0 0.0
        %2887 = vmatpush1.msra.mxu0 0.0
        %2888 = vmatprep.subr.mxu0 0.0
        %2889 = vmatpush1.msra.mxu0 0.0
        %2890 = vmatprep.subr.mxu0 0.0
        %2891 = vmatpush1.msra.mxu0 0.0
        %2892 = vmatprep.subr.mxu0 0.0
        %2893 = vmatpush1.msra.mxu0 0.0
        %2894 = vmatprep.subr.mxu0 0.0
        %2895 = vmatpush1.msra.mxu0 0.0
        %2896 = vmatprep.subr.mxu0 0.0
        %2897 = vmatpush1.msra.mxu0 0.0
        %2898 = vmatprep.subr.mxu0 0.0
        %2899 = vmatpush1.msra.mxu0 0.0
        %2900 = vmatprep.subr.mxu0 0.0
        %2901 = vmatpush1.msra.mxu0 0.0
        %2902 = vmatprep.subr.mxu0 0.0
        %2903 = vmatpush1.msra.mxu0 0.0
        %2904 = vmatprep.subr.mxu0 0.0
        %2905 = vmatpush1.msra.mxu0 0.0
        %2906 = vmatprep.subr.mxu0 0.0
        %2907 = vmatpush1.msra.mxu0 0.0
        %2908 = vmatprep.subr.mxu0 0.0
        %2909 = vmatpush1.msra.mxu0 0.0
        %2910 = vmatprep.subr.mxu0 0.0
        %2911 = vmatpush1.msra.mxu0 0.0
        %2912 = vmatprep.subr.mxu0 0.0
        %2913 = vmatpush1.msra.mxu0 0.0
        %2914 = vmatprep.subr.mxu0 0.0
        %2915 = vmatpush1.msra.mxu0 0.0
        %2916 = vmatprep.subr.mxu0 0.0
        %2917 = vmatpush1.msra.mxu0 0.0
        %2918 = vmatprep.subr.mxu0 0.0
        %2919 = vmatpush1.msra.mxu0 0.0
        %2920 = vmatprep.subr.mxu0 0.0
        %2921 = vmatpush1.msra.mxu0 0.0
        %2922 = vmatprep.subr.mxu0 0.0
        %2923 = vmatpush1.msra.mxu0 0.0
        %2924 = vmatprep.subr.mxu0 0.0
        %2925 = vmatpush1.msra.mxu0 0.0
        %2926 = vmatprep.subr.mxu0 0.0
        %2927 = vmatpush1.msra.mxu0 0.0
        %2928 = vmatprep.subr.mxu0 0.0
        %2929 = vmatpush1.msra.mxu0 0.0
        %2930 = vmatprep.subr.mxu0 0.0
        %2931 = vmatpush1.msra.mxu0 0.0
        %2932 = vmatprep.subr.mxu0 0.0
        %2933 = vmatpush1.msra.mxu0 0.0
        %2934 = vmatprep.subr.mxu0 0.0
        %2935 = vmatpush1.msra.mxu0 0.0
        %2936 = vmatprep.subr.mxu0 0.0
        %2937 = vmatpush1.msra.mxu0 0.0
        %2938 = vmatprep.subr.mxu0 0.0
        %2939 = vmatpush1.msra.mxu0 0.0
        %2940 = vmatprep.subr.mxu0 0.0
        %2941 = vmatpush1.msra.mxu0 0.0
        %2942 = vmatprep.subr.mxu0 0.0
        %2943 = vmatpush1.msra.mxu0 0.0
        %2944 = vmatprep.subr.mxu0 0.0
        %2945 = vmatpush1.msra.mxu0 0.0
        %2946 = vmatprep.mubr.f32.mxu0 0.0
        %2947 = vmatmul.mubr.f32.gmra.mrb[0].mxu0 %v2880
        %v2948 = vpop.f32.mrb[0].mxu0
        %v2949 = vadd.f32 0.0, %v2948
        %v2950 = vpop.f32.mrb[0].mxu0
        %2951 = vdwg.mxu0
        %2953 = vrot.lane.b32.xlu0 %v2949, 32
        %v2954 = vpop.permute.xlu0 %2953
        %v2956 = vadd.f32 %v2792, %v2954
        %v2957 = vtanh.pop %v2956
        %v2958 = vmul.f32 %v2872, %v2546
        %v2959 = vsub.f32 1.0, %v2872
        %2961 = vrot.lane.b32.xlu0 %v2957, 96
        %v2962 = vpop.permute.xlu0 %2961
        %v2964 = vmul.f32 %v2959, %v2962
        %v2965 = vadd.f32 %v2958, %v2964
        %v2967 = vlaneseq
        %v2968 = vshrl.u32 %v2967, 7
        %v2969 = vsub.s32 0, %v2968
        %v2970 = vrot.slane %v2634, %v2969
        %v2973 = vsel %vm1238, %v2965, 0
        %2975 = vmatprep.subr.mxu0 0.0
        %2976 = vmatpush1.msra.mxu0 %v2632
        %2977 = vmatprep.subr.mxu0 0.0
        %2978 = vmatpush1.msra.mxu0 %v2633
        %2979 = vmatprep.subr.mxu0 0.0
        %2980 = vmatpush1.msra.mxu0 0.0
        %2981 = vmatprep.subr.mxu0 0.0
        %2982 = vmatpush1.msra.mxu0 0.0
        %2983 = vmatprep.subr.mxu0 0.0
        %2984 = vmatpush1.msra.mxu0 0.0
        %2985 = vmatprep.subr.mxu0 0.0
        %2986 = vmatpush1.msra.mxu0 0.0
        %2987 = vmatprep.subr.mxu0 0.0
        %2988 = vmatpush1.msra.mxu0 0.0
        %2989 = vmatprep.subr.mxu0 0.0
        %2990 = vmatpush1.msra.mxu0 0.0
        %2991 = vmatprep.subr.mxu0 0.0
        %2992 = vmatpush1.msra.mxu0 0.0
        %2993 = vmatprep.subr.mxu0 0.0
        %2994 = vmatpush1.msra.mxu0 0.0
        %2995 = vmatprep.subr.mxu0 0.0
        %2996 = vmatpush1.msra.mxu0 0.0
        %2997 = vmatprep.subr.mxu0 0.0
        %2998 = vmatpush1.msra.mxu0 0.0
        %2999 = vmatprep.subr.mxu0 0.0
        %3000 = vmatpush1.msra.mxu0 0.0
        %3001 = vmatprep.subr.mxu0 0.0
        %3002 = vmatpush1.msra.mxu0 0.0
        %3003 = vmatprep.subr.mxu0 0.0
        %3004 = vmatpush1.msra.mxu0 0.0
        %3005 = vmatprep.subr.mxu0 0.0
        %3006 = vmatpush1.msra.mxu0 0.0
        %3007 = vmatprep.subr.mxu0 0.0
        %3008 = vmatpush1.msra.mxu0 0.0
        %3009 = vmatprep.subr.mxu0 0.0
        %3010 = vmatpush1.msra.mxu0 0.0
        %3011 = vmatprep.subr.mxu0 0.0
        %3012 = vmatpush1.msra.mxu0 0.0
        %3013 = vmatprep.subr.mxu0 0.0
        %3014 = vmatpush1.msra.mxu0 0.0
        %3015 = vmatprep.subr.mxu0 0.0
        %3016 = vmatpush1.msra.mxu0 0.0
        %3017 = vmatprep.subr.mxu0 0.0
        %3018 = vmatpush1.msra.mxu0 0.0
        %3019 = vmatprep.subr.mxu0 0.0
        %3020 = vmatpush1.msra.mxu0 0.0
        %3021 = vmatprep.subr.mxu0 0.0
        %3022 = vmatpush1.msra.mxu0 0.0
        %3023 = vmatprep.subr.mxu0 0.0
        %3024 = vmatpush1.msra.mxu0 0.0
        %3025 = vmatprep.subr.mxu0 0.0
        %3026 = vmatpush1.msra.mxu0 0.0
        %3027 = vmatprep.subr.mxu0 0.0
        %3028 = vmatpush1.msra.mxu0 0.0
        %3029 = vmatprep.subr.mxu0 0.0
        %3030 = vmatpush1.msra.mxu0 0.0
        %3031 = vmatprep.subr.mxu0 0.0
        %3032 = vmatpush1.msra.mxu0 0.0
        %3033 = vmatprep.subr.mxu0 0.0
        %3034 = vmatpush1.msra.mxu0 0.0
        %3035 = vmatprep.subr.mxu0 0.0
        %3036 = vmatpush1.msra.mxu0 0.0
        %3037 = vmatprep.subr.mxu0 0.0
        %3038 = vmatpush1.msra.mxu0 0.0
        %3039 = vmatprep.mubr.f32.mxu0 0.0
        %3040 = vmatmul.mubr.f32.gmra.mrb[0].mxu0 %v2973
        %v3041 = vpop.f32.mrb[0].mxu0
        %v3042 = vadd.f32 %v2970, %v3041
        %v3043 = vpop.f32.mrb[0].mxu0
        %3044 = vdwg.mxu0
        %3045 = vmatprep.subr.mxu0 0.0
        %3046 = vmatpush1.msra.mxu0 %v3042
        %3047 = vmatprep.subr.mxu0 0.0
        %3048 = vmatpush1.msra.mxu0 0.0
        %3049 = vmatprep.subr.mxu0 0.0
        %3050 = vmatpush1.msra.mxu0 0.0
        %3051 = vmatprep.subr.mxu0 0.0
        %3052 = vmatpush1.msra.mxu0 0.0
        %3053 = vmatprep.subr.mxu0 0.0
        %3054 = vmatpush1.msra.mxu0 0.0
        %3055 = vmatprep.subr.mxu0 0.0
        %3056 = vmatpush1.msra.mxu0 0.0
        %3057 = vmatprep.subr.mxu0 0.0
        %3058 = vmatpush1.msra.mxu0 0.0
        %3059 = vmatprep.subr.mxu0 0.0
        %3060 = vmatpush1.msra.mxu0 0.0
        %3061 = vmatprep.subr.mxu0 0.0
        %3062 = vmatpush1.msra.mxu0 0.0
        %3063 = vmatprep.subr.mxu0 0.0
        %3064 = vmatpush1.msra.mxu0 0.0
        %3065 = vmatprep.subr.mxu0 0.0
        %3066 = vmatpush1.msra.mxu0 0.0
        %3067 = vmatprep.subr.mxu0 0.0
        %3068 = vmatpush1.msra.mxu0 0.0
        %3069 = vmatprep.subr.mxu0 0.0
        %3070 = vmatpush1.msra.mxu0 0.0
        %3071 = vmatprep.subr.mxu0 0.0
        %3072 = vmatpush1.msra.mxu0 0.0
        %3073 = vmatprep.subr.mxu0 0.0
        %3074 = vmatpush1.msra.mxu0 0.0
        %3075 = vmatprep.subr.mxu0 0.0
        %3076 = vmatpush1.msra.mxu0 0.0
        %3077 = vmatprep.subr.mxu0 0.0
        %3078 = vmatpush1.msra.mxu0 0.0
        %3079 = vmatprep.subr.mxu0 0.0
        %3080 = vmatpush1.msra.mxu0 0.0
        %3081 = vmatprep.subr.mxu0 0.0
        %3082 = vmatpush1.msra.mxu0 0.0
        %3083 = vmatprep.subr.mxu0 0.0
        %3084 = vmatpush1.msra.mxu0 0.0
        %3085 = vmatprep.subr.mxu0 0.0
        %3086 = vmatpush1.msra.mxu0 0.0
        %3087 = vmatprep.subr.mxu0 0.0
        %3088 = vmatpush1.msra.mxu0 0.0
        %3089 = vmatprep.subr.mxu0 0.0
        %3090 = vmatpush1.msra.mxu0 0.0
        %3091 = vmatprep.subr.mxu0 0.0
        %3092 = vmatpush1.msra.mxu0 0.0
        %3093 = vmatprep.subr.mxu0 0.0
        %3094 = vmatpush1.msra.mxu0 0.0
        %3095 = vmatprep.subr.mxu0 0.0
        %3096 = vmatpush1.msra.mxu0 0.0
        %3097 = vmatprep.subr.mxu0 0.0
        %3098 = vmatpush1.msra.mxu0 0.0
        %3099 = vmatprep.subr.mxu0 0.0
        %3100 = vmatpush1.msra.mxu0 0.0
        %3101 = vmatprep.subr.mxu0 0.0
        %3102 = vmatpush1.msra.mxu0 0.0
        %3103 = vmatprep.subr.mxu0 0.0
        %3104 = vmatpush1.msra.mxu0 0.0
        %3105 = vmatprep.subr.mxu0 0.0
        %3106 = vmatpush1.msra.mxu0 0.0
        %3107 = vmatprep.subr.mxu0 0.0
        %3108 = vmatpush1.msra.mxu0 0.0
        %3109 = vmatprep.mubr.f32.mxu0 0.0
        %3110 = vmatmul.mubr.f32.gmra.mrb[0].mxu0 %v1076
        %v3111 = vpop.f32.mrb[0].mxu0
        %v3112 = vadd.f32 0.0, %v3111
        %v3113 = vpop.f32.mrb[0].mxu0
        %3114 = vdwg.mxu0
        %v3115 = vlaneseq
        %v3116 = vshrl.u32 %v3115, 7
        %v3117 = vsub.s32 1, %v3116
        %v3118 = vrot.slane %v2629, %v3117
        %v3119 = vmul.f32 %v769, %v3118
        %v3121 = vsel %vm1153, %v3112, 0
        %3123 = vmatprep.subr.mxu0 0.0
        %3124 = vmatpush1.msra.mxu0 %v2714
        %3125 = vmatprep.subr.mxu0 0.0
        %3126 = vmatpush1.msra.mxu0 0.0
        %3127 = vmatprep.subr.mxu0 0.0
        %3128 = vmatpush1.msra.mxu0 0.0
        %3129 = vmatprep.subr.mxu0 0.0
        %3130 = vmatpush1.msra.mxu0 0.0
        %3131 = vmatprep.subr.mxu0 0.0
        %3132 = vmatpush1.msra.mxu0 0.0
        %3133 = vmatprep.subr.mxu0 0.0
        %3134 = vmatpush1.msra.mxu0 0.0
        %3135 = vmatprep.subr.mxu0 0.0
        %3136 = vmatpush1.msra.mxu0 0.0
        %3137 = vmatprep.subr.mxu0 0.0
        %3138 = vmatpush1.msra.mxu0 0.0
        %3139 = vmatprep.subr.mxu0 0.0
        %3140 = vmatpush1.msra.mxu0 0.0
        %3141 = vmatprep.subr.mxu0 0.0
        %3142 = vmatpush1.msra.mxu0 0.0
        %3143 = vmatprep.subr.mxu0 0.0
        %3144 = vmatpush1.msra.mxu0 0.0
        %3145 = vmatprep.subr.mxu0 0.0
        %3146 = vmatpush1.msra.mxu0 0.0
        %3147 = vmatprep.subr.mxu0 0.0
        %3148 = vmatpush1.msra.mxu0 0.0
        %3149 = vmatprep.subr.mxu0 0.0
        %3150 = vmatpush1.msra.mxu0 0.0
        %3151 = vmatprep.subr.mxu0 0.0
        %3152 = vmatpush1.msra.mxu0 0.0
        %3153 = vmatprep.subr.mxu0 0.0
        %3154 = vmatpush1.msra.mxu0 0.0
        %3155 = vmatprep.subr.mxu0 0.0
        %3156 = vmatpush1.msra.mxu0 0.0
        %3157 = vmatprep.subr.mxu0 0.0
        %3158 = vmatpush1.msra.mxu0 0.0
        %3159 = vmatprep.subr.mxu0 0.0
        %3160 = vmatpush1.msra.mxu0 0.0
        %3161 = vmatprep.subr.mxu0 0.0
        %3162 = vmatpush1.msra.mxu0 0.0
        %3163 = vmatprep.subr.mxu0 0.0
        %3164 = vmatpush1.msra.mxu0 0.0
        %3165 = vmatprep.subr.mxu0 0.0
        %3166 = vmatpush1.msra.mxu0 0.0
        %3167 = vmatprep.subr.mxu0 0.0
        %3168 = vmatpush1.msra.mxu0 0.0
        %3169 = vmatprep.subr.mxu0 0.0
        %3170 = vmatpush1.msra.mxu0 0.0
        %3171 = vmatprep.subr.mxu0 0.0
        %3172 = vmatpush1.msra.mxu0 0.0
        %3173 = vmatprep.subr.mxu0 0.0
        %3174 = vmatpush1.msra.mxu0 0.0
        %3175 = vmatprep.subr.mxu0 0.0
        %3176 = vmatpush1.msra.mxu0 0.0
        %3177 = vmatprep.subr.mxu0 0.0
        %3178 = vmatpush1.msra.mxu0 0.0
        %3179 = vmatprep.subr.mxu0 0.0
        %3180 = vmatpush1.msra.mxu0 0.0
        %3181 = vmatprep.subr.mxu0 0.0
        %3182 = vmatpush1.msra.mxu0 0.0
        %3183 = vmatprep.subr.mxu0 0.0
        %3184 = vmatpush1.msra.mxu0 0.0
        %3185 = vmatprep.subr.mxu0 0.0
        %3186 = vmatpush1.msra.mxu0 0.0
        %3187 = vmatprep.mubr.f32.mxu0 0.0
        %3188 = vmatmul.mubr.f32.gmra.mrb[0].mxu0 %v3121
        %v3189 = vpop.f32.mrb[0].mxu0
        %v3190 = vadd.f32 %v3119, %v3189
        %v3191 = vpop.f32.mrb[0].mxu0
        %3192 = vdwg.mxu0
        %v3193 = vadd.f32 %v3190, %v2790
        %3194 = vmatprep.subr.mxu0 0.0
        %3195 = vmatpush1.msra.mxu0 %v2550
        %3196 = vmatprep.subr.mxu0 0.0
        %3197 = vmatpush1.msra.mxu0 %v2551
        %3198 = vmatprep.subr.mxu0 0.0
        %3199 = vmatpush1.msra.mxu0 0.0
        %3200 = vmatprep.subr.mxu0 0.0
        %3201 = vmatpush1.msra.mxu0 0.0
        %3202 = vmatprep.subr.mxu0 0.0
        %3203 = vmatpush1.msra.mxu0 0.0
        %3204 = vmatprep.subr.mxu0 0.0
        %3205 = vmatpush1.msra.mxu0 0.0
        %3206 = vmatprep.subr.mxu0 0.0
        %3207 = vmatpush1.msra.mxu0 0.0
        %3208 = vmatprep.subr.mxu0 0.0
        %3209 = vmatpush1.msra.mxu0 0.0
        %3210 = vmatprep.subr.mxu0 0.0
        %3211 = vmatpush1.msra.mxu0 0.0
        %3212 = vmatprep.subr.mxu0 0.0
        %3213 = vmatpush1.msra.mxu0 0.0
        %3214 = vmatprep.subr.mxu0 0.0
        %3215 = vmatpush1.msra.mxu0 0.0
        %3216 = vmatprep.subr.mxu0 0.0
        %3217 = vmatpush1.msra.mxu0 0.0
        %3218 = vmatprep.subr.mxu0 0.0
        %3219 = vmatpush1.msra.mxu0 0.0
        %3220 = vmatprep.subr.mxu0 0.0
        %3221 = vmatpush1.msra.mxu0 0.0
        %3222 = vmatprep.subr.mxu0 0.0
        %3223 = vmatpush1.msra.mxu0 0.0
        %3224 = vmatprep.subr.mxu0 0.0
        %3225 = vmatpush1.msra.mxu0 0.0
        %3226 = vmatprep.subr.mxu0 0.0
        %3227 = vmatpush1.msra.mxu0 0.0
        %3228 = vmatprep.subr.mxu0 0.0
        %3229 = vmatpush1.msra.mxu0 0.0
        %3230 = vmatprep.subr.mxu0 0.0
        %3231 = vmatpush1.msra.mxu0 0.0
        %3232 = vmatprep.subr.mxu0 0.0
        %3233 = vmatpush1.msra.mxu0 0.0
        %3234 = vmatprep.subr.mxu0 0.0
        %3235 = vmatpush1.msra.mxu0 0.0
        %3236 = vmatprep.subr.mxu0 0.0
        %3237 = vmatpush1.msra.mxu0 0.0
        %3238 = vmatprep.subr.mxu0 0.0
        %3239 = vmatpush1.msra.mxu0 0.0
        %3240 = vmatprep.subr.mxu0 0.0
        %3241 = vmatpush1.msra.mxu0 0.0
        %3242 = vmatprep.subr.mxu0 0.0
        %3243 = vmatpush1.msra.mxu0 0.0
        %3244 = vmatprep.subr.mxu0 0.0
        %3245 = vmatpush1.msra.mxu0 0.0
        %3246 = vmatprep.subr.mxu0 0.0
        %3247 = vmatpush1.msra.mxu0 0.0
        %3248 = vmatprep.subr.mxu0 0.0
        %3249 = vmatpush1.msra.mxu0 0.0
        %3250 = vmatprep.subr.mxu0 0.0
        %3251 = vmatpush1.msra.mxu0 0.0
        %3252 = vmatprep.subr.mxu0 0.0
        %3253 = vmatpush1.msra.mxu0 0.0
        %3254 = vmatprep.subr.mxu0 0.0
        %3255 = vmatpush1.msra.mxu0 0.0
        %3256 = vmatprep.subr.mxu0 0.0
        %3257 = vmatpush1.msra.mxu0 0.0
        %3258 = vmatprep.mubr.f32.mxu0 0.0
        %3259 = vmatmul.mubr.f32.gmra.mrb[0].mxu0 %v2973
        %v3260 = vpop.f32.mrb[0].mxu0
        %v3261 = vadd.f32 0.0, %v3260
        %v3262 = vpop.f32.mrb[0].mxu0
        %3263 = vdwg.mxu0
        %v3264 = vadd.f32 %v3193, %v3261
        %v3265 = vxor.u32 %v3264, 2147483648
        %v3266 = vmul.f32 %v3265, 1.442695
        %v3267 = vpow.pop %v3266
        %v3268 = vadd.f32 %v3267, 1.0
        %v3269 = vrcp.pop %v3268
        %v3270 = vmul.f32 1.0, %v3269
        %3271 = vrot.lane.b32.xlu0 %v2965, 16
        %v3272 = vpop.permute.xlu0 %3271
        %v3274 = vmul.f32 %v3270, %v3272
        %3276 = vrot.lane.b32.xlu0 %v3274, 112
        %v3277 = vpop.permute.xlu0 %3276
        %v3278 = vsel %vm1238, %v3277, 0
        %3280 = vmatprep.subr.mxu0 0.0
        %3281 = vmatpush1.msra.mxu0 %v2552
        %3282 = vmatprep.subr.mxu0 0.0
        %3283 = vmatpush1.msra.mxu0 %v2553
        %3284 = vmatprep.subr.mxu0 0.0
        %3285 = vmatpush1.msra.mxu0 0.0
        %3286 = vmatprep.subr.mxu0 0.0
        %3287 = vmatpush1.msra.mxu0 0.0
        %3288 = vmatprep.subr.mxu0 0.0
        %3289 = vmatpush1.msra.mxu0 0.0
        %3290 = vmatprep.subr.mxu0 0.0
        %3291 = vmatpush1.msra.mxu0 0.0
        %3292 = vmatprep.subr.mxu0 0.0
        %3293 = vmatpush1.msra.mxu0 0.0
        %3294 = vmatprep.subr.mxu0 0.0
        %3295 = vmatpush1.msra.mxu0 0.0
        %3296 = vmatprep.subr.mxu0 0.0
        %3297 = vmatpush1.msra.mxu0 0.0
        %3298 = vmatprep.subr.mxu0 0.0
        %3299 = vmatpush1.msra.mxu0 0.0
        %3300 = vmatprep.subr.mxu0 0.0
        %3301 = vmatpush1.msra.mxu0 0.0
        %3302 = vmatprep.subr.mxu0 0.0
        %3303 = vmatpush1.msra.mxu0 0.0
        %3304 = vmatprep.subr.mxu0 0.0
        %3305 = vmatpush1.msra.mxu0 0.0
        %3306 = vmatprep.subr.mxu0 0.0
        %3307 = vmatpush1.msra.mxu0 0.0
        %3308 = vmatprep.subr.mxu0 0.0
        %3309 = vmatpush1.msra.mxu0 0.0
        %3310 = vmatprep.subr.mxu0 0.0
        %3311 = vmatpush1.msra.mxu0 0.0
        %3312 = vmatprep.subr.mxu0 0.0
        %3313 = vmatpush1.msra.mxu0 0.0
        %3314 = vmatprep.subr.mxu0 0.0
        %3315 = vmatpush1.msra.mxu0 0.0
        %3316 = vmatprep.subr.mxu0 0.0
        %3317 = vmatpush1.msra.mxu0 0.0
        %3318 = vmatprep.subr.mxu0 0.0
        %3319 = vmatpush1.msra.mxu0 0.0
        %3320 = vmatprep.subr.mxu0 0.0
        %3321 = vmatpush1.msra.mxu0 0.0
        %3322 = vmatprep.subr.mxu0 0.0
        %3323 = vmatpush1.msra.mxu0 0.0
        %3324 = vmatprep.subr.mxu0 0.0
        %3325 = vmatpush1.msra.mxu0 0.0
        %3326 = vmatprep.subr.mxu0 0.0
        %3327 = vmatpush1.msra.mxu0 0.0
        %3328 = vmatprep.subr.mxu0 0.0
        %3329 = vmatpush1.msra.mxu0 0.0
        %3330 = vmatprep.subr.mxu0 0.0
        %3331 = vmatpush1.msra.mxu0 0.0
        %3332 = vmatprep.subr.mxu0 0.0
        %3333 = vmatpush1.msra.mxu0 0.0
        %3334 = vmatprep.subr.mxu0 0.0
        %3335 = vmatpush1.msra.mxu0 0.0
        %3336 = vmatprep.subr.mxu0 0.0
        %3337 = vmatpush1.msra.mxu0 0.0
        %3338 = vmatprep.subr.mxu0 0.0
        %3339 = vmatpush1.msra.mxu0 0.0
        %3340 = vmatprep.subr.mxu0 0.0
        %3341 = vmatpush1.msra.mxu0 0.0
        %3342 = vmatprep.subr.mxu0 0.0
        %3343 = vmatpush1.msra.mxu0 0.0
        %3344 = vmatprep.mubr.f32.mxu0 0.0
        %3345 = vmatmul.mubr.f32.gmra.mrb[0].mxu0 %v3278
        %v3346 = vpop.f32.mrb[0].mxu0
        %v3347 = vadd.f32 0.0, %v3346
        %v3348 = vpop.f32.mrb[0].mxu0
        %3349 = vdwg.mxu0
        %3351 = vrot.lane.b32.xlu0 %v3347, 32
        %v3352 = vpop.permute.xlu0 %3351
        %v3354 = vadd.f32 %v3193, %v3352
        %v3355 = vtanh.pop %v3354
        %v3356 = vmul.f32 %v3270, %v2965
        %v3357 = vsub.f32 1.0, %v3270
        %3359 = vrot.lane.b32.xlu0 %v3355, 96
        %v3360 = vpop.permute.xlu0 %3359
        %v3362 = vmul.f32 %v3357, %v3360
        %v3363 = vadd.f32 %v3356, %v3362
        %v3365 = vsel %vm1238, %v3363, 0
        %3367 = vmatprep.subr.mxu0 0.0
        %3368 = vmatpush1.msra.mxu0 %v2632
        %3369 = vmatprep.subr.mxu0 0.0
        %3370 = vmatpush1.msra.mxu0 %v2633
        %3371 = vmatprep.subr.mxu0 0.0
        %3372 = vmatpush1.msra.mxu0 0.0
        %3373 = vmatprep.subr.mxu0 0.0
        %3374 = vmatpush1.msra.mxu0 0.0
        %3375 = vmatprep.subr.mxu0 0.0
        %3376 = vmatpush1.msra.mxu0 0.0
        %3377 = vmatprep.subr.mxu0 0.0
        %3378 = vmatpush1.msra.mxu0 0.0
        %3379 = vmatprep.subr.mxu0 0.0
        %3380 = vmatpush1.msra.mxu0 0.0
        %3381 = vmatprep.subr.mxu0 0.0
        %3382 = vmatpush1.msra.mxu0 0.0
        %3383 = vmatprep.subr.mxu0 0.0
        %3384 = vmatpush1.msra.mxu0 0.0
        %3385 = vmatprep.subr.mxu0 0.0
        %3386 = vmatpush1.msra.mxu0 0.0
        %3387 = vmatprep.subr.mxu0 0.0
        %3388 = vmatpush1.msra.mxu0 0.0
        %3389 = vmatprep.subr.mxu0 0.0
        %3390 = vmatpush1.msra.mxu0 0.0
        %3391 = vmatprep.subr.mxu0 0.0
        %3392 = vmatpush1.msra.mxu0 0.0
        %3393 = vmatprep.subr.mxu0 0.0
        %3394 = vmatpush1.msra.mxu0 0.0
        %3395 = vmatprep.subr.mxu0 0.0
        %3396 = vmatpush1.msra.mxu0 0.0
        %3397 = vmatprep.subr.mxu0 0.0
        %3398 = vmatpush1.msra.mxu0 0.0
        %3399 = vmatprep.subr.mxu0 0.0
        %3400 = vmatpush1.msra.mxu0 0.0
        %3401 = vmatprep.subr.mxu0 0.0
        %3402 = vmatpush1.msra.mxu0 0.0
        %3403 = vmatprep.subr.mxu0 0.0
        %3404 = vmatpush1.msra.mxu0 0.0
        %3405 = vmatprep.subr.mxu0 0.0
        %3406 = vmatpush1.msra.mxu0 0.0
        %3407 = vmatprep.subr.mxu0 0.0
        %3408 = vmatpush1.msra.mxu0 0.0
        %3409 = vmatprep.subr.mxu0 0.0
        %3410 = vmatpush1.msra.mxu0 0.0
        %3411 = vmatprep.subr.mxu0 0.0
        %3412 = vmatpush1.msra.mxu0 0.0
        %3413 = vmatprep.subr.mxu0 0.0
        %3414 = vmatpush1.msra.mxu0 0.0
        %3415 = vmatprep.subr.mxu0 0.0
        %3416 = vmatpush1.msra.mxu0 0.0
        %3417 = vmatprep.subr.mxu0 0.0
        %3418 = vmatpush1.msra.mxu0 0.0
        %3419 = vmatprep.subr.mxu0 0.0
        %3420 = vmatpush1.msra.mxu0 0.0
        %3421 = vmatprep.subr.mxu0 0.0
        %3422 = vmatpush1.msra.mxu0 0.0
        %3423 = vmatprep.subr.mxu0 0.0
        %3424 = vmatpush1.msra.mxu0 0.0
        %3425 = vmatprep.subr.mxu0 0.0
        %3426 = vmatpush1.msra.mxu0 0.0
        %3427 = vmatprep.subr.mxu0 0.0
        %3428 = vmatpush1.msra.mxu0 0.0
        %3429 = vmatprep.subr.mxu0 0.0
        %3430 = vmatpush1.msra.mxu0 0.0
        %3431 = vmatprep.mubr.f32.mxu0 0.0
        %3432 = vmatmul.mubr.f32.gmra.mrb[0].mxu0 %v3365
        %v3433 = vpop.f32.mrb[0].mxu0
        %v3434 = vadd.f32 %v2970, %v3433
        %v3435 = vpop.f32.mrb[0].mxu0
        %3436 = vdwg.mxu0
        %3437 = vmatprep.subr.mxu0 0.0
        %3438 = vmatpush1.msra.mxu0 %v3434
        %3439 = vmatprep.subr.mxu0 0.0
        %3440 = vmatpush1.msra.mxu0 0.0
        %3441 = vmatprep.subr.mxu0 0.0
        %3442 = vmatpush1.msra.mxu0 0.0
        %3443 = vmatprep.subr.mxu0 0.0
        %3444 = vmatpush1.msra.mxu0 0.0
        %3445 = vmatprep.subr.mxu0 0.0
        %3446 = vmatpush1.msra.mxu0 0.0
        %3447 = vmatprep.subr.mxu0 0.0
        %3448 = vmatpush1.msra.mxu0 0.0
        %3449 = vmatprep.subr.mxu0 0.0
        %3450 = vmatpush1.msra.mxu0 0.0
        %3451 = vmatprep.subr.mxu0 0.0
        %3452 = vmatpush1.msra.mxu0 0.0
        %3453 = vmatprep.subr.mxu0 0.0
        %3454 = vmatpush1.msra.mxu0 0.0
        %3455 = vmatprep.subr.mxu0 0.0
        %3456 = vmatpush1.msra.mxu0 0.0
        %3457 = vmatprep.subr.mxu0 0.0
        %3458 = vmatpush1.msra.mxu0 0.0
        %3459 = vmatprep.subr.mxu0 0.0
        %3460 = vmatpush1.msra.mxu0 0.0
        %3461 = vmatprep.subr.mxu0 0.0
        %3462 = vmatpush1.msra.mxu0 0.0
        %3463 = vmatprep.subr.mxu0 0.0
        %3464 = vmatpush1.msra.mxu0 0.0
        %3465 = vmatprep.subr.mxu0 0.0
        %3466 = vmatpush1.msra.mxu0 0.0
        %3467 = vmatprep.subr.mxu0 0.0
        %3468 = vmatpush1.msra.mxu0 0.0
        %3469 = vmatprep.subr.mxu0 0.0
        %3470 = vmatpush1.msra.mxu0 0.0
        %3471 = vmatprep.subr.mxu0 0.0
        %3472 = vmatpush1.msra.mxu0 0.0
        %3473 = vmatprep.subr.mxu0 0.0
        %3474 = vmatpush1.msra.mxu0 0.0
        %3475 = vmatprep.subr.mxu0 0.0
        %3476 = vmatpush1.msra.mxu0 0.0
        %3477 = vmatprep.subr.mxu0 0.0
        %3478 = vmatpush1.msra.mxu0 0.0
        %3479 = vmatprep.subr.mxu0 0.0
        %3480 = vmatpush1.msra.mxu0 0.0
        %3481 = vmatprep.subr.mxu0 0.0
        %3482 = vmatpush1.msra.mxu0 0.0
        %3483 = vmatprep.subr.mxu0 0.0
        %3484 = vmatpush1.msra.mxu0 0.0
        %3485 = vmatprep.subr.mxu0 0.0
        %3486 = vmatpush1.msra.mxu0 0.0
        %3487 = vmatprep.subr.mxu0 0.0
        %3488 = vmatpush1.msra.mxu0 0.0
        %3489 = vmatprep.subr.mxu0 0.0
        %3490 = vmatpush1.msra.mxu0 0.0
        %3491 = vmatprep.subr.mxu0 0.0
        %3492 = vmatpush1.msra.mxu0 0.0
        %3493 = vmatprep.subr.mxu0 0.0
        %3494 = vmatpush1.msra.mxu0 0.0
        %3495 = vmatprep.subr.mxu0 0.0
        %3496 = vmatpush1.msra.mxu0 0.0
        %3497 = vmatprep.subr.mxu0 0.0
        %3498 = vmatpush1.msra.mxu0 0.0
        %3499 = vmatprep.subr.mxu0 0.0
        %3500 = vmatpush1.msra.mxu0 0.0
        %3501 = vmatprep.mubr.f32.mxu0 0.0
        %3502 = vmatmul.mubr.f32.gmra.mrb[0].mxu0 %v1076
        %v3503 = vpop.f32.mrb[0].mxu0
        %v3504 = vadd.f32 0.0, %v3503
        %v3505 = vpop.f32.mrb[0].mxu0
        %3506 = vdwg.mxu0
        %v3507 = vlaneseq
        %v3508 = vshrl.u32 %v3507, 7
        %v3509 = vsub.s32 2, %v3508
        %v3510 = vrot.slane %v2629, %v3509
        %v3511 = vmul.f32 %v769, %v3510
        %v3513 = vsel %vm1153, %v3504, 0
        %3515 = vmatprep.subr.mxu0 0.0
        %3516 = vmatpush1.msra.mxu0 %v2714
        %3517 = vmatprep.subr.mxu0 0.0
        %3518 = vmatpush1.msra.mxu0 0.0
        %3519 = vmatprep.subr.mxu0 0.0
        %3520 = vmatpush1.msra.mxu0 0.0
        %3521 = vmatprep.subr.mxu0 0.0
        %3522 = vmatpush1.msra.mxu0 0.0
        %3523 = vmatprep.subr.mxu0 0.0
        %3524 = vmatpush1.msra.mxu0 0.0
        %3525 = vmatprep.subr.mxu0 0.0
        %3526 = vmatpush1.msra.mxu0 0.0
        %3527 = vmatprep.subr.mxu0 0.0
        %3528 = vmatpush1.msra.mxu0 0.0
        %3529 = vmatprep.subr.mxu0 0.0
        %3530 = vmatpush1.msra.mxu0 0.0
        %3531 = vmatprep.subr.mxu0 0.0
        %3532 = vmatpush1.msra.mxu0 0.0
        %3533 = vmatprep.subr.mxu0 0.0
        %3534 = vmatpush1.msra.mxu0 0.0
        %3535 = vmatprep.subr.mxu0 0.0
        %3536 = vmatpush1.msra.mxu0 0.0
        %3537 = vmatprep.subr.mxu0 0.0
        %3538 = vmatpush1.msra.mxu0 0.0
        %3539 = vmatprep.subr.mxu0 0.0
        %3540 = vmatpush1.msra.mxu0 0.0
        %3541 = vmatprep.subr.mxu0 0.0
        %3542 = vmatpush1.msra.mxu0 0.0
        %3543 = vmatprep.subr.mxu0 0.0
        %3544 = vmatpush1.msra.mxu0 0.0
        %3545 = vmatprep.subr.mxu0 0.0
        %3546 = vmatpush1.msra.mxu0 0.0
        %3547 = vmatprep.subr.mxu0 0.0
        %3548 = vmatpush1.msra.mxu0 0.0
        %3549 = vmatprep.subr.mxu0 0.0
        %3550 = vmatpush1.msra.mxu0 0.0
        %3551 = vmatprep.subr.mxu0 0.0
        %3552 = vmatpush1.msra.mxu0 0.0
        %3553 = vmatprep.subr.mxu0 0.0
        %3554 = vmatpush1.msra.mxu0 0.0
        %3555 = vmatprep.subr.mxu0 0.0
        %3556 = vmatpush1.msra.mxu0 0.0
        %3557 = vmatprep.subr.mxu0 0.0
        %3558 = vmatpush1.msra.mxu0 0.0
        %3559 = vmatprep.subr.mxu0 0.0
        %3560 = vmatpush1.msra.mxu0 0.0
        %3561 = vmatprep.subr.mxu0 0.0
        %3562 = vmatpush1.msra.mxu0 0.0
        %3563 = vmatprep.subr.mxu0 0.0
        %3564 = vmatpush1.msra.mxu0 0.0
        %3565 = vmatprep.subr.mxu0 0.0
        %3566 = vmatpush1.msra.mxu0 0.0
        %3567 = vmatprep.subr.mxu0 0.0
        %3568 = vmatpush1.msra.mxu0 0.0
        %3569 = vmatprep.subr.mxu0 0.0
        %3570 = vmatpush1.msra.mxu0 0.0
        %3571 = vmatprep.subr.mxu0 0.0
        %3572 = vmatpush1.msra.mxu0 0.0
        %3573 = vmatprep.subr.mxu0 0.0
        %3574 = vmatpush1.msra.mxu0 0.0
        %3575 = vmatprep.subr.mxu0 0.0
        %3576 = vmatpush1.msra.mxu0 0.0
        %3577 = vmatprep.subr.mxu0 0.0
        %3578 = vmatpush1.msra.mxu0 0.0
        %3579 = vmatprep.mubr.f32.mxu0 0.0
        %3580 = vmatmul.mubr.f32.gmra.mrb[0].mxu0 %v3513
        %v3581 = vpop.f32.mrb[0].mxu0
        %v3582 = vadd.f32 %v3511, %v3581
        %v3583 = vpop.f32.mrb[0].mxu0
        %3584 = vdwg.mxu0
        %v3585 = vadd.f32 %v3582, %v2790
        %3586 = vmatprep.subr.mxu0 0.0
        %3587 = vmatpush1.msra.mxu0 %v2550
        %3588 = vmatprep.subr.mxu0 0.0
        %3589 = vmatpush1.msra.mxu0 %v2551
        %3590 = vmatprep.subr.mxu0 0.0
        %3591 = vmatpush1.msra.mxu0 0.0
        %3592 = vmatprep.subr.mxu0 0.0
        %3593 = vmatpush1.msra.mxu0 0.0
        %3594 = vmatprep.subr.mxu0 0.0
        %3595 = vmatpush1.msra.mxu0 0.0
        %3596 = vmatprep.subr.mxu0 0.0
        %3597 = vmatpush1.msra.mxu0 0.0
        %3598 = vmatprep.subr.mxu0 0.0
        %3599 = vmatpush1.msra.mxu0 0.0
        %3600 = vmatprep.subr.mxu0 0.0
        %3601 = vmatpush1.msra.mxu0 0.0
        %3602 = vmatprep.subr.mxu0 0.0
        %3603 = vmatpush1.msra.mxu0 0.0
        %3604 = vmatprep.subr.mxu0 0.0
        %3605 = vmatpush1.msra.mxu0 0.0
        %3606 = vmatprep.subr.mxu0 0.0
        %3607 = vmatpush1.msra.mxu0 0.0
        %3608 = vmatprep.subr.mxu0 0.0
        %3609 = vmatpush1.msra.mxu0 0.0
        %3610 = vmatprep.subr.mxu0 0.0
        %3611 = vmatpush1.msra.mxu0 0.0
        %3612 = vmatprep.subr.mxu0 0.0
        %3613 = vmatpush1.msra.mxu0 0.0
        %3614 = vmatprep.subr.mxu0 0.0
        %3615 = vmatpush1.msra.mxu0 0.0
        %3616 = vmatprep.subr.mxu0 0.0
        %3617 = vmatpush1.msra.mxu0 0.0
        %3618 = vmatprep.subr.mxu0 0.0
        %3619 = vmatpush1.msra.mxu0 0.0
        %3620 = vmatprep.subr.mxu0 0.0
        %3621 = vmatpush1.msra.mxu0 0.0
        %3622 = vmatprep.subr.mxu0 0.0
        %3623 = vmatpush1.msra.mxu0 0.0
        %3624 = vmatprep.subr.mxu0 0.0
        %3625 = vmatpush1.msra.mxu0 0.0
        %3626 = vmatprep.subr.mxu0 0.0
        %3627 = vmatpush1.msra.mxu0 0.0
        %3628 = vmatprep.subr.mxu0 0.0
        %3629 = vmatpush1.msra.mxu0 0.0
        %3630 = vmatprep.subr.mxu0 0.0
        %3631 = vmatpush1.msra.mxu0 0.0
        %3632 = vmatprep.subr.mxu0 0.0
        %3633 = vmatpush1.msra.mxu0 0.0
        %3634 = vmatprep.subr.mxu0 0.0
        %3635 = vmatpush1.msra.mxu0 0.0
        %3636 = vmatprep.subr.mxu0 0.0
        %3637 = vmatpush1.msra.mxu0 0.0
        %3638 = vmatprep.subr.mxu0 0.0
        %3639 = vmatpush1.msra.mxu0 0.0
        %3640 = vmatprep.subr.mxu0 0.0
        %3641 = vmatpush1.msra.mxu0 0.0
        %3642 = vmatprep.subr.mxu0 0.0
        %3643 = vmatpush1.msra.mxu0 0.0
        %3644 = vmatprep.subr.mxu0 0.0
        %3645 = vmatpush1.msra.mxu0 0.0
        %3646 = vmatprep.subr.mxu0 0.0
        %3647 = vmatpush1.msra.mxu0 0.0
        %3648 = vmatprep.subr.mxu0 0.0
        %3649 = vmatpush1.msra.mxu0 0.0
        %3650 = vmatprep.mubr.f32.mxu0 0.0
        %3651 = vmatmul.mubr.f32.gmra.mrb[0].mxu0 %v3365
        %v3652 = vpop.f32.mrb[0].mxu0
        %v3653 = vadd.f32 0.0, %v3652
        %v3654 = vpop.f32.mrb[0].mxu0
        %3655 = vdwg.mxu0
        %v3656 = vadd.f32 %v3585, %v3653
        %v3657 = vxor.u32 %v3656, 2147483648
        %v3658 = vmul.f32 %v3657, 1.442695
        %v3659 = vpow.pop %v3658
        %v3660 = vadd.f32 %v3659, 1.0
        %v3661 = vrcp.pop %v3660
        %v3662 = vmul.f32 1.0, %v3661
        %3663 = vrot.lane.b32.xlu0 %v3363, 16
        %v3664 = vpop.permute.xlu0 %3663
        %v3666 = vmul.f32 %v3662, %v3664
        %3668 = vrot.lane.b32.xlu0 %v3666, 112
        %v3669 = vpop.permute.xlu0 %3668
        %v3670 = vsel %vm1238, %v3669, 0
        %3672 = vmatprep.subr.mxu0 0.0
        %3673 = vmatpush1.msra.mxu0 %v2552
        %3674 = vmatprep.subr.mxu0 0.0
        %3675 = vmatpush1.msra.mxu0 %v2553
        %3676 = vmatprep.subr.mxu0 0.0
        %3677 = vmatpush1.msra.mxu0 0.0
        %3678 = vmatprep.subr.mxu0 0.0
        %3679 = vmatpush1.msra.mxu0 0.0
        %3680 = vmatprep.subr.mxu0 0.0
        %3681 = vmatpush1.msra.mxu0 0.0
        %3682 = vmatprep.subr.mxu0 0.0
        %3683 = vmatpush1.msra.mxu0 0.0
        %3684 = vmatprep.subr.mxu0 0.0
        %3685 = vmatpush1.msra.mxu0 0.0
        %3686 = vmatprep.subr.mxu0 0.0
        %3687 = vmatpush1.msra.mxu0 0.0
        %3688 = vmatprep.subr.mxu0 0.0
        %3689 = vmatpush1.msra.mxu0 0.0
        %3690 = vmatprep.subr.mxu0 0.0
        %3691 = vmatpush1.msra.mxu0 0.0
        %3692 = vmatprep.subr.mxu0 0.0
        %3693 = vmatpush1.msra.mxu0 0.0
        %3694 = vmatprep.subr.mxu0 0.0
        %3695 = vmatpush1.msra.mxu0 0.0
        %3696 = vmatprep.subr.mxu0 0.0
        %3697 = vmatpush1.msra.mxu0 0.0
        %3698 = vmatprep.subr.mxu0 0.0
        %3699 = vmatpush1.msra.mxu0 0.0
        %3700 = vmatprep.subr.mxu0 0.0
        %3701 = vmatpush1.msra.mxu0 0.0
        %3702 = vmatprep.subr.mxu0 0.0
        %3703 = vmatpush1.msra.mxu0 0.0
        %3704 = vmatprep.subr.mxu0 0.0
        %3705 = vmatpush1.msra.mxu0 0.0
        %3706 = vmatprep.subr.mxu0 0.0
        %3707 = vmatpush1.msra.mxu0 0.0
        %3708 = vmatprep.subr.mxu0 0.0
        %3709 = vmatpush1.msra.mxu0 0.0
        %3710 = vmatprep.subr.mxu0 0.0
        %3711 = vmatpush1.msra.mxu0 0.0
        %3712 = vmatprep.subr.mxu0 0.0
        %3713 = vmatpush1.msra.mxu0 0.0
        %3714 = vmatprep.subr.mxu0 0.0
        %3715 = vmatpush1.msra.mxu0 0.0
        %3716 = vmatprep.subr.mxu0 0.0
        %3717 = vmatpush1.msra.mxu0 0.0
        %3718 = vmatprep.subr.mxu0 0.0
        %3719 = vmatpush1.msra.mxu0 0.0
        %3720 = vmatprep.subr.mxu0 0.0
        %3721 = vmatpush1.msra.mxu0 0.0
        %3722 = vmatprep.subr.mxu0 0.0
        %3723 = vmatpush1.msra.mxu0 0.0
        %3724 = vmatprep.subr.mxu0 0.0
        %3725 = vmatpush1.msra.mxu0 0.0
        %3726 = vmatprep.subr.mxu0 0.0
        %3727 = vmatpush1.msra.mxu0 0.0
        %3728 = vmatprep.subr.mxu0 0.0
        %3729 = vmatpush1.msra.mxu0 0.0
        %3730 = vmatprep.subr.mxu0 0.0
        %3731 = vmatpush1.msra.mxu0 0.0
        %3732 = vmatprep.subr.mxu0 0.0
        %3733 = vmatpush1.msra.mxu0 0.0
        %3734 = vmatprep.subr.mxu0 0.0
        %3735 = vmatpush1.msra.mxu0 0.0
        %3736 = vmatprep.mubr.f32.mxu0 0.0
        %3737 = vmatmul.mubr.f32.gmra.mrb[0].mxu0 %v3670
        %v3738 = vpop.f32.mrb[0].mxu0
        %v3739 = vadd.f32 0.0, %v3738
        %v3740 = vpop.f32.mrb[0].mxu0
        %3741 = vdwg.mxu0
        %3743 = vrot.lane.b32.xlu0 %v3739, 32
        %v3744 = vpop.permute.xlu0 %3743
        %v3746 = vadd.f32 %v3585, %v3744
        %v3747 = vtanh.pop %v3746
        %v3748 = vmul.f32 %v3662, %v3363
        %v3749 = vsub.f32 1.0, %v3662
        %3751 = vrot.lane.b32.xlu0 %v3747, 96
        %v3752 = vpop.permute.xlu0 %3751
        %v3754 = vmul.f32 %v3749, %v3752
        %v3755 = vadd.f32 %v3748, %v3754
        %v3757 = vsel %vm1238, %v3755, 0
        %3759 = vmatprep.subr.mxu0 0.0
        %3760 = vmatpush1.msra.mxu0 %v2632
        %3761 = vmatprep.subr.mxu0 0.0
        %3762 = vmatpush1.msra.mxu0 %v2633
        %3763 = vmatprep.subr.mxu0 0.0
        %3764 = vmatpush1.msra.mxu0 0.0
        %3765 = vmatprep.subr.mxu0 0.0
        %3766 = vmatpush1.msra.mxu0 0.0
        %3767 = vmatprep.subr.mxu0 0.0
        %3768 = vmatpush1.msra.mxu0 0.0
        %3769 = vmatprep.subr.mxu0 0.0
        %3770 = vmatpush1.msra.mxu0 0.0
        %3771 = vmatprep.subr.mxu0 0.0
        %3772 = vmatpush1.msra.mxu0 0.0
        %3773 = vmatprep.subr.mxu0 0.0
        %3774 = vmatpush1.msra.mxu0 0.0
        %3775 = vmatprep.subr.mxu0 0.0
        %3776 = vmatpush1.msra.mxu0 0.0
        %3777 = vmatprep.subr.mxu0 0.0
        %3778 = vmatpush1.msra.mxu0 0.0
        %3779 = vmatprep.subr.mxu0 0.0
        %3780 = vmatpush1.msra.mxu0 0.0
        %3781 = vmatprep.subr.mxu0 0.0
        %3782 = vmatpush1.msra.mxu0 0.0
        %3783 = vmatprep.subr.mxu0 0.0
        %3784 = vmatpush1.msra.mxu0 0.0
        %3785 = vmatprep.subr.mxu0 0.0
        %3786 = vmatpush1.msra.mxu0 0.0
        %3787 = vmatprep.subr.mxu0 0.0
        %3788 = vmatpush1.msra.mxu0 0.0
        %3789 = vmatprep.subr.mxu0 0.0
        %3790 = vmatpush1.msra.mxu0 0.0
        %3791 = vmatprep.subr.mxu0 0.0
        %3792 = vmatpush1.msra.mxu0 0.0
        %3793 = vmatprep.subr.mxu0 0.0
        %3794 = vmatpush1.msra.mxu0 0.0
        %3795 = vmatprep.subr.mxu0 0.0
        %3796 = vmatpush1.msra.mxu0 0.0
        %3797 = vmatprep.subr.mxu0 0.0
        %3798 = vmatpush1.msra.mxu0 0.0
        %3799 = vmatprep.subr.mxu0 0.0
        %3800 = vmatpush1.msra.mxu0 0.0
        %3801 = vmatprep.subr.mxu0 0.0
        %3802 = vmatpush1.msra.mxu0 0.0
        %3803 = vmatprep.subr.mxu0 0.0
        %3804 = vmatpush1.msra.mxu0 0.0
        %3805 = vmatprep.subr.mxu0 0.0
        %3806 = vmatpush1.msra.mxu0 0.0
        %3807 = vmatprep.subr.mxu0 0.0
        %3808 = vmatpush1.msra.mxu0 0.0
        %3809 = vmatprep.subr.mxu0 0.0
        %3810 = vmatpush1.msra.mxu0 0.0
        %3811 = vmatprep.subr.mxu0 0.0
        %3812 = vmatpush1.msra.mxu0 0.0
        %3813 = vmatprep.subr.mxu0 0.0
        %3814 = vmatpush1.msra.mxu0 0.0
        %3815 = vmatprep.subr.mxu0 0.0
        %3816 = vmatpush1.msra.mxu0 0.0
        %3817 = vmatprep.subr.mxu0 0.0
        %3818 = vmatpush1.msra.mxu0 0.0
        %3819 = vmatprep.subr.mxu0 0.0
        %3820 = vmatpush1.msra.mxu0 0.0
        %3821 = vmatprep.subr.mxu0 0.0
        %3822 = vmatpush1.msra.mxu0 0.0
        %3823 = vmatprep.mubr.f32.mxu0 0.0
        %3824 = vmatmul.mubr.f32.gmra.mrb[0].mxu0 %v3757
        %v3825 = vpop.f32.mrb[0].mxu0
        %v3826 = vadd.f32 %v2970, %v3825
        %v3827 = vpop.f32.mrb[0].mxu0
        %3828 = vdwg.mxu0
        %3829 = vmatprep.subr.mxu0 0.0
        %3830 = vmatpush1.msra.mxu0 %v3826
        %3831 = vmatprep.subr.mxu0 0.0
        %3832 = vmatpush1.msra.mxu0 0.0
        %3833 = vmatprep.subr.mxu0 0.0
        %3834 = vmatpush1.msra.mxu0 0.0
        %3835 = vmatprep.subr.mxu0 0.0
        %3836 = vmatpush1.msra.mxu0 0.0
        %3837 = vmatprep.subr.mxu0 0.0
        %3838 = vmatpush1.msra.mxu0 0.0
        %3839 = vmatprep.subr.mxu0 0.0
        %3840 = vmatpush1.msra.mxu0 0.0
        %3841 = vmatprep.subr.mxu0 0.0
        %3842 = vmatpush1.msra.mxu0 0.0
        %3843 = vmatprep.subr.mxu0 0.0
        %3844 = vmatpush1.msra.mxu0 0.0
        %3845 = vmatprep.subr.mxu0 0.0
        %3846 = vmatpush1.msra.mxu0 0.0
        %3847 = vmatprep.subr.mxu0 0.0
        %3848 = vmatpush1.msra.mxu0 0.0
        %3849 = vmatprep.subr.mxu0 0.0
        %3850 = vmatpush1.msra.mxu0 0.0
        %3851 = vmatprep.subr.mxu0 0.0
        %3852 = vmatpush1.msra.mxu0 0.0
        %3853 = vmatprep.subr.mxu0 0.0
        %3854 = vmatpush1.msra.mxu0 0.0
        %3855 = vmatprep.subr.mxu0 0.0
        %3856 = vmatpush1.msra.mxu0 0.0
        %3857 = vmatprep.subr.mxu0 0.0
        %3858 = vmatpush1.msra.mxu0 0.0
        %3859 = vmatprep.subr.mxu0 0.0
        %3860 = vmatpush1.msra.mxu0 0.0
        %3861 = vmatprep.subr.mxu0 0.0
        %3862 = vmatpush1.msra.mxu0 0.0
        %3863 = vmatprep.subr.mxu0 0.0
        %3864 = vmatpush1.msra.mxu0 0.0
        %3865 = vmatprep.subr.mxu0 0.0
        %3866 = vmatpush1.msra.mxu0 0.0
        %3867 = vmatprep.subr.mxu0 0.0
        %3868 = vmatpush1.msra.mxu0 0.0
        %3869 = vmatprep.subr.mxu0 0.0
        %3870 = vmatpush1.msra.mxu0 0.0
        %3871 = vmatprep.subr.mxu0 0.0
        %3872 = vmatpush1.msra.mxu0 0.0
        %3873 = vmatprep.subr.mxu0 0.0
        %3874 = vmatpush1.msra.mxu0 0.0
        %3875 = vmatprep.subr.mxu0 0.0
        %3876 = vmatpush1.msra.mxu0 0.0
        %3877 = vmatprep.subr.mxu0 0.0
        %3878 = vmatpush1.msra.mxu0 0.0
        %3879 = vmatprep.subr.mxu0 0.0
        %3880 = vmatpush1.msra.mxu0 0.0
        %3881 = vmatprep.subr.mxu0 0.0
        %3882 = vmatpush1.msra.mxu0 0.0
        %3883 = vmatprep.subr.mxu0 0.0
        %3884 = vmatpush1.msra.mxu0 0.0
        %3885 = vmatprep.subr.mxu0 0.0
        %3886 = vmatpush1.msra.mxu0 0.0
        %3887 = vmatprep.subr.mxu0 0.0
        %3888 = vmatpush1.msra.mxu0 0.0
        %3889 = vmatprep.subr.mxu0 0.0
        %3890 = vmatpush1.msra.mxu0 0.0
        %3891 = vmatprep.subr.mxu0 0.0
        %3892 = vmatpush1.msra.mxu0 0.0
        %3893 = vmatprep.mubr.f32.mxu0 0.0
        %3894 = vmatmul.mubr.f32.gmra.mrb[0].mxu0 %v1076
        %v3895 = vpop.f32.mrb[0].mxu0
        %v3896 = vadd.f32 0.0, %v3895
        %v3897 = vpop.f32.mrb[0].mxu0
        %3898 = vdwg.mxu0
        %v3899 = vlaneseq
        %v3900 = vshrl.u32 %v3899, 7
        %v3901 = vsub.s32 3, %v3900
        %v3902 = vrot.slane %v2629, %v3901
        %v3903 = vmul.f32 %v769, %v3902
        %v3905 = vsel %vm1153, %v3896, 0
        %3907 = vmatprep.subr.mxu0 0.0
        %3908 = vmatpush1.msra.mxu0 %v2714
        %3909 = vmatprep.subr.mxu0 0.0
        %3910 = vmatpush1.msra.mxu0 0.0
        %3911 = vmatprep.subr.mxu0 0.0
        %3912 = vmatpush1.msra.mxu0 0.0
        %3913 = vmatprep.subr.mxu0 0.0
        %3914 = vmatpush1.msra.mxu0 0.0
        %3915 = vmatprep.subr.mxu0 0.0
        %3916 = vmatpush1.msra.mxu0 0.0
        %3917 = vmatprep.subr.mxu0 0.0
        %3918 = vmatpush1.msra.mxu0 0.0
        %3919 = vmatprep.subr.mxu0 0.0
        %3920 = vmatpush1.msra.mxu0 0.0
        %3921 = vmatprep.subr.mxu0 0.0
        %3922 = vmatpush1.msra.mxu0 0.0
        %3923 = vmatprep.subr.mxu0 0.0
        %3924 = vmatpush1.msra.mxu0 0.0
        %3925 = vmatprep.subr.mxu0 0.0
        %3926 = vmatpush1.msra.mxu0 0.0
        %3927 = vmatprep.subr.mxu0 0.0
        %3928 = vmatpush1.msra.mxu0 0.0
        %3929 = vmatprep.subr.mxu0 0.0
        %3930 = vmatpush1.msra.mxu0 0.0
        %3931 = vmatprep.subr.mxu0 0.0
        %3932 = vmatpush1.msra.mxu0 0.0
        %3933 = vmatprep.subr.mxu0 0.0
        %3934 = vmatpush1.msra.mxu0 0.0
        %3935 = vmatprep.subr.mxu0 0.0
        %3936 = vmatpush1.msra.mxu0 0.0
        %3937 = vmatprep.subr.mxu0 0.0
        %3938 = vmatpush1.msra.mxu0 0.0
        %3939 = vmatprep.subr.mxu0 0.0
        %3940 = vmatpush1.msra.mxu0 0.0
        %3941 = vmatprep.subr.mxu0 0.0
        %3942 = vmatpush1.msra.mxu0 0.0
        %3943 = vmatprep.subr.mxu0 0.0
        %3944 = vmatpush1.msra.mxu0 0.0
        %3945 = vmatprep.subr.mxu0 0.0
        %3946 = vmatpush1.msra.mxu0 0.0
        %3947 = vmatprep.subr.mxu0 0.0
        %3948 = vmatpush1.msra.mxu0 0.0
        %3949 = vmatprep.subr.mxu0 0.0
        %3950 = vmatpush1.msra.mxu0 0.0
        %3951 = vmatprep.subr.mxu0 0.0
        %3952 = vmatpush1.msra.mxu0 0.0
        %3953 = vmatprep.subr.mxu0 0.0
        %3954 = vmatpush1.msra.mxu0 0.0
        %3955 = vmatprep.subr.mxu0 0.0
        %3956 = vmatpush1.msra.mxu0 0.0
        %3957 = vmatprep.subr.mxu0 0.0
        %3958 = vmatpush1.msra.mxu0 0.0
        %3959 = vmatprep.subr.mxu0 0.0
        %3960 = vmatpush1.msra.mxu0 0.0
        %3961 = vmatprep.subr.mxu0 0.0
        %3962 = vmatpush1.msra.mxu0 0.0
        %3963 = vmatprep.subr.mxu0 0.0
        %3964 = vmatpush1.msra.mxu0 0.0
        %3965 = vmatprep.subr.mxu0 0.0
        %3966 = vmatpush1.msra.mxu0 0.0
        %3967 = vmatprep.subr.mxu0 0.0
        %3968 = vmatpush1.msra.mxu0 0.0
        %3969 = vmatprep.subr.mxu0 0.0
        %3970 = vmatpush1.msra.mxu0 0.0
        %3971 = vmatprep.mubr.f32.mxu0 0.0
        %3972 = vmatmul.mubr.f32.gmra.mrb[0].mxu0 %v3905
        %v3973 = vpop.f32.mrb[0].mxu0
        %v3974 = vadd.f32 %v3903, %v3973
        %v3975 = vpop.f32.mrb[0].mxu0
        %3976 = vdwg.mxu0
        %v3977 = vadd.f32 %v3974, %v2790
        %3978 = vmatprep.subr.mxu0 0.0
        %3979 = vmatpush1.msra.mxu0 %v2550
        %3980 = vmatprep.subr.mxu0 0.0
        %3981 = vmatpush1.msra.mxu0 %v2551
        %3982 = vmatprep.subr.mxu0 0.0
        %3983 = vmatpush1.msra.mxu0 0.0
        %3984 = vmatprep.subr.mxu0 0.0
        %3985 = vmatpush1.msra.mxu0 0.0
        %3986 = vmatprep.subr.mxu0 0.0
        %3987 = vmatpush1.msra.mxu0 0.0
        %3988 = vmatprep.subr.mxu0 0.0
        %3989 = vmatpush1.msra.mxu0 0.0
        %3990 = vmatprep.subr.mxu0 0.0
        %3991 = vmatpush1.msra.mxu0 0.0
        %3992 = vmatprep.subr.mxu0 0.0
        %3993 = vmatpush1.msra.mxu0 0.0
        %3994 = vmatprep.subr.mxu0 0.0
        %3995 = vmatpush1.msra.mxu0 0.0
        %3996 = vmatprep.subr.mxu0 0.0
        %3997 = vmatpush1.msra.mxu0 0.0
        %3998 = vmatprep.subr.mxu0 0.0
        %3999 = vmatpush1.msra.mxu0 0.0
        %4000 = vmatprep.subr.mxu0 0.0
        %4001 = vmatpush1.msra.mxu0 0.0
        %4002 = vmatprep.subr.mxu0 0.0
        %4003 = vmatpush1.msra.mxu0 0.0
        %4004 = vmatprep.subr.mxu0 0.0
        %4005 = vmatpush1.msra.mxu0 0.0
        %4006 = vmatprep.subr.mxu0 0.0
        %4007 = vmatpush1.msra.mxu0 0.0
        %4008 = vmatprep.subr.mxu0 0.0
        %4009 = vmatpush1.msra.mxu0 0.0
        %4010 = vmatprep.subr.mxu0 0.0
        %4011 = vmatpush1.msra.mxu0 0.0
        %4012 = vmatprep.subr.mxu0 0.0
        %4013 = vmatpush1.msra.mxu0 0.0
        %4014 = vmatprep.subr.mxu0 0.0
        %4015 = vmatpush1.msra.mxu0 0.0
        %4016 = vmatprep.subr.mxu0 0.0
        %4017 = vmatpush1.msra.mxu0 0.0
        %4018 = vmatprep.subr.mxu0 0.0
        %4019 = vmatpush1.msra.mxu0 0.0
        %4020 = vmatprep.subr.mxu0 0.0
        %4021 = vmatpush1.msra.mxu0 0.0
        %4022 = vmatprep.subr.mxu0 0.0
        %4023 = vmatpush1.msra.mxu0 0.0
        %4024 = vmatprep.subr.mxu0 0.0
        %4025 = vmatpush1.msra.mxu0 0.0
        %4026 = vmatprep.subr.mxu0 0.0
        %4027 = vmatpush1.msra.mxu0 0.0
        %4028 = vmatprep.subr.mxu0 0.0
        %4029 = vmatpush1.msra.mxu0 0.0
        %4030 = vmatprep.subr.mxu0 0.0
        %4031 = vmatpush1.msra.mxu0 0.0
        %4032 = vmatprep.subr.mxu0 0.0
        %4033 = vmatpush1.msra.mxu0 0.0
        %4034 = vmatprep.subr.mxu0 0.0
        %4035 = vmatpush1.msra.mxu0 0.0
        %4036 = vmatprep.subr.mxu0 0.0
        %4037 = vmatpush1.msra.mxu0 0.0
        %4038 = vmatprep.subr.mxu0 0.0
        %4039 = vmatpush1.msra.mxu0 0.0
        %4040 = vmatprep.subr.mxu0 0.0
        %4041 = vmatpush1.msra.mxu0 0.0
        %4042 = vmatprep.mubr.f32.mxu0 0.0
        %4043 = vmatmul.mubr.f32.gmra.mrb[0].mxu0 %v3757
        %v4044 = vpop.f32.mrb[0].mxu0
        %v4045 = vadd.f32 0.0, %v4044
        %v4046 = vpop.f32.mrb[0].mxu0
        %4047 = vdwg.mxu0
        %v4048 = vadd.f32 %v3977, %v4045
        %v4049 = vxor.u32 %v4048, 2147483648
        %v4050 = vmul.f32 %v4049, 1.442695
        %v4051 = vpow.pop %v4050
        %v4052 = vadd.f32 %v4051, 1.0
        %v4053 = vrcp.pop %v4052
        %v4054 = vmul.f32 1.0, %v4053
        %4055 = vrot.lane.b32.xlu0 %v3755, 16
        %v4056 = vpop.permute.xlu0 %4055
        %v4058 = vmul.f32 %v4054, %v4056
        %4060 = vrot.lane.b32.xlu0 %v4058, 112
        %v4061 = vpop.permute.xlu0 %4060
        %v4062 = vsel %vm1238, %v4061, 0
        %4064 = vmatprep.subr.mxu0 0.0
        %4065 = vmatpush1.msra.mxu0 %v2552
        %4066 = vmatprep.subr.mxu0 0.0
        %4067 = vmatpush1.msra.mxu0 %v2553
        %4068 = vmatprep.subr.mxu0 0.0
        %4069 = vmatpush1.msra.mxu0 0.0
        %4070 = vmatprep.subr.mxu0 0.0
        %4071 = vmatpush1.msra.mxu0 0.0
        %4072 = vmatprep.subr.mxu0 0.0
        %4073 = vmatpush1.msra.mxu0 0.0
        %4074 = vmatprep.subr.mxu0 0.0
        %4075 = vmatpush1.msra.mxu0 0.0
        %4076 = vmatprep.subr.mxu0 0.0
        %4077 = vmatpush1.msra.mxu0 0.0
        %4078 = vmatprep.subr.mxu0 0.0
        %4079 = vmatpush1.msra.mxu0 0.0
        %4080 = vmatprep.subr.mxu0 0.0
        %4081 = vmatpush1.msra.mxu0 0.0
        %4082 = vmatprep.subr.mxu0 0.0
        %4083 = vmatpush1.msra.mxu0 0.0
        %4084 = vmatprep.subr.mxu0 0.0
        %4085 = vmatpush1.msra.mxu0 0.0
        %4086 = vmatprep.subr.mxu0 0.0
        %4087 = vmatpush1.msra.mxu0 0.0
        %4088 = vmatprep.subr.mxu0 0.0
        %4089 = vmatpush1.msra.mxu0 0.0
        %4090 = vmatprep.subr.mxu0 0.0
        %4091 = vmatpush1.msra.mxu0 0.0
        %4092 = vmatprep.subr.mxu0 0.0
        %4093 = vmatpush1.msra.mxu0 0.0
        %4094 = vmatprep.subr.mxu0 0.0
        %4095 = vmatpush1.msra.mxu0 0.0
        %4096 = vmatprep.subr.mxu0 0.0
        %4097 = vmatpush1.msra.mxu0 0.0
        %4098 = vmatprep.subr.mxu0 0.0
        %4099 = vmatpush1.msra.mxu0 0.0
        %4100 = vmatprep.subr.mxu0 0.0
        %4101 = vmatpush1.msra.mxu0 0.0
        %4102 = vmatprep.subr.mxu0 0.0
        %4103 = vmatpush1.msra.mxu0 0.0
        %4104 = vmatprep.subr.mxu0 0.0
        %4105 = vmatpush1.msra.mxu0 0.0
        %4106 = vmatprep.subr.mxu0 0.0
        %4107 = vmatpush1.msra.mxu0 0.0
        %4108 = vmatprep.subr.mxu0 0.0
        %4109 = vmatpush1.msra.mxu0 0.0
        %4110 = vmatprep.subr.mxu0 0.0
        %4111 = vmatpush1.msra.mxu0 0.0
        %4112 = vmatprep.subr.mxu0 0.0
        %4113 = vmatpush1.msra.mxu0 0.0
        %4114 = vmatprep.subr.mxu0 0.0
        %4115 = vmatpush1.msra.mxu0 0.0
        %4116 = vmatprep.subr.mxu0 0.0
        %4117 = vmatpush1.msra.mxu0 0.0
        %4118 = vmatprep.subr.mxu0 0.0
        %4119 = vmatpush1.msra.mxu0 0.0
        %4120 = vmatprep.subr.mxu0 0.0
        %4121 = vmatpush1.msra.mxu0 0.0
        %4122 = vmatprep.subr.mxu0 0.0
        %4123 = vmatpush1.msra.mxu0 0.0
        %4124 = vmatprep.subr.mxu0 0.0
        %4125 = vmatpush1.msra.mxu0 0.0
        %4126 = vmatprep.subr.mxu0 0.0
        %4127 = vmatpush1.msra.mxu0 0.0
        %4128 = vmatprep.mubr.f32.mxu0 0.0
        %4129 = vmatmul.mubr.f32.gmra.mrb[0].mxu0 %v4062
        %v4130 = vpop.f32.mrb[0].mxu0
        %v4131 = vadd.f32 0.0, %v4130
        %v4132 = vpop.f32.mrb[0].mxu0
        %4133 = vdwg.mxu0
        %4135 = vrot.lane.b32.xlu0 %v4131, 32
        %v4136 = vpop.permute.xlu0 %4135
        %v4138 = vadd.f32 %v3977, %v4136
        %v4139 = vtanh.pop %v4138
        %v4140 = vmul.f32 %v4054, %v3755
        %v4141 = vsub.f32 1.0, %v4054
        %4143 = vrot.lane.b32.xlu0 %v4139, 96
        %v4144 = vpop.permute.xlu0 %4143
        %v4146 = vmul.f32 %v4141, %v4144
        %v4147 = vadd.f32 %v4140, %v4146
        %v4149 = vsel %vm1238, %v4147, 0
        %4151 = vmatprep.subr.mxu0 0.0
        %4152 = vmatpush1.msra.mxu0 %v2632
        %4153 = vmatprep.subr.mxu0 0.0
        %4154 = vmatpush1.msra.mxu0 %v2633
        %4155 = vmatprep.subr.mxu0 0.0
        %4156 = vmatpush1.msra.mxu0 0.0
        %4157 = vmatprep.subr.mxu0 0.0
        %4158 = vmatpush1.msra.mxu0 0.0
        %4159 = vmatprep.subr.mxu0 0.0
        %4160 = vmatpush1.msra.mxu0 0.0
        %4161 = vmatprep.subr.mxu0 0.0
        %4162 = vmatpush1.msra.mxu0 0.0
        %4163 = vmatprep.subr.mxu0 0.0
        %4164 = vmatpush1.msra.mxu0 0.0
        %4165 = vmatprep.subr.mxu0 0.0
        %4166 = vmatpush1.msra.mxu0 0.0
        %4167 = vmatprep.subr.mxu0 0.0
        %4168 = vmatpush1.msra.mxu0 0.0
        %4169 = vmatprep.subr.mxu0 0.0
        %4170 = vmatpush1.msra.mxu0 0.0
        %4171 = vmatprep.subr.mxu0 0.0
        %4172 = vmatpush1.msra.mxu0 0.0
        %4173 = vmatprep.subr.mxu0 0.0
        %4174 = vmatpush1.msra.mxu0 0.0
        %4175 = vmatprep.subr.mxu0 0.0
        %4176 = vmatpush1.msra.mxu0 0.0
        %4177 = vmatprep.subr.mxu0 0.0
        %4178 = vmatpush1.msra.mxu0 0.0
        %4179 = vmatprep.subr.mxu0 0.0
        %4180 = vmatpush1.msra.mxu0 0.0
        %4181 = vmatprep.subr.mxu0 0.0
        %4182 = vmatpush1.msra.mxu0 0.0
        %4183 = vmatprep.subr.mxu0 0.0
        %4184 = vmatpush1.msra.mxu0 0.0
        %4185 = vmatprep.subr.mxu0 0.0
        %4186 = vmatpush1.msra.mxu0 0.0
        %4187 = vmatprep.subr.mxu0 0.0
        %4188 = vmatpush1.msra.mxu0 0.0
        %4189 = vmatprep.subr.mxu0 0.0
        %4190 = vmatpush1.msra.mxu0 0.0
        %4191 = vmatprep.subr.mxu0 0.0
        %4192 = vmatpush1.msra.mxu0 0.0
        %4193 = vmatprep.subr.mxu0 0.0
        %4194 = vmatpush1.msra.mxu0 0.0
        %4195 = vmatprep.subr.mxu0 0.0
        %4196 = vmatpush1.msra.mxu0 0.0
        %4197 = vmatprep.subr.mxu0 0.0
        %4198 = vmatpush1.msra.mxu0 0.0
        %4199 = vmatprep.subr.mxu0 0.0
        %4200 = vmatpush1.msra.mxu0 0.0
        %4201 = vmatprep.subr.mxu0 0.0
        %4202 = vmatpush1.msra.mxu0 0.0
        %4203 = vmatprep.subr.mxu0 0.0
        %4204 = vmatpush1.msra.mxu0 0.0
        %4205 = vmatprep.subr.mxu0 0.0
        %4206 = vmatpush1.msra.mxu0 0.0
        %4207 = vmatprep.subr.mxu0 0.0
        %4208 = vmatpush1.msra.mxu0 0.0
        %4209 = vmatprep.subr.mxu0 0.0
        %4210 = vmatpush1.msra.mxu0 0.0
        %4211 = vmatprep.subr.mxu0 0.0
        %4212 = vmatpush1.msra.mxu0 0.0
        %4213 = vmatprep.subr.mxu0 0.0
        %4214 = vmatpush1.msra.mxu0 0.0
        %4215 = vmatprep.mubr.f32.mxu0 0.0
        %4216 = vmatmul.mubr.f32.gmra.mrb[0].mxu0 %v4149
        %v4217 = vpop.f32.mrb[0].mxu0
        %v4218 = vadd.f32 %v2970, %v4217
        %v4219 = vpop.f32.mrb[0].mxu0
        %4220 = vdwg.mxu0
        %4222 = vrot.lane.b32.xlu0 %v3434, 2
        %v4223 = vpop.permute.xlu0 %4222
        %4226 = vrot.lane.b32.xlu0 %v3826, 4
        %v4227 = vpop.permute.xlu0 %4226
        %4230 = vrot.lane.b32.xlu0 %v4218, 6
        %v4231 = vpop.permute.xlu0 %4230
        %v4233 = vsel %vm1153, %v3042, %v4223
        %v4234 = vsel %vm781, %v4233, %v4227
        %vm4235 = vcmask 48128
        %v4236 = vsel %vm4235, %v4234, %v4231
        %4237 = vst.msk [vmem:[%s761] sm:$0xff] %vm766, %v4236
        %p4238 = scmp.lt.s32.totalorder %s36, 1
        %s4239 = scalar_select %p4238, %s36, 1
        %s4240 = smul.addr %s4239, 8
        %s4241 = scalar_lea.vmem %s20, %s4240
        // Predicated region
        $region133: #{stnscn_forward.1} parent=99 // pred_check
          %p4242 = pneg %p489
        $region134: #{stnscn_forward.1} parent=99 // pred_check_branch
          %4244 = sbr.rel (%p4242) target = $region136
        $region135: #{stnscn_forward.1} parent=99 // pred_region
          _
        $region136: #{stnscn_forward.1} parent=99 // pred_fallthru
          _
      $region100: #{stnscn_forward.1} parent=5 // pred_fallthru
        _
      %p4245 = scmp.le.s32.totalorder 2, %s31
      // Predicated region
      $region137: #{stnscn_forward.1} parent=5 // pred_check
        %p4246 = pneg %p4245
      $region138: #{stnscn_forward.1} parent=5 // pred_check_branch
        %4248 = sbr.rel (%p4246) target = $region140
      $region139: #{stnscn_forward.1} parent=5 // pred_region
        %s4249 = ssub.s32 %s31, 2
        // Predicated region
        $region141: #{stnscn_forward.1} parent=139 // pred_check
          %p4250 = pneg %p495
        $region142: #{stnscn_forward.1} parent=139 // pred_check_branch
          %4252 = sbr.rel (%p4250) target = $region144
        $region143: #{stnscn_forward.1} parent=139 // pred_region
          %p4253 = scmp.lt.s32.totalorder %s37, 1
          %s4254 = scalar_select %p4253, %s37, 1
          %s4255 = smul.addr %s4254, 8
          %s4256 = scalar_lea.vmem %s20, %s4255
        $region144: #{stnscn_forward.1} parent=139 // pred_fallthru
          _
      $region140: #{stnscn_forward.1} parent=5 // pred_fallthru
        _
    $region6: #{stnscn_forward.1} parent=1 // loop_footer
      %s35 = sadd.s32 1, %s31
    $region7: #{stnscn_forward.1} parent=1 // loop_footer_branch
      %30 = sbr.rel target = $region3
    $region8: #{stnscn_forward.1} parent=1 // loop_exit
      _
    %4257 = vsyncpa [#allocation3], 1
    %s4258 = scalar_lea.sflag [#allocation3], 1
    %4259 = vsyncpa %s4258, 1
    %4260 = vsyncpa [#allocation5], 1
    %4261 = vsyncpa [#allocation8], 1
    %4262 = vsyncpa [#allocation11], 1
    %4263 = vsyncpa [#allocation14], 1

</llo_original>
